<compile_context>
chip_gen: v7x
topology: tpu7x:2x2x1
jax: 0.10.0
libtpu: 0.0.40
codegen_flags: <defaults>
</compile_context>

<pallas_src>
from functools import partial

import jax
import jax.numpy as jnp
from jax import lax
from jax.experimental import pallas as pl
from jax.experimental.pallas import tpu as pltpu

FEAT = 1024   # densenet feature dim expected by feature_encoder's Linear(1024, L)
L = 128       # self.L
D = 64        # self.D
EPS = 1e-5    # nn.BatchNorm1d default eps


def _moments(x):
    """Single-pass BatchNorm1d(1) moments over ALL elements: (mean, 1/sqrt(var+eps))."""
    inv_n = 1.0 / float(x.size)
    m = jnp.sum(x) * inv_n
    v = jnp.sum(x * x) * inv_n - m * m
    return m, lax.rsqrt(jnp.maximum(v, 0.0) + EPS)


def _mil_kernel(n_head,
                x_ref, w1_ref, b1_ref,
                wa_ref, ba_ref, wbt_ref, bb_ref,
                wc_ref, bc_ref,
                out_ref, attn_ref):
    # ---- bn1 (single-pass moments) fused with the feature_encoder ReLU ----
    x = x_ref[...]                                               # (N, 1024) f32
    m1, inv_s1 = _moments(x)
    # relu(bn1(x)) == (max(x, mean) - mean) * inv_std   (inv_std > 0)
    xr = ((jnp.maximum(x, m1) - m1) * inv_s1).astype(jnp.bfloat16)

    # ---- feature_encoder Linear(1024, L): bf16 operands, f32 accumulation ----
    h0 = jnp.dot(xr, w1_ref[...],
                 preferred_element_type=jnp.float32) + b1_ref[...]          # (N, L)

    # ---- bn2 ----
    m2, inv_s2 = _moments(h0)
    h = (h0 - m2) * inv_s2                                        # (N, L) f32

    # ---- all attention heads batched into one lane-full matmul ----
    # wa_ref: (L, H*D)  ->  a1: (N, H*D); one MXU push, one EUP tanh pass.
    a1 = jnp.tanh(jnp.dot(h, wa_ref[...],
                          preferred_element_type=jnp.float32) + ba_ref[...])  # (N, H*D)

    # Per-head scores directly in (heads, instances) layout: wbt_ref is the
    # block-diagonal second attention layer (H, H*D); contracting the last dims
    # (the q.k^T pattern) yields scores st: (H, N).
    st = lax.dot_general(wbt_ref[...], a1, (((1,), (1,)), ((), ())),
                         preferred_element_type=jnp.float32) + bb_ref[...]    # (H, N)

    # softmax over instances (lane axis), independently per head
    st = st - jnp.max(st, axis=1, keepdims=True)
    e = jnp.exp(st)
    p = e * pl.reciprocal(jnp.sum(e, axis=1, keepdims=True), approx=True)     # (H, N)

    # ---- attention-weighted instance sum on the MXU: M = A @ x ----
    mh = jnp.dot(p, h, preferred_element_type=jnp.float32)        # (H, L)

    # ---- bn3 (applied per head, i.e. per row, as in the reference loop) ----
    mr = jnp.mean(mh, axis=1, keepdims=True)
    vr = jnp.maximum(jnp.mean(mh * mh, axis=1, keepdims=True) - mr * mr, 0.0)
    f = (mh - mr) * lax.rsqrt(vr + EPS)                           # (H, L)

    # ---- bn4 over the whole concatenated (1, H*L) feature (== all H*L elems) ----
    m4, inv_s4 = _moments(f)
    f = (f - m4) * inv_s4

    # ---- classifier Linear(L*n_head, n_class): tiny per-head (1,L)x(L,C) dots ----
    logits = bc_ref[...]                                          # (1, C)
    for hh in range(n_head):                                      # static, tiny
        logits = logits + jnp.dot(f[hh:hh + 1, :], wc_ref[hh],
                                  preferred_element_type=jnp.float32)
    out_ref[...] = logits

    # PyTorch returns the LAST head's attention with shape (1, N).  The row slice
    # of p is already lane-dense -> unmasked stores, no wrapper transpose needed.
    attn_ref[...] = p[n_head - 1:n_head, :]


def pack_params(params, *, n_head, n_class):
    """Rearrange PyTorch-layout weights into the kernel layout (do once, offline)."""
    w1, b1, wa, ba, wb, bb, wc, bc = params
    # largest weight as bf16 (halves its DMA); matmul still accumulates in f32
    w1p = w1.astype(jnp.bfloat16)                                 # (1024, L)
    # batch the per-head first attention layer: (H, L, D) -> (L, H*D)
    wa_flat = jnp.transpose(wa, (1, 0, 2)).reshape(L, n_head * D)
    ba_flat = ba.reshape(1, n_head * D)
    # block-diagonal second attention layer, pre-transposed to (H, H*D) so the
    # score matmul lands directly in (heads, instances) layout
    eye = jnp.eye(n_head, dtype=jnp.float32)
    wb_t = (eye[:, :, None] * wb.reshape(n_head, 1, D)).reshape(n_head, n_head * D)
    bb_col = bb.reshape(n_head, 1)
    # classifier split per head: row index of wc is h*L + l (head-major concat order)
    wc3 = wc.reshape(n_head, L, n_class)
    return (w1p, b1, wa_flat, ba_flat, wb_t, bb_col, wc3, bc)


def image_mil_forward(x, packed, *, n_head, n_class):
    """x: (N, 1024) f32 instance features. Returns (logits (1, n_class), A (1, N))."""
    N = x.shape[0]
    w1, b1, wa_flat, ba_flat, wb_t, bb_col, wc3, bc = packed
    vmem_spec = pl.BlockSpec(memory_space=pltpu.MemorySpace.VMEM)
    return pl.pallas_call(
        partial(_mil_kernel, n_head),
        out_shape=(jax.ShapeDtypeStruct((1, n_class), jnp.float32),
                   jax.ShapeDtypeStruct((1, N), jnp.float32)),
        # No grid: single invocation, every operand resident in VMEM exactly once
        # (avoids useless double-buffering of a one-step pipeline).
        in_specs=[vmem_spec] * 9,
        out_specs=(vmem_spec, vmem_spec),
        compiler_params=pltpu.CompilerParams(vmem_limit_bytes=32 * 1024 * 1024),
    )(x, w1, b1, wa_flat, ba_flat, wb_t, bb_col, wc3, bc)


def init_params(key, *, n_head, n_class):
    """Deterministic PyTorch-Linear-style init (uniform(-1/sqrt(fan_in), +1/sqrt(fan_in)))."""
    ks = jax.random.split(key, 8)

    def u(k, shape, fan_in):
        b = 1.0 / (fan_in ** 0.5)
        return jax.random.uniform(k, shape, jnp.float32, -b, b)

    w1 = u(ks[0], (FEAT, L), FEAT)                    # Linear(1024, L).weight.T
    b1 = u(ks[1], (1, L), FEAT)
    wa = u(ks[2], (n_head, L, D), L)                  # per-head Linear(L, D).weight.T
    ba = u(ks[3], (n_head, 1, D), L)
    wb = u(ks[4], (n_head, 1, D), D)                  # per-head Linear(D, 1).weight (row)
    bb = u(ks[5], (n_head, 1, 1), D)
    wc = u(ks[6], (L * n_head, n_class), L * n_head)  # classifier weight.T
    bc = u(ks[7], (1, n_class), L * n_head)
    return (w1, b1, wa, ba, wb, bb, wc, bc)


if __name__ == "__main__":
    n_head = 2
    n_class = 4
    n_batch, n_bag = 2, 128
    N = n_batch * n_bag      # 256 instances: multiple of 128/256 -> full MXU rows

    key = jax.random.PRNGKey(0)
    k_param, k_x = jax.random.split(key)
    params = init_params(k_param, n_head=n_head, n_class=n_class)
    packed = pack_params(params, n_head=n_head, n_class=n_class)
    x = jax.random.normal(k_x, (N, FEAT), jnp.float32)

    out, attn = image_mil_forward(x, packed, n_head=n_head, n_class=n_class)
    jax.block_until_ready((out, attn))

    assert out.shape == (1, n_class)
    assert attn.shape == (1, N)
    print("KERNEL_OK")
</pallas_src>

<mosaic_0001>
module attributes {stable_mosaic.version = 11 : i64} {
  func.func @_mil_kernel(%arg0: memref<256x1024xf32, #tpu.memory_space<vmem>>, %arg1: memref<1024x128xbf16, #tpu.memory_space<vmem>>, %arg2: memref<1x128xf32, #tpu.memory_space<vmem>>, %arg3: memref<128x128xf32, #tpu.memory_space<vmem>>, %arg4: memref<1x128xf32, #tpu.memory_space<vmem>>, %arg5: memref<2x128xf32, #tpu.memory_space<vmem>>, %arg6: memref<2x1xf32, #tpu.memory_space<vmem>>, %arg7: memref<2x128x4xf32, #tpu.memory_space<vmem>>, %arg8: memref<1x4xf32, #tpu.memory_space<vmem>>, %arg9: memref<1x4xf32, #tpu.memory_space<vmem>>, %arg10: memref<1x256xf32, #tpu.memory_space<vmem>>) attributes {dimension_semantics = [], scalar_prefetch = 0 : i64, scratch_operands = 0 : i64, tpu.core_type = #tpu.core_type<tc>} {
    %c0 = arith.constant 0 : index
    %c0_0 = arith.constant 0 : index
    %0 = vector.load %arg0[%c0, %c0_0] : memref<256x1024xf32, #tpu.memory_space<vmem>>, vector<256x1024xf32>
    %1 = vector.shape_cast %0 : vector<256x1024xf32> to vector<1x256x1024xf32>
    %cst = arith.constant dense<0.000000e+00> : vector<1xf32>
    %2 = vector.multi_reduction <add>, %1, %cst [1, 2] : vector<1x256x1024xf32> to vector<1xf32>
    %3 = vector.shape_cast %2 : vector<1xf32> to vector<1x1x1xf32>
    %4 = vector.extract %3[0, 0, 0] : f32 from vector<1x1x1xf32>
    %cst_1 = arith.constant 3.81469727E-6 : f32
    %5 = arith.mulf %4, %cst_1 : f32
    %6 = arith.mulf %0, %0 : vector<256x1024xf32>
    %7 = vector.shape_cast %6 : vector<256x1024xf32> to vector<1x256x1024xf32>
    %cst_2 = arith.constant dense<0.000000e+00> : vector<1xf32>
    %8 = vector.multi_reduction <add>, %7, %cst_2 [1, 2] : vector<1x256x1024xf32> to vector<1xf32>
    %9 = vector.shape_cast %8 : vector<1xf32> to vector<1x1x1xf32>
    %10 = vector.extract %9[0, 0, 0] : f32 from vector<1x1x1xf32>
    %cst_3 = arith.constant 3.81469727E-6 : f32
    %11 = arith.mulf %10, %cst_3 : f32
    %12 = arith.mulf %5, %5 : f32
    %13 = arith.subf %11, %12 : f32
    %cst_4 = arith.constant 0.000000e+00 : f32
    %14 = arith.maximumf %13, %cst_4 : f32
    %cst_5 = arith.constant 9.99999974E-6 : f32
    %15 = arith.addf %14, %cst_5 : f32
    %16 = math.rsqrt %15 : f32
    %17 = vector.broadcast %5 : f32 to vector<256x1024xf32>
    %18 = arith.maximumf %0, %17 : vector<256x1024xf32>
    %19 = vector.broadcast %5 : f32 to vector<256x1024xf32>
    %20 = arith.subf %18, %19 : vector<256x1024xf32>
    %21 = vector.broadcast %16 : f32 to vector<256x1024xf32>
    %22 = arith.mulf %20, %21 : vector<256x1024xf32>
    %23 = arith.truncf %22 : vector<256x1024xf32> to vector<256x1024xbf16>
    %c0_6 = arith.constant 0 : index
    %c0_7 = arith.constant 0 : index
    %24 = vector.load %arg1[%c0_6, %c0_7] : memref<1024x128xbf16, #tpu.memory_space<vmem>>, vector<1024x128xbf16>
    %cst_8 = arith.constant dense<0.000000e+00> : vector<256x128xf32>
    %25 = tpu.matmul %23, %24, %cst_8 {dimension_numbers = #tpu.dot_dimension_numbers<[1], [0], [0], [1], [0, 0, 1, 1], [], []>} : vector<256x1024xbf16>, vector<1024x128xbf16>, vector<256x128xf32> -> vector<256x128xf32>
    %c0_9 = arith.constant 0 : index
    %c0_10 = arith.constant 0 : index
    %26 = vector.load %arg2[%c0_9, %c0_10] : memref<1x128xf32, #tpu.memory_space<vmem>>, vector<1x128xf32>
    %27 = vector.broadcast %26 : vector<1x128xf32> to vector<256x128xf32>
    %28 = arith.addf %25, %27 : vector<256x128xf32>
    %29 = vector.shape_cast %28 : vector<256x128xf32> to vector<1x256x128xf32>
    %cst_11 = arith.constant dense<0.000000e+00> : vector<1xf32>
    %30 = vector.multi_reduction <add>, %29, %cst_11 [1, 2] : vector<1x256x128xf32> to vector<1xf32>
    %31 = vector.shape_cast %30 : vector<1xf32> to vector<1x1x1xf32>
    %32 = vector.extract %31[0, 0, 0] : f32 from vector<1x1x1xf32>
    %cst_12 = arith.constant 3.05175781E-5 : f32
    %33 = arith.mulf %32, %cst_12 : f32
    %34 = arith.mulf %28, %28 : vector<256x128xf32>
    %35 = vector.shape_cast %34 : vector<256x128xf32> to vector<1x256x128xf32>
    %cst_13 = arith.constant dense<0.000000e+00> : vector<1xf32>
    %36 = vector.multi_reduction <add>, %35, %cst_13 [1, 2] : vector<1x256x128xf32> to vector<1xf32>
    %37 = vector.shape_cast %36 : vector<1xf32> to vector<1x1x1xf32>
    %38 = vector.extract %37[0, 0, 0] : f32 from vector<1x1x1xf32>
    %cst_14 = arith.constant 3.05175781E-5 : f32
    %39 = arith.mulf %38, %cst_14 : f32
    %40 = arith.mulf %33, %33 : f32
    %41 = arith.subf %39, %40 : f32
    %cst_15 = arith.constant 0.000000e+00 : f32
    %42 = arith.maximumf %41, %cst_15 : f32
    %cst_16 = arith.constant 9.99999974E-6 : f32
    %43 = arith.addf %42, %cst_16 : f32
    %44 = math.rsqrt %43 : f32
    %45 = vector.broadcast %33 : f32 to vector<256x128xf32>
    %46 = arith.subf %28, %45 : vector<256x128xf32>
    %47 = vector.broadcast %44 : f32 to vector<256x128xf32>
    %48 = arith.mulf %46, %47 : vector<256x128xf32>
    %c0_17 = arith.constant 0 : index
    %c0_18 = arith.constant 0 : index
    %49 = vector.load %arg3[%c0_17, %c0_18] : memref<128x128xf32, #tpu.memory_space<vmem>>, vector<128x128xf32>
    %cst_19 = arith.constant dense<0.000000e+00> : vector<256x128xf32>
    %50 = tpu.matmul %48, %49, %cst_19 {dimension_numbers = #tpu.dot_dimension_numbers<[1], [0], [0], [1], [0, 0, 1, 1], [], []>} : vector<256x128xf32>, vector<128x128xf32>, vector<256x128xf32> -> vector<256x128xf32>
    %c0_20 = arith.constant 0 : index
    %c0_21 = arith.constant 0 : index
    %51 = vector.load %arg4[%c0_20, %c0_21] : memref<1x128xf32, #tpu.memory_space<vmem>>, vector<1x128xf32>
    %52 = vector.broadcast %51 : vector<1x128xf32> to vector<256x128xf32>
    %53 = arith.addf %50, %52 : vector<256x128xf32>
    %54 = math.tanh %53 : vector<256x128xf32>
    %c0_22 = arith.constant 0 : index
    %c0_23 = arith.constant 0 : index
    %55 = vector.load %arg5[%c0_22, %c0_23] : memref<2x128xf32, #tpu.memory_space<vmem>>, vector<2x128xf32>
    %cst_24 = arith.constant dense<0.000000e+00> : vector<2x256xf32>
    %56 = tpu.matmul %55, %54, %cst_24 {dimension_numbers = #tpu.dot_dimension_numbers<[1], [1], [0], [0], [0, 0, 1, 0], [], []>} : vector<2x128xf32>, vector<256x128xf32>, vector<2x256xf32> -> vector<2x256xf32>
    %c0_25 = arith.constant 0 : index
    %c0_26 = arith.constant 0 : index
    %57 = vector.load %arg6[%c0_25, %c0_26] : memref<2x1xf32, #tpu.memory_space<vmem>>, vector<2x1xf32>
    %58 = vector.broadcast %57 : vector<2x1xf32> to vector<2x256xf32>
    %59 = arith.addf %56, %58 : vector<2x256xf32>
    %cst_27 = arith.constant dense<0xFF800000> : vector<2xf32>
    %60 = vector.multi_reduction <maximumf>, %59, %cst_27 [1] : vector<2x256xf32> to vector<2xf32>
    %61 = vector.shape_cast %60 : vector<2xf32> to vector<2x1xf32>
    %62 = vector.broadcast %61 : vector<2x1xf32> to vector<2x256xf32>
    %63 = arith.subf %59, %62 : vector<2x256xf32>
    %64 = math.exp %63 : vector<2x256xf32>
    %cst_28 = arith.constant dense<0.000000e+00> : vector<2xf32>
    %65 = vector.multi_reduction <add>, %64, %cst_28 [1] : vector<2x256xf32> to vector<2xf32>
    %66 = vector.shape_cast %65 : vector<2xf32> to vector<2x1xf32>
    %67 = tpu.reciprocal %66 {approx = true} : vector<2x1xf32> -> vector<2x1xf32>
    %68 = vector.broadcast %67 : vector<2x1xf32> to vector<2x256xf32>
    %69 = arith.mulf %64, %68 : vector<2x256xf32>
    %cst_29 = arith.constant dense<0.000000e+00> : vector<2x128xf32>
    %70 = tpu.matmul %69, %48, %cst_29 {dimension_numbers = #tpu.dot_dimension_numbers<[1], [0], [0], [1], [0, 0, 1, 1], [], []>} : vector<2x256xf32>, vector<256x128xf32>, vector<2x128xf32> -> vector<2x128xf32>
    %cst_30 = arith.constant dense<0.000000e+00> : vector<2xf32>
    %71 = vector.multi_reduction <add>, %70, %cst_30 [1] : vector<2x128xf32> to vector<2xf32>
    %72 = vector.shape_cast %71 : vector<2xf32> to vector<2x1xf32>
    %cst_31 = arith.constant 1.280000e+02 : f32
    %73 = vector.broadcast %cst_31 : f32 to vector<2x1xf32>
    %74 = arith.divf %72, %73 : vector<2x1xf32>
    %75 = arith.mulf %70, %70 : vector<2x128xf32>
    %cst_32 = arith.constant dense<0.000000e+00> : vector<2xf32>
    %76 = vector.multi_reduction <add>, %75, %cst_32 [1] : vector<2x128xf32> to vector<2xf32>
    %77 = vector.shape_cast %76 : vector<2xf32> to vector<2x1xf32>
    %cst_33 = arith.constant 1.280000e+02 : f32
    %78 = vector.broadcast %cst_33 : f32 to vector<2x1xf32>
    %79 = arith.divf %77, %78 : vector<2x1xf32>
    %80 = arith.mulf %74, %74 : vector<2x1xf32>
    %81 = arith.subf %79, %80 : vector<2x1xf32>
    %cst_34 = arith.constant 0.000000e+00 : f32
    %82 = vector.broadcast %cst_34 : f32 to vector<2x1xf32>
    %83 = arith.maximumf %81, %82 : vector<2x1xf32>
    %84 = vector.broadcast %74 : vector<2x1xf32> to vector<2x128xf32>
    %85 = arith.subf %70, %84 : vector<2x128xf32>
    %cst_35 = arith.constant 9.99999974E-6 : f32
    %86 = vector.broadcast %cst_35 : f32 to vector<2x1xf32>
    %87 = arith.addf %83, %86 : vector<2x1xf32>
    %88 = math.rsqrt %87 : vector<2x1xf32>
    %89 = vector.broadcast %88 : vector<2x1xf32> to vector<2x128xf32>
    %90 = arith.mulf %85, %89 : vector<2x128xf32>
    %91 = vector.shape_cast %90 : vector<2x128xf32> to vector<1x2x128xf32>
    %cst_36 = arith.constant dense<0.000000e+00> : vector<1xf32>
    %92 = vector.multi_reduction <add>, %91, %cst_36 [1, 2] : vector<1x2x128xf32> to vector<1xf32>
    %93 = vector.shape_cast %92 : vector<1xf32> to vector<1x1x1xf32>
    %94 = vector.extract %93[0, 0, 0] : f32 from vector<1x1x1xf32>
    %cst_37 = arith.constant 3.906250e-03 : f32
    %95 = arith.mulf %94, %cst_37 : f32
    %96 = arith.mulf %90, %90 : vector<2x128xf32>
    %97 = vector.shape_cast %96 : vector<2x128xf32> to vector<1x2x128xf32>
    %cst_38 = arith.constant dense<0.000000e+00> : vector<1xf32>
    %98 = vector.multi_reduction <add>, %97, %cst_38 [1, 2] : vector<1x2x128xf32> to vector<1xf32>
    %99 = vector.shape_cast %98 : vector<1xf32> to vector<1x1x1xf32>
    %100 = vector.extract %99[0, 0, 0] : f32 from vector<1x1x1xf32>
    %cst_39 = arith.constant 3.906250e-03 : f32
    %101 = arith.mulf %100, %cst_39 : f32
    %102 = arith.mulf %95, %95 : f32
    %103 = arith.subf %101, %102 : f32
    %cst_40 = arith.constant 0.000000e+00 : f32
    %104 = arith.maximumf %103, %cst_40 : f32
    %cst_41 = arith.constant 9.99999974E-6 : f32
    %105 = arith.addf %104, %cst_41 : f32
    %106 = math.rsqrt %105 : f32
    %107 = vector.broadcast %95 : f32 to vector<2x128xf32>
    %108 = arith.subf %90, %107 : vector<2x128xf32>
    %109 = vector.broadcast %106 : f32 to vector<2x128xf32>
    %110 = arith.mulf %108, %109 : vector<2x128xf32>
    %c0_42 = arith.constant 0 : index
    %c0_43 = arith.constant 0 : index
    %111 = vector.load %arg8[%c0_42, %c0_43] : memref<1x4xf32, #tpu.memory_space<vmem>>, vector<1x4xf32>
    %112 = vector.extract_strided_slice %110 {offsets = [0, 0], sizes = [1, 128], strides = [1, 1]} : vector<2x128xf32> to vector<1x128xf32>
    %c0_44 = arith.constant 0 : index
    %c0_45 = arith.constant 0 : index
    %c0_46 = arith.constant 0 : index
    %113 = vector.load %arg7[%c0_44, %c0_45, %c0_46] : memref<2x128x4xf32, #tpu.memory_space<vmem>>, vector<1x128x4xf32>
    %114 = vector.shape_cast %113 : vector<1x128x4xf32> to vector<128x4xf32>
    %cst_47 = arith.constant dense<0.000000e+00> : vector<1x4xf32>
    %115 = tpu.matmul %112, %114, %cst_47 {dimension_numbers = #tpu.dot_dimension_numbers<[1], [0], [0], [1], [0, 0, 1, 1], [], []>} : vector<1x128xf32>, vector<128x4xf32>, vector<1x4xf32> -> vector<1x4xf32>
    %116 = arith.addf %111, %115 : vector<1x4xf32>
    %117 = vector.extract_strided_slice %110 {offsets = [1, 0], sizes = [1, 128], strides = [1, 1]} : vector<2x128xf32> to vector<1x128xf32>
    %c1 = arith.constant 1 : index
    %c0_48 = arith.constant 0 : index
    %c0_49 = arith.constant 0 : index
    %118 = vector.load %arg7[%c1, %c0_48, %c0_49] : memref<2x128x4xf32, #tpu.memory_space<vmem>>, vector<1x128x4xf32>
    %119 = vector.shape_cast %118 : vector<1x128x4xf32> to vector<128x4xf32>
    %cst_50 = arith.constant dense<0.000000e+00> : vector<1x4xf32>
    %120 = tpu.matmul %117, %119, %cst_50 {dimension_numbers = #tpu.dot_dimension_numbers<[1], [0], [0], [1], [0, 0, 1, 1], [], []>} : vector<1x128xf32>, vector<128x4xf32>, vector<1x4xf32> -> vector<1x4xf32>
    %121 = arith.addf %116, %120 : vector<1x4xf32>
    %c0_51 = arith.constant 0 : index
    %c0_52 = arith.constant 0 : index
    %122 = vector.load %arg9[%c0_51, %c0_52] : memref<1x4xf32, #tpu.memory_space<vmem>>, vector<1x4xf32>
    tpu.vector_store %arg9[%c0_51, %c0_52], %121 {strides = array<i32>} : memref<1x4xf32, #tpu.memory_space<vmem>>, vector<1x4xf32>,
    %123 = vector.extract_strided_slice %69 {offsets = [1, 0], sizes = [1, 256], strides = [1, 1]} : vector<2x256xf32> to vector<1x256xf32>
    %c0_53 = arith.constant 0 : index
    %c0_54 = arith.constant 0 : index
    %124 = vector.load %arg10[%c0_53, %c0_54] : memref<1x256xf32, #tpu.memory_space<vmem>>, vector<1x256xf32>
    tpu.vector_store %arg10[%c0_53, %c0_54], %123 {strides = array<i32>} : memref<1x256xf32, #tpu.memory_space<vmem>>, vector<1x256xf32>,
    return
  }
}

</mosaic_0001>

<llo_original>
// kernel: tpu_custom_call.1
$region0: #{tpu_custom_call.1}
  #allocation0 [shape = 'u32[]', space=smem, size = 0x4, offset = 0x4, fixed_abs, tag = 'smem constant byte address 0x4 - core index']
  #allocation1 [shape = 'u32[144,128]{1,0:T(1,128)}', space=vmem, size = 0x12000, scoped, tag = 'internal scratch']
  %s0 = inlined_call_operand.hbm [shape: f32[256,1024], index: 0, kind: input, shape index: {}]
  %s1 = inlined_call_operand.hbm [shape: bf16[1024,128], index: 1, kind: input, shape index: {}]
  %s2 = inlined_call_operand.vmem [shape: f32[1,128], index: 2, kind: input, shape index: {}]
  %s3 = inlined_call_operand.vmem [shape: f32[128,128], index: 3, kind: input, shape index: {}]
  %s4 = inlined_call_operand.vmem [shape: f32[1,128], index: 4, kind: input, shape index: {}]
  %s5 = inlined_call_operand.vmem [shape: f32[2,128], index: 5, kind: input, shape index: {}]
  %s6 = inlined_call_operand.vmem [shape: f32[2,1], index: 6, kind: input, shape index: {}]
  %s7 = inlined_call_operand.vmem [shape: f32[2,128,4], index: 7, kind: input, shape index: {}]
  %s8 = inlined_call_operand.vmem [shape: f32[1,4], index: 8, kind: input, shape index: {}]
  %s9 = inlined_call_operand.hbm [shape: f32[1,4], index: 9, kind: output, shape index: {0}]
  %s10 = inlined_call_operand.hbm [shape: f32[1,256], index: 10, kind: output, shape index: {1}]
  %11 = xla_tuple %s9, %s10
  %s12 = sld [smem:[#allocation0]]
  $region62: #{tpu_custom_call.1} parent=0
    _
  %s14 = ssub.s32 1, %s12
  %s15 = scalar_select 0, %s14, %s12
  $region1: #{tpu_custom_call.1} parent=0
    #allocation2 [shape = 'u8[1048576]{0}', space=vmem, size = 0x100000, scoped, tag = 'input window, operand 0, single buffered']
    #allocation3 [shape = 's32[1]{0}', space=sflag, size = 0x4, scoped, tag = 'scoped memory for tpu_custom_call.1']
    #allocation4 [shape = 's32[1]{0}', space=sflag, size = 0x4, scoped, tag = 'scoped memory for tpu_custom_call.1']
    #allocation5 [shape = 'u8[262144]{0}', space=vmem, size = 0x40000, scoped, tag = 'input window, operand 1, single buffered']
    #allocation6 [shape = 's32[1]{0}', space=sflag, size = 0x4, scoped, tag = 'scoped memory for tpu_custom_call.1']
    #allocation7 [shape = 'u8[512]{0}', space=vmem, size = 0x400, scoped, tag = 'output window, operand 0, single buffered']
    #allocation8 [shape = 'u8[1024]{0}', space=vmem, size = 0x400, scoped, tag = 'output window, operand 1, single buffered']
    #allocation9 [shape = 's32[1]{0}', space=sflag, size = 0x4, scoped, tag = 'scoped memory for tpu_custom_call.1']
    %16 = vsyncpa [#allocation3], 0
    %17 = vsyncpa [#allocation6], 0
    %18 = vsyncpa [#allocation4], 0
    %19 = vsyncpa [#allocation9], 0
    // Predicated region
    $region2: #{tpu_custom_call.1} parent=1 // pred_check
      _
    $region3: #{tpu_custom_call.1} parent=1 // pred_check_branch
      %21 = sbr.rel (0) target = $region5
    $region4: #{tpu_custom_call.1} parent=1 // pred_region
      %s23 = ssub.s32 32768, 32768
      %24 = vsyncadd [#allocation3], %s23
      %s25 = sshll.u32 [#allocation2], 4
      %s26 = int_to_ptr.vmem [resolvable:$true] %s25
      %31 = dma.hbm_to_vmem [thread:$0]  %s0, 32768, %s26, [#allocation3], 1024, 1024, 64
    $region5: #{tpu_custom_call.1} parent=1 // pred_fallthru
      _
    // Predicated region
    $region6: #{tpu_custom_call.1} parent=1 // pred_check
      _
    $region7: #{tpu_custom_call.1} parent=1 // pred_check_branch
      %33 = sbr.rel (0) target = $region9
    $region8: #{tpu_custom_call.1} parent=1 // pred_region
      %s35 = ssub.s32 8192, 8192
      %36 = vsyncadd [#allocation6], %s35
      %s37 = sshll.u32 [#allocation5], 4
      %s38 = int_to_ptr.vmem [resolvable:$true] %s37
      %43 = dma.hbm_to_vmem [thread:$0]  %s1, 8192, %s38, [#allocation6], 64, 64, 4
    $region9: #{tpu_custom_call.1} parent=1 // pred_fallthru
      _
    // Predicated region
    $region10: #{tpu_custom_call.1} parent=1 // pred_check
      _
    $region11: #{tpu_custom_call.1} parent=1 // pred_check_branch
      %45 = sbr.rel (0) target = $region13
    $region12: #{tpu_custom_call.1} parent=1 // pred_region
      _
    $region13: #{tpu_custom_call.1} parent=1 // pred_fallthru
      _
    // Predicated region
    $region14: #{tpu_custom_call.1} parent=1 // pred_check
      _
    $region15: #{tpu_custom_call.1} parent=1 // pred_check_branch
      %47 = sbr.rel (0) target = $region17
    $region16: #{tpu_custom_call.1} parent=1 // pred_region
      _
    $region17: #{tpu_custom_call.1} parent=1 // pred_fallthru
      _
    // Predicated region
    $region18: #{tpu_custom_call.1} parent=1 // pred_check
      _
    $region19: #{tpu_custom_call.1} parent=1 // pred_check_branch
      %49 = sbr.rel (0) target = $region21
    $region20: #{tpu_custom_call.1} parent=1 // pred_region
      _
    $region21: #{tpu_custom_call.1} parent=1 // pred_fallthru
      _
    // Predicated region
    $region22: #{tpu_custom_call.1} parent=1 // pred_check
      _
    $region23: #{tpu_custom_call.1} parent=1 // pred_check_branch
      %51 = sbr.rel (0) target = $region25
    $region24: #{tpu_custom_call.1} parent=1 // pred_region
      _
    $region25: #{tpu_custom_call.1} parent=1 // pred_fallthru
      _
    // Predicated region
    $region26: #{tpu_custom_call.1} parent=1 // pred_check
      _
    $region27: #{tpu_custom_call.1} parent=1 // pred_check_branch
      %53 = sbr.rel (0) target = $region29
    $region28: #{tpu_custom_call.1} parent=1 // pred_region
      _
    $region29: #{tpu_custom_call.1} parent=1 // pred_fallthru
      _
    // Predicated region
    $region30: #{tpu_custom_call.1} parent=1 // pred_check
      _
    $region31: #{tpu_custom_call.1} parent=1 // pred_check_branch
      %55 = sbr.rel (0) target = $region33
    $region32: #{tpu_custom_call.1} parent=1 // pred_region
      _
    $region33: #{tpu_custom_call.1} parent=1 // pred_fallthru
      _
    // Predicated region
    $region34: #{tpu_custom_call.1} parent=1 // pred_check
      _
    $region35: #{tpu_custom_call.1} parent=1 // pred_check_branch
      %57 = sbr.rel (0) target = $region37
    $region36: #{tpu_custom_call.1} parent=1 // pred_region
      _
    $region37: #{tpu_custom_call.1} parent=1 // pred_fallthru
      _
    // Predicated region
    $region38: #{tpu_custom_call.1} parent=1 // pred_check
      _
    $region39: #{tpu_custom_call.1} parent=1 // pred_check_branch
      %59 = sbr.rel (0) target = $region41
    $region40: #{tpu_custom_call.1} parent=1 // pred_region
      %60 = dma.done [#allocation3], 32768
    $region41: #{tpu_custom_call.1} parent=1 // pred_fallthru
      _
    // Predicated region
    $region42: #{tpu_custom_call.1} parent=1 // pred_check
      _
    $region43: #{tpu_custom_call.1} parent=1 // pred_check_branch
      %62 = sbr.rel (0) target = $region45
    $region44: #{tpu_custom_call.1} parent=1 // pred_region
      %63 = dma.done [#allocation6], 8192
    $region45: #{tpu_custom_call.1} parent=1 // pred_fallthru
      _
    %v65 = vld [vmem:[#allocation2] sm:$0xff]
    %v66 = vld [vmem:[#allocation2 + $0x8] sm:$0xff]
    %v67 = vld [vmem:[#allocation2 + $0x10] sm:$0xff]
    %v68 = vld [vmem:[#allocation2 + $0x18] sm:$0xff]
    %v69 = vld [vmem:[#allocation2 + $0x20] sm:$0xff]
    %v70 = vld [vmem:[#allocation2 + $0x28] sm:$0xff]
    %v71 = vld [vmem:[#allocation2 + $0x30] sm:$0xff]
    %v72 = vld [vmem:[#allocation2 + $0x38] sm:$0xff]
    %v73 = vld [vmem:[#allocation2 + $0x40] sm:$0xff]
    %v74 = vld [vmem:[#allocation2 + $0x48] sm:$0xff]
    %v75 = vld [vmem:[#allocation2 + $0x50] sm:$0xff]
    %v76 = vld [vmem:[#allocation2 + $0x58] sm:$0xff]
    %v77 = vld [vmem:[#allocation2 + $0x60] sm:$0xff]
    %v78 = vld [vmem:[#allocation2 + $0x68] sm:$0xff]
    %v79 = vld [vmem:[#allocation2 + $0x70] sm:$0xff]
    %v80 = vld [vmem:[#allocation2 + $0x78] sm:$0xff]
    %v81 = vld [vmem:[#allocation2 + $0x80] sm:$0xff]
    %v82 = vld [vmem:[#allocation2 + $0x88] sm:$0xff]
    %v83 = vld [vmem:[#allocation2 + $0x90] sm:$0xff]
    %v84 = vld [vmem:[#allocation2 + $0x98] sm:$0xff]
    %v85 = vld [vmem:[#allocation2 + $0xa0] sm:$0xff]
    %v86 = vld [vmem:[#allocation2 + $0xa8] sm:$0xff]
    %v87 = vld [vmem:[#allocation2 + $0xb0] sm:$0xff]
    %v88 = vld [vmem:[#allocation2 + $0xb8] sm:$0xff]
    %v89 = vld [vmem:[#allocation2 + $0xc0] sm:$0xff]
    %v90 = vld [vmem:[#allocation2 + $0xc8] sm:$0xff]
    %v91 = vld [vmem:[#allocation2 + $0xd0] sm:$0xff]
    %v92 = vld [vmem:[#allocation2 + $0xd8] sm:$0xff]
    %v93 = vld [vmem:[#allocation2 + $0xe0] sm:$0xff]
    %v94 = vld [vmem:[#allocation2 + $0xe8] sm:$0xff]
    %v95 = vld [vmem:[#allocation2 + $0xf0] sm:$0xff]
    %v96 = vld [vmem:[#allocation2 + $0xf8] sm:$0xff]
    %v97 = vld [vmem:[#allocation2 + $0x100] sm:$0xff]
    %v98 = vld [vmem:[#allocation2 + $0x108] sm:$0xff]
    %v99 = vld [vmem:[#allocation2 + $0x110] sm:$0xff]
    %v100 = vld [vmem:[#allocation2 + $0x118] sm:$0xff]
    %v101 = vld [vmem:[#allocation2 + $0x120] sm:$0xff]
    %v102 = vld [vmem:[#allocation2 + $0x128] sm:$0xff]
    %v103 = vld [vmem:[#allocation2 + $0x130] sm:$0xff]
    %v104 = vld [vmem:[#allocation2 + $0x138] sm:$0xff]
    %v105 = vld [vmem:[#allocation2 + $0x140] sm:$0xff]
    %v106 = vld [vmem:[#allocation2 + $0x148] sm:$0xff]
    %v107 = vld [vmem:[#allocation2 + $0x150] sm:$0xff]
    %v108 = vld [vmem:[#allocation2 + $0x158] sm:$0xff]
    %v109 = vld [vmem:[#allocation2 + $0x160] sm:$0xff]
    %v110 = vld [vmem:[#allocation2 + $0x168] sm:$0xff]
    %v111 = vld [vmem:[#allocation2 + $0x170] sm:$0xff]
    %v112 = vld [vmem:[#allocation2 + $0x178] sm:$0xff]
    %v113 = vld [vmem:[#allocation2 + $0x180] sm:$0xff]
    %v114 = vld [vmem:[#allocation2 + $0x188] sm:$0xff]
    %v115 = vld [vmem:[#allocation2 + $0x190] sm:$0xff]
    %v116 = vld [vmem:[#allocation2 + $0x198] sm:$0xff]
    %v117 = vld [vmem:[#allocation2 + $0x1a0] sm:$0xff]
    %v118 = vld [vmem:[#allocation2 + $0x1a8] sm:$0xff]
    %v119 = vld [vmem:[#allocation2 + $0x1b0] sm:$0xff]
    %v120 = vld [vmem:[#allocation2 + $0x1b8] sm:$0xff]
    %v121 = vld [vmem:[#allocation2 + $0x1c0] sm:$0xff]
    %v122 = vld [vmem:[#allocation2 + $0x1c8] sm:$0xff]
    %v123 = vld [vmem:[#allocation2 + $0x1d0] sm:$0xff]
    %v124 = vld [vmem:[#allocation2 + $0x1d8] sm:$0xff]
    %v125 = vld [vmem:[#allocation2 + $0x1e0] sm:$0xff]
    %v126 = vld [vmem:[#allocation2 + $0x1e8] sm:$0xff]
    %v127 = vld [vmem:[#allocation2 + $0x1f0] sm:$0xff]
    %v128 = vld [vmem:[#allocation2 + $0x1f8] sm:$0xff]
    %v129 = vld [vmem:[#allocation2 + $0x200] sm:$0xff]
    %v130 = vld [vmem:[#allocation2 + $0x208] sm:$0xff]
    %v131 = vld [vmem:[#allocation2 + $0x210] sm:$0xff]
    %v132 = vld [vmem:[#allocation2 + $0x218] sm:$0xff]
    %v133 = vld [vmem:[#allocation2 + $0x220] sm:$0xff]
    %v134 = vld [vmem:[#allocation2 + $0x228] sm:$0xff]
    %v135 = vld [vmem:[#allocation2 + $0x230] sm:$0xff]
    %v136 = vld [vmem:[#allocation2 + $0x238] sm:$0xff]
    %v137 = vld [vmem:[#allocation2 + $0x240] sm:$0xff]
    %v138 = vld [vmem:[#allocation2 + $0x248] sm:$0xff]
    %v139 = vld [vmem:[#allocation2 + $0x250] sm:$0xff]
    %v140 = vld [vmem:[#allocation2 + $0x258] sm:$0xff]
    %v141 = vld [vmem:[#allocation2 + $0x260] sm:$0xff]
    %v142 = vld [vmem:[#allocation2 + $0x268] sm:$0xff]
    %v143 = vld [vmem:[#allocation2 + $0x270] sm:$0xff]
    %v144 = vld [vmem:[#allocation2 + $0x278] sm:$0xff]
    %v145 = vld [vmem:[#allocation2 + $0x280] sm:$0xff]
    %v146 = vld [vmem:[#allocation2 + $0x288] sm:$0xff]
    %v147 = vld [vmem:[#allocation2 + $0x290] sm:$0xff]
    %v148 = vld [vmem:[#allocation2 + $0x298] sm:$0xff]
    %v149 = vld [vmem:[#allocation2 + $0x2a0] sm:$0xff]
    %v150 = vld [vmem:[#allocation2 + $0x2a8] sm:$0xff]
    %v151 = vld [vmem:[#allocation2 + $0x2b0] sm:$0xff]
    %v152 = vld [vmem:[#allocation2 + $0x2b8] sm:$0xff]
    %v153 = vld [vmem:[#allocation2 + $0x2c0] sm:$0xff]
    %v154 = vld [vmem:[#allocation2 + $0x2c8] sm:$0xff]
    %v155 = vld [vmem:[#allocation2 + $0x2d0] sm:$0xff]
    %v156 = vld [vmem:[#allocation2 + $0x2d8] sm:$0xff]
    %v157 = vld [vmem:[#allocation2 + $0x2e0] sm:$0xff]
    %v158 = vld [vmem:[#allocation2 + $0x2e8] sm:$0xff]
    %v159 = vld [vmem:[#allocation2 + $0x2f0] sm:$0xff]
    %v160 = vld [vmem:[#allocation2 + $0x2f8] sm:$0xff]
    %v161 = vld [vmem:[#allocation2 + $0x300] sm:$0xff]
    %v162 = vld [vmem:[#allocation2 + $0x308] sm:$0xff]
    %v163 = vld [vmem:[#allocation2 + $0x310] sm:$0xff]
    %v164 = vld [vmem:[#allocation2 + $0x318] sm:$0xff]
    %v165 = vld [vmem:[#allocation2 + $0x320] sm:$0xff]
    %v166 = vld [vmem:[#allocation2 + $0x328] sm:$0xff]
    %v167 = vld [vmem:[#allocation2 + $0x330] sm:$0xff]
    %v168 = vld [vmem:[#allocation2 + $0x338] sm:$0xff]
    %v169 = vld [vmem:[#allocation2 + $0x340] sm:$0xff]
    %v170 = vld [vmem:[#allocation2 + $0x348] sm:$0xff]
    %v171 = vld [vmem:[#allocation2 + $0x350] sm:$0xff]
    %v172 = vld [vmem:[#allocation2 + $0x358] sm:$0xff]
    %v173 = vld [vmem:[#allocation2 + $0x360] sm:$0xff]
    %v174 = vld [vmem:[#allocation2 + $0x368] sm:$0xff]
    %v175 = vld [vmem:[#allocation2 + $0x370] sm:$0xff]
    %v176 = vld [vmem:[#allocation2 + $0x378] sm:$0xff]
    %v177 = vld [vmem:[#allocation2 + $0x380] sm:$0xff]
    %v178 = vld [vmem:[#allocation2 + $0x388] sm:$0xff]
    %v179 = vld [vmem:[#allocation2 + $0x390] sm:$0xff]
    %v180 = vld [vmem:[#allocation2 + $0x398] sm:$0xff]
    %v181 = vld [vmem:[#allocation2 + $0x3a0] sm:$0xff]
    %v182 = vld [vmem:[#allocation2 + $0x3a8] sm:$0xff]
    %v183 = vld [vmem:[#allocation2 + $0x3b0] sm:$0xff]
    %v184 = vld [vmem:[#allocation2 + $0x3b8] sm:$0xff]
    %v185 = vld [vmem:[#allocation2 + $0x3c0] sm:$0xff]
    %v186 = vld [vmem:[#allocation2 + $0x3c8] sm:$0xff]
    %v187 = vld [vmem:[#allocation2 + $0x3d0] sm:$0xff]
    %v188 = vld [vmem:[#allocation2 + $0x3d8] sm:$0xff]
    %v189 = vld [vmem:[#allocation2 + $0x3e0] sm:$0xff]
    %v190 = vld [vmem:[#allocation2 + $0x3e8] sm:$0xff]
    %v191 = vld [vmem:[#allocation2 + $0x3f0] sm:$0xff]
    %v192 = vld [vmem:[#allocation2 + $0x3f8] sm:$0xff]
    %v193 = vld [vmem:[#allocation2 + $0x400] sm:$0xff]
    %v194 = vld [vmem:[#allocation2 + $0x408] sm:$0xff]
    %v195 = vld [vmem:[#allocation2 + $0x410] sm:$0xff]
    %v196 = vld [vmem:[#allocation2 + $0x418] sm:$0xff]
    %v197 = vld [vmem:[#allocation2 + $0x420] sm:$0xff]
    %v198 = vld [vmem:[#allocation2 + $0x428] sm:$0xff]
    %v199 = vld [vmem:[#allocation2 + $0x430] sm:$0xff]
    %v200 = vld [vmem:[#allocation2 + $0x438] sm:$0xff]
    %v201 = vld [vmem:[#allocation2 + $0x440] sm:$0xff]
    %v202 = vld [vmem:[#allocation2 + $0x448] sm:$0xff]
    %v203 = vld [vmem:[#allocation2 + $0x450] sm:$0xff]
    %v204 = vld [vmem:[#allocation2 + $0x458] sm:$0xff]
    %v205 = vld [vmem:[#allocation2 + $0x460] sm:$0xff]
    %v206 = vld [vmem:[#allocation2 + $0x468] sm:$0xff]
    %v207 = vld [vmem:[#allocation2 + $0x470] sm:$0xff]
    %v208 = vld [vmem:[#allocation2 + $0x478] sm:$0xff]
    %v209 = vld [vmem:[#allocation2 + $0x480] sm:$0xff]
    %v210 = vld [vmem:[#allocation2 + $0x488] sm:$0xff]
    %v211 = vld [vmem:[#allocation2 + $0x490] sm:$0xff]
    %v212 = vld [vmem:[#allocation2 + $0x498] sm:$0xff]
    %v213 = vld [vmem:[#allocation2 + $0x4a0] sm:$0xff]
    %v214 = vld [vmem:[#allocation2 + $0x4a8] sm:$0xff]
    %v215 = vld [vmem:[#allocation2 + $0x4b0] sm:$0xff]
    %v216 = vld [vmem:[#allocation2 + $0x4b8] sm:$0xff]
    %v217 = vld [vmem:[#allocation2 + $0x4c0] sm:$0xff]
    %v218 = vld [vmem:[#allocation2 + $0x4c8] sm:$0xff]
    %v219 = vld [vmem:[#allocation2 + $0x4d0] sm:$0xff]
    %v220 = vld [vmem:[#allocation2 + $0x4d8] sm:$0xff]
    %v221 = vld [vmem:[#allocation2 + $0x4e0] sm:$0xff]
    %v222 = vld [vmem:[#allocation2 + $0x4e8] sm:$0xff]
    %v223 = vld [vmem:[#allocation2 + $0x4f0] sm:$0xff]
    %v224 = vld [vmem:[#allocation2 + $0x4f8] sm:$0xff]
    %v225 = vld [vmem:[#allocation2 + $0x500] sm:$0xff]
    %v226 = vld [vmem:[#allocation2 + $0x508] sm:$0xff]
    %v227 = vld [vmem:[#allocation2 + $0x510] sm:$0xff]
    %v228 = vld [vmem:[#allocation2 + $0x518] sm:$0xff]
    %v229 = vld [vmem:[#allocation2 + $0x520] sm:$0xff]
    %v230 = vld [vmem:[#allocation2 + $0x528] sm:$0xff]
    %v231 = vld [vmem:[#allocation2 + $0x530] sm:$0xff]
    %v232 = vld [vmem:[#allocation2 + $0x538] sm:$0xff]
    %v233 = vld [vmem:[#allocation2 + $0x540] sm:$0xff]
    %v234 = vld [vmem:[#allocation2 + $0x548] sm:$0xff]
    %v235 = vld [vmem:[#allocation2 + $0x550] sm:$0xff]
    %v236 = vld [vmem:[#allocation2 + $0x558] sm:$0xff]
    %v237 = vld [vmem:[#allocation2 + $0x560] sm:$0xff]
    %v238 = vld [vmem:[#allocation2 + $0x568] sm:$0xff]
    %v239 = vld [vmem:[#allocation2 + $0x570] sm:$0xff]
    %v240 = vld [vmem:[#allocation2 + $0x578] sm:$0xff]
    %v241 = vld [vmem:[#allocation2 + $0x580] sm:$0xff]
    %v242 = vld [vmem:[#allocation2 + $0x588] sm:$0xff]
    %v243 = vld [vmem:[#allocation2 + $0x590] sm:$0xff]
    %v244 = vld [vmem:[#allocation2 + $0x598] sm:$0xff]
    %v245 = vld [vmem:[#allocation2 + $0x5a0] sm:$0xff]
    %v246 = vld [vmem:[#allocation2 + $0x5a8] sm:$0xff]
    %v247 = vld [vmem:[#allocation2 + $0x5b0] sm:$0xff]
    %v248 = vld [vmem:[#allocation2 + $0x5b8] sm:$0xff]
    %v249 = vld [vmem:[#allocation2 + $0x5c0] sm:$0xff]
    %v250 = vld [vmem:[#allocation2 + $0x5c8] sm:$0xff]
    %v251 = vld [vmem:[#allocation2 + $0x5d0] sm:$0xff]
    %v252 = vld [vmem:[#allocation2 + $0x5d8] sm:$0xff]
    %v253 = vld [vmem:[#allocation2 + $0x5e0] sm:$0xff]
    %v254 = vld [vmem:[#allocation2 + $0x5e8] sm:$0xff]
    %v255 = vld [vmem:[#allocation2 + $0x5f0] sm:$0xff]
    %v256 = vld [vmem:[#allocation2 + $0x5f8] sm:$0xff]
    %v257 = vld [vmem:[#allocation2 + $0x600] sm:$0xff]
    %v258 = vld [vmem:[#allocation2 + $0x608] sm:$0xff]
    %v259 = vld [vmem:[#allocation2 + $0x610] sm:$0xff]
    %v260 = vld [vmem:[#allocation2 + $0x618] sm:$0xff]
    %v261 = vld [vmem:[#allocation2 + $0x620] sm:$0xff]
    %v262 = vld [vmem:[#allocation2 + $0x628] sm:$0xff]
    %v263 = vld [vmem:[#allocation2 + $0x630] sm:$0xff]
    %v264 = vld [vmem:[#allocation2 + $0x638] sm:$0xff]
    %v265 = vld [vmem:[#allocation2 + $0x640] sm:$0xff]
    %v266 = vld [vmem:[#allocation2 + $0x648] sm:$0xff]
    %v267 = vld [vmem:[#allocation2 + $0x650] sm:$0xff]
    %v268 = vld [vmem:[#allocation2 + $0x658] sm:$0xff]
    %v269 = vld [vmem:[#allocation2 + $0x660] sm:$0xff]
    %v270 = vld [vmem:[#allocation2 + $0x668] sm:$0xff]
    %v271 = vld [vmem:[#allocation2 + $0x670] sm:$0xff]
    %v272 = vld [vmem:[#allocation2 + $0x678] sm:$0xff]
    %v273 = vld [vmem:[#allocation2 + $0x680] sm:$0xff]
    %v274 = vld [vmem:[#allocation2 + $0x688] sm:$0xff]
    %v275 = vld [vmem:[#allocation2 + $0x690] sm:$0xff]
    %v276 = vld [vmem:[#allocation2 + $0x698] sm:$0xff]
    %v277 = vld [vmem:[#allocation2 + $0x6a0] sm:$0xff]
    %v278 = vld [vmem:[#allocation2 + $0x6a8] sm:$0xff]
    %v279 = vld [vmem:[#allocation2 + $0x6b0] sm:$0xff]
    %v280 = vld [vmem:[#allocation2 + $0x6b8] sm:$0xff]
    %v281 = vld [vmem:[#allocation2 + $0x6c0] sm:$0xff]
    %v282 = vld [vmem:[#allocation2 + $0x6c8] sm:$0xff]
    %v283 = vld [vmem:[#allocation2 + $0x6d0] sm:$0xff]
    %v284 = vld [vmem:[#allocation2 + $0x6d8] sm:$0xff]
    %v285 = vld [vmem:[#allocation2 + $0x6e0] sm:$0xff]
    %v286 = vld [vmem:[#allocation2 + $0x6e8] sm:$0xff]
    %v287 = vld [vmem:[#allocation2 + $0x6f0] sm:$0xff]
    %v288 = vld [vmem:[#allocation2 + $0x6f8] sm:$0xff]
    %v289 = vld [vmem:[#allocation2 + $0x700] sm:$0xff]
    %v290 = vld [vmem:[#allocation2 + $0x708] sm:$0xff]
    %v291 = vld [vmem:[#allocation2 + $0x710] sm:$0xff]
    %v292 = vld [vmem:[#allocation2 + $0x718] sm:$0xff]
    %v293 = vld [vmem:[#allocation2 + $0x720] sm:$0xff]
    %v294 = vld [vmem:[#allocation2 + $0x728] sm:$0xff]
    %v295 = vld [vmem:[#allocation2 + $0x730] sm:$0xff]
    %v296 = vld [vmem:[#allocation2 + $0x738] sm:$0xff]
    %v297 = vld [vmem:[#allocation2 + $0x740] sm:$0xff]
    %v298 = vld [vmem:[#allocation2 + $0x748] sm:$0xff]
    %v299 = vld [vmem:[#allocation2 + $0x750] sm:$0xff]
    %v300 = vld [vmem:[#allocation2 + $0x758] sm:$0xff]
    %v301 = vld [vmem:[#allocation2 + $0x760] sm:$0xff]
    %v302 = vld [vmem:[#allocation2 + $0x768] sm:$0xff]
    %v303 = vld [vmem:[#allocation2 + $0x770] sm:$0xff]
    %v304 = vld [vmem:[#allocation2 + $0x778] sm:$0xff]
    %v305 = vld [vmem:[#allocation2 + $0x780] sm:$0xff]
    %v306 = vld [vmem:[#allocation2 + $0x788] sm:$0xff]
    %v307 = vld [vmem:[#allocation2 + $0x790] sm:$0xff]
    %v308 = vld [vmem:[#allocation2 + $0x798] sm:$0xff]
    %v309 = vld [vmem:[#allocation2 + $0x7a0] sm:$0xff]
    %v310 = vld [vmem:[#allocation2 + $0x7a8] sm:$0xff]
    %v311 = vld [vmem:[#allocation2 + $0x7b0] sm:$0xff]
    %v312 = vld [vmem:[#allocation2 + $0x7b8] sm:$0xff]
    %v313 = vld [vmem:[#allocation2 + $0x7c0] sm:$0xff]
    %v314 = vld [vmem:[#allocation2 + $0x7c8] sm:$0xff]
    %v315 = vld [vmem:[#allocation2 + $0x7d0] sm:$0xff]
    %v316 = vld [vmem:[#allocation2 + $0x7d8] sm:$0xff]
    %v317 = vld [vmem:[#allocation2 + $0x7e0] sm:$0xff]
    %v318 = vld [vmem:[#allocation2 + $0x7e8] sm:$0xff]
    %v319 = vld [vmem:[#allocation2 + $0x7f0] sm:$0xff]
    %v320 = vld [vmem:[#allocation2 + $0x7f8] sm:$0xff]
    %v321 = vadd.f32 %v65, %v66
    %v322 = vadd.f32 %v321, %v67
    %v323 = vadd.f32 %v322, %v68
    %v324 = vadd.f32 %v323, %v69
    %v325 = vadd.f32 %v324, %v70
    %v326 = vadd.f32 %v325, %v71
    %v327 = vadd.f32 %v326, %v72
    %v328 = vadd.f32 %v327, %v73
    %v329 = vadd.f32 %v328, %v74
    %v330 = vadd.f32 %v329, %v75
    %v331 = vadd.f32 %v330, %v76
    %v332 = vadd.f32 %v331, %v77
    %v333 = vadd.f32 %v332, %v78
    %v334 = vadd.f32 %v333, %v79
    %v335 = vadd.f32 %v334, %v80
    %v336 = vadd.f32 %v335, %v81
    %v337 = vadd.f32 %v336, %v82
    %v338 = vadd.f32 %v337, %v83
    %v339 = vadd.f32 %v338, %v84
    %v340 = vadd.f32 %v339, %v85
    %v341 = vadd.f32 %v340, %v86
    %v342 = vadd.f32 %v341, %v87
    %v343 = vadd.f32 %v342, %v88
    %v344 = vadd.f32 %v343, %v89
    %v345 = vadd.f32 %v344, %v90
    %v346 = vadd.f32 %v345, %v91
    %v347 = vadd.f32 %v346, %v92
    %v348 = vadd.f32 %v347, %v93
    %v349 = vadd.f32 %v348, %v94
    %v350 = vadd.f32 %v349, %v95
    %v351 = vadd.f32 %v350, %v96
    %v352 = vadd.f32 %v351, %v97
    %v353 = vadd.f32 %v352, %v98
    %v354 = vadd.f32 %v353, %v99
    %v355 = vadd.f32 %v354, %v100
    %v356 = vadd.f32 %v355, %v101
    %v357 = vadd.f32 %v356, %v102
    %v358 = vadd.f32 %v357, %v103
    %v359 = vadd.f32 %v358, %v104
    %v360 = vadd.f32 %v359, %v105
    %v361 = vadd.f32 %v360, %v106
    %v362 = vadd.f32 %v361, %v107
    %v363 = vadd.f32 %v362, %v108
    %v364 = vadd.f32 %v363, %v109
    %v365 = vadd.f32 %v364, %v110
    %v366 = vadd.f32 %v365, %v111
    %v367 = vadd.f32 %v366, %v112
    %v368 = vadd.f32 %v367, %v113
    %v369 = vadd.f32 %v368, %v114
    %v370 = vadd.f32 %v369, %v115
    %v371 = vadd.f32 %v370, %v116
    %v372 = vadd.f32 %v371, %v117
    %v373 = vadd.f32 %v372, %v118
    %v374 = vadd.f32 %v373, %v119
    %v375 = vadd.f32 %v374, %v120
    %v376 = vadd.f32 %v375, %v121
    %v377 = vadd.f32 %v376, %v122
    %v378 = vadd.f32 %v377, %v123
    %v379 = vadd.f32 %v378, %v124
    %v380 = vadd.f32 %v379, %v125
    %v381 = vadd.f32 %v380, %v126
    %v382 = vadd.f32 %v381, %v127
    %v383 = vadd.f32 %v382, %v128
    %v384 = vadd.f32 %v383, %v129
    %v385 = vadd.f32 %v384, %v130
    %v386 = vadd.f32 %v385, %v131
    %v387 = vadd.f32 %v386, %v132
    %v388 = vadd.f32 %v387, %v133
    %v389 = vadd.f32 %v388, %v134
    %v390 = vadd.f32 %v389, %v135
    %v391 = vadd.f32 %v390, %v136
    %v392 = vadd.f32 %v391, %v137
    %v393 = vadd.f32 %v392, %v138
    %v394 = vadd.f32 %v393, %v139
    %v395 = vadd.f32 %v394, %v140
    %v396 = vadd.f32 %v395, %v141
    %v397 = vadd.f32 %v396, %v142
    %v398 = vadd.f32 %v397, %v143
    %v399 = vadd.f32 %v398, %v144
    %v400 = vadd.f32 %v399, %v145
    %v401 = vadd.f32 %v400, %v146
    %v402 = vadd.f32 %v401, %v147
    %v403 = vadd.f32 %v402, %v148
    %v404 = vadd.f32 %v403, %v149
    %v405 = vadd.f32 %v404, %v150
    %v406 = vadd.f32 %v405, %v151
    %v407 = vadd.f32 %v406, %v152
    %v408 = vadd.f32 %v407, %v153
    %v409 = vadd.f32 %v408, %v154
    %v410 = vadd.f32 %v409, %v155
    %v411 = vadd.f32 %v410, %v156
    %v412 = vadd.f32 %v411, %v157
    %v413 = vadd.f32 %v412, %v158
    %v414 = vadd.f32 %v413, %v159
    %v415 = vadd.f32 %v414, %v160
    %v416 = vadd.f32 %v415, %v161
    %v417 = vadd.f32 %v416, %v162
    %v418 = vadd.f32 %v417, %v163
    %v419 = vadd.f32 %v418, %v164
    %v420 = vadd.f32 %v419, %v165
    %v421 = vadd.f32 %v420, %v166
    %v422 = vadd.f32 %v421, %v167
    %v423 = vadd.f32 %v422, %v168
    %v424 = vadd.f32 %v423, %v169
    %v425 = vadd.f32 %v424, %v170
    %v426 = vadd.f32 %v425, %v171
    %v427 = vadd.f32 %v426, %v172
    %v428 = vadd.f32 %v427, %v173
    %v429 = vadd.f32 %v428, %v174
    %v430 = vadd.f32 %v429, %v175
    %v431 = vadd.f32 %v430, %v176
    %v432 = vadd.f32 %v431, %v177
    %v433 = vadd.f32 %v432, %v178
    %v434 = vadd.f32 %v433, %v179
    %v435 = vadd.f32 %v434, %v180
    %v436 = vadd.f32 %v435, %v181
    %v437 = vadd.f32 %v436, %v182
    %v438 = vadd.f32 %v437, %v183
    %v439 = vadd.f32 %v438, %v184
    %v440 = vadd.f32 %v439, %v185
    %v441 = vadd.f32 %v440, %v186
    %v442 = vadd.f32 %v441, %v187
    %v443 = vadd.f32 %v442, %v188
    %v444 = vadd.f32 %v443, %v189
    %v445 = vadd.f32 %v444, %v190
    %v446 = vadd.f32 %v445, %v191
    %v447 = vadd.f32 %v446, %v192
    %v448 = vadd.f32 %v447, %v193
    %v449 = vadd.f32 %v448, %v194
    %v450 = vadd.f32 %v449, %v195
    %v451 = vadd.f32 %v450, %v196
    %v452 = vadd.f32 %v451, %v197
    %v453 = vadd.f32 %v452, %v198
    %v454 = vadd.f32 %v453, %v199
    %v455 = vadd.f32 %v454, %v200
    %v456 = vadd.f32 %v455, %v201
    %v457 = vadd.f32 %v456, %v202
    %v458 = vadd.f32 %v457, %v203
    %v459 = vadd.f32 %v458, %v204
    %v460 = vadd.f32 %v459, %v205
    %v461 = vadd.f32 %v460, %v206
    %v462 = vadd.f32 %v461, %v207
    %v463 = vadd.f32 %v462, %v208
    %v464 = vadd.f32 %v463, %v209
    %v465 = vadd.f32 %v464, %v210
    %v466 = vadd.f32 %v465, %v211
    %v467 = vadd.f32 %v466, %v212
    %v468 = vadd.f32 %v467, %v213
    %v469 = vadd.f32 %v468, %v214
    %v470 = vadd.f32 %v469, %v215
    %v471 = vadd.f32 %v470, %v216
    %v472 = vadd.f32 %v471, %v217
    %v473 = vadd.f32 %v472, %v218
    %v474 = vadd.f32 %v473, %v219
    %v475 = vadd.f32 %v474, %v220
    %v476 = vadd.f32 %v475, %v221
    %v477 = vadd.f32 %v476, %v222
    %v478 = vadd.f32 %v477, %v223
    %v479 = vadd.f32 %v478, %v224
    %v480 = vadd.f32 %v479, %v225
    %v481 = vadd.f32 %v480, %v226
    %v482 = vadd.f32 %v481, %v227
    %v483 = vadd.f32 %v482, %v228
    %v484 = vadd.f32 %v483, %v229
    %v485 = vadd.f32 %v484, %v230
    %v486 = vadd.f32 %v485, %v231
    %v487 = vadd.f32 %v486, %v232
    %v488 = vadd.f32 %v487, %v233
    %v489 = vadd.f32 %v488, %v234
    %v490 = vadd.f32 %v489, %v235
    %v491 = vadd.f32 %v490, %v236
    %v492 = vadd.f32 %v491, %v237
    %v493 = vadd.f32 %v492, %v238
    %v494 = vadd.f32 %v493, %v239
    %v495 = vadd.f32 %v494, %v240
    %v496 = vadd.f32 %v495, %v241
    %v497 = vadd.f32 %v496, %v242
    %v498 = vadd.f32 %v497, %v243
    %v499 = vadd.f32 %v498, %v244
    %v500 = vadd.f32 %v499, %v245
    %v501 = vadd.f32 %v500, %v246
    %v502 = vadd.f32 %v501, %v247
    %v503 = vadd.f32 %v502, %v248
    %v504 = vadd.f32 %v503, %v249
    %v505 = vadd.f32 %v504, %v250
    %v506 = vadd.f32 %v505, %v251
    %v507 = vadd.f32 %v506, %v252
    %v508 = vadd.f32 %v507, %v253
    %v509 = vadd.f32 %v508, %v254
    %v510 = vadd.f32 %v509, %v255
    %v511 = vadd.f32 %v510, %v256
    %v512 = vadd.f32 %v511, %v257
    %v513 = vadd.f32 %v512, %v258
    %v514 = vadd.f32 %v513, %v259
    %v515 = vadd.f32 %v514, %v260
    %v516 = vadd.f32 %v515, %v261
    %v517 = vadd.f32 %v516, %v262
    %v518 = vadd.f32 %v517, %v263
    %v519 = vadd.f32 %v518, %v264
    %v520 = vadd.f32 %v519, %v265
    %v521 = vadd.f32 %v520, %v266
    %v522 = vadd.f32 %v521, %v267
    %v523 = vadd.f32 %v522, %v268
    %v524 = vadd.f32 %v523, %v269
    %v525 = vadd.f32 %v524, %v270
    %v526 = vadd.f32 %v525, %v271
    %v527 = vadd.f32 %v526, %v272
    %v528 = vadd.f32 %v527, %v273
    %v529 = vadd.f32 %v528, %v274
    %v530 = vadd.f32 %v529, %v275
    %v531 = vadd.f32 %v530, %v276
    %v532 = vadd.f32 %v531, %v277
    %v533 = vadd.f32 %v532, %v278
    %v534 = vadd.f32 %v533, %v279
    %v535 = vadd.f32 %v534, %v280
    %v536 = vadd.f32 %v535, %v281
    %v537 = vadd.f32 %v536, %v282
    %v538 = vadd.f32 %v537, %v283
    %v539 = vadd.f32 %v538, %v284
    %v540 = vadd.f32 %v539, %v285
    %v541 = vadd.f32 %v540, %v286
    %v542 = vadd.f32 %v541, %v287
    %v543 = vadd.f32 %v542, %v288
    %v544 = vadd.f32 %v543, %v289
    %v545 = vadd.f32 %v544, %v290
    %v546 = vadd.f32 %v545, %v291
    %v547 = vadd.f32 %v546, %v292
    %v548 = vadd.f32 %v547, %v293
    %v549 = vadd.f32 %v548, %v294
    %v550 = vadd.f32 %v549, %v295
    %v551 = vadd.f32 %v550, %v296
    %v552 = vadd.f32 %v551, %v297
    %v553 = vadd.f32 %v552, %v298
    %v554 = vadd.f32 %v553, %v299
    %v555 = vadd.f32 %v554, %v300
    %v556 = vadd.f32 %v555, %v301
    %v557 = vadd.f32 %v556, %v302
    %v558 = vadd.f32 %v557, %v303
    %v559 = vadd.f32 %v558, %v304
    %v560 = vadd.f32 %v559, %v305
    %v561 = vadd.f32 %v560, %v306
    %v562 = vadd.f32 %v561, %v307
    %v563 = vadd.f32 %v562, %v308
    %v564 = vadd.f32 %v563, %v309
    %v565 = vadd.f32 %v564, %v310
    %v566 = vadd.f32 %v565, %v311
    %v567 = vadd.f32 %v566, %v312
    %v568 = vadd.f32 %v567, %v313
    %v569 = vadd.f32 %v568, %v314
    %v570 = vadd.f32 %v569, %v315
    %v571 = vadd.f32 %v570, %v316
    %v572 = vadd.f32 %v571, %v317
    %v573 = vadd.f32 %v572, %v318
    %v574 = vadd.f32 %v573, %v319
    %v575 = vadd.f32 %v574, %v320
    %576 = vadd.xlane.f32.xlu0 %v575
    %v577 = vpop.xlane.xlu0 %576
    %v578 = vrot.slane %v577, 4
    %v579 = vadd.f32 %v577, %v578
    %v580 = vrot.slane %v579, 2
    %v581 = vadd.f32 %v579, %v580
    %v582 = vrot.slane %v581, 1
    %v583 = vadd.f32 %v581, %v582
    %s584 = vtos %v583
    %s585 = smul.f32 %s584, 3.8146973e-06
    %v586 = vmul.f32 %v65, %v65
    %v587 = vmul.f32 %v66, %v66
    %v588 = vmul.f32 %v67, %v67
    %v589 = vmul.f32 %v68, %v68
    %v590 = vmul.f32 %v69, %v69
    %v591 = vmul.f32 %v70, %v70
    %v592 = vmul.f32 %v71, %v71
    %v593 = vmul.f32 %v72, %v72
    %v594 = vmul.f32 %v73, %v73
    %v595 = vmul.f32 %v74, %v74
    %v596 = vmul.f32 %v75, %v75
    %v597 = vmul.f32 %v76, %v76
    %v598 = vmul.f32 %v77, %v77
    %v599 = vmul.f32 %v78, %v78
    %v600 = vmul.f32 %v79, %v79
    %v601 = vmul.f32 %v80, %v80
    %v602 = vmul.f32 %v81, %v81
    %v603 = vmul.f32 %v82, %v82
    %v604 = vmul.f32 %v83, %v83
    %v605 = vmul.f32 %v84, %v84
    %v606 = vmul.f32 %v85, %v85
    %v607 = vmul.f32 %v86, %v86
    %v608 = vmul.f32 %v87, %v87
    %v609 = vmul.f32 %v88, %v88
    %v610 = vmul.f32 %v89, %v89
    %v611 = vmul.f32 %v90, %v90
    %v612 = vmul.f32 %v91, %v91
    %v613 = vmul.f32 %v92, %v92
    %v614 = vmul.f32 %v93, %v93
    %v615 = vmul.f32 %v94, %v94
    %v616 = vmul.f32 %v95, %v95
    %v617 = vmul.f32 %v96, %v96
    %v618 = vmul.f32 %v97, %v97
    %v619 = vmul.f32 %v98, %v98
    %v620 = vmul.f32 %v99, %v99
    %v621 = vmul.f32 %v100, %v100
    %v622 = vmul.f32 %v101, %v101
    %v623 = vmul.f32 %v102, %v102
    %v624 = vmul.f32 %v103, %v103
    %v625 = vmul.f32 %v104, %v104
    %v626 = vmul.f32 %v105, %v105
    %v627 = vmul.f32 %v106, %v106
    %v628 = vmul.f32 %v107, %v107
    %v629 = vmul.f32 %v108, %v108
    %v630 = vmul.f32 %v109, %v109
    %v631 = vmul.f32 %v110, %v110
    %v632 = vmul.f32 %v111, %v111
    %v633 = vmul.f32 %v112, %v112
    %v634 = vmul.f32 %v113, %v113
    %v635 = vmul.f32 %v114, %v114
    %v636 = vmul.f32 %v115, %v115
    %v637 = vmul.f32 %v116, %v116
    %v638 = vmul.f32 %v117, %v117
    %v639 = vmul.f32 %v118, %v118
    %v640 = vmul.f32 %v119, %v119
    %v641 = vmul.f32 %v120, %v120
    %v642 = vmul.f32 %v121, %v121
    %v643 = vmul.f32 %v122, %v122
    %v644 = vmul.f32 %v123, %v123
    %v645 = vmul.f32 %v124, %v124
    %v646 = vmul.f32 %v125, %v125
    %v647 = vmul.f32 %v126, %v126
    %v648 = vmul.f32 %v127, %v127
    %v649 = vmul.f32 %v128, %v128
    %v650 = vmul.f32 %v129, %v129
    %v651 = vmul.f32 %v130, %v130
    %v652 = vmul.f32 %v131, %v131
    %v653 = vmul.f32 %v132, %v132
    %v654 = vmul.f32 %v133, %v133
    %v655 = vmul.f32 %v134, %v134
    %v656 = vmul.f32 %v135, %v135
    %v657 = vmul.f32 %v136, %v136
    %v658 = vmul.f32 %v137, %v137
    %v659 = vmul.f32 %v138, %v138
    %v660 = vmul.f32 %v139, %v139
    %v661 = vmul.f32 %v140, %v140
    %v662 = vmul.f32 %v141, %v141
    %v663 = vmul.f32 %v142, %v142
    %v664 = vmul.f32 %v143, %v143
    %v665 = vmul.f32 %v144, %v144
    %v666 = vmul.f32 %v145, %v145
    %v667 = vmul.f32 %v146, %v146
    %v668 = vmul.f32 %v147, %v147
    %v669 = vmul.f32 %v148, %v148
    %v670 = vmul.f32 %v149, %v149
    %v671 = vmul.f32 %v150, %v150
    %v672 = vmul.f32 %v151, %v151
    %v673 = vmul.f32 %v152, %v152
    %v674 = vmul.f32 %v153, %v153
    %v675 = vmul.f32 %v154, %v154
    %v676 = vmul.f32 %v155, %v155
    %v677 = vmul.f32 %v156, %v156
    %v678 = vmul.f32 %v157, %v157
    %v679 = vmul.f32 %v158, %v158
    %v680 = vmul.f32 %v159, %v159
    %v681 = vmul.f32 %v160, %v160
    %v682 = vmul.f32 %v161, %v161
    %v683 = vmul.f32 %v162, %v162
    %v684 = vmul.f32 %v163, %v163
    %v685 = vmul.f32 %v164, %v164
    %v686 = vmul.f32 %v165, %v165
    %v687 = vmul.f32 %v166, %v166
    %v688 = vmul.f32 %v167, %v167
    %v689 = vmul.f32 %v168, %v168
    %v690 = vmul.f32 %v169, %v169
    %v691 = vmul.f32 %v170, %v170
    %v692 = vmul.f32 %v171, %v171
    %v693 = vmul.f32 %v172, %v172
    %v694 = vmul.f32 %v173, %v173
    %v695 = vmul.f32 %v174, %v174
    %v696 = vmul.f32 %v175, %v175
    %v697 = vmul.f32 %v176, %v176
    %v698 = vmul.f32 %v177, %v177
    %v699 = vmul.f32 %v178, %v178
    %v700 = vmul.f32 %v179, %v179
    %v701 = vmul.f32 %v180, %v180
    %v702 = vmul.f32 %v181, %v181
    %v703 = vmul.f32 %v182, %v182
    %v704 = vmul.f32 %v183, %v183
    %v705 = vmul.f32 %v184, %v184
    %v706 = vmul.f32 %v185, %v185
    %v707 = vmul.f32 %v186, %v186
    %v708 = vmul.f32 %v187, %v187
    %v709 = vmul.f32 %v188, %v188
    %v710 = vmul.f32 %v189, %v189
    %v711 = vmul.f32 %v190, %v190
    %v712 = vmul.f32 %v191, %v191
    %v713 = vmul.f32 %v192, %v192
    %v714 = vmul.f32 %v193, %v193
    %v715 = vmul.f32 %v194, %v194
    %v716 = vmul.f32 %v195, %v195
    %v717 = vmul.f32 %v196, %v196
    %v718 = vmul.f32 %v197, %v197
    %v719 = vmul.f32 %v198, %v198
    %v720 = vmul.f32 %v199, %v199
    %v721 = vmul.f32 %v200, %v200
    %v722 = vmul.f32 %v201, %v201
    %v723 = vmul.f32 %v202, %v202
    %v724 = vmul.f32 %v203, %v203
    %v725 = vmul.f32 %v204, %v204
    %v726 = vmul.f32 %v205, %v205
    %v727 = vmul.f32 %v206, %v206
    %v728 = vmul.f32 %v207, %v207
    %v729 = vmul.f32 %v208, %v208
    %v730 = vmul.f32 %v209, %v209
    %v731 = vmul.f32 %v210, %v210
    %v732 = vmul.f32 %v211, %v211
    %v733 = vmul.f32 %v212, %v212
    %v734 = vmul.f32 %v213, %v213
    %v735 = vmul.f32 %v214, %v214
    %v736 = vmul.f32 %v215, %v215
    %v737 = vmul.f32 %v216, %v216
    %v738 = vmul.f32 %v217, %v217
    %v739 = vmul.f32 %v218, %v218
    %v740 = vmul.f32 %v219, %v219
    %v741 = vmul.f32 %v220, %v220
    %v742 = vmul.f32 %v221, %v221
    %v743 = vmul.f32 %v222, %v222
    %v744 = vmul.f32 %v223, %v223
    %v745 = vmul.f32 %v224, %v224
    %v746 = vmul.f32 %v225, %v225
    %v747 = vmul.f32 %v226, %v226
    %v748 = vmul.f32 %v227, %v227
    %v749 = vmul.f32 %v228, %v228
    %v750 = vmul.f32 %v229, %v229
    %v751 = vmul.f32 %v230, %v230
    %v752 = vmul.f32 %v231, %v231
    %v753 = vmul.f32 %v232, %v232
    %v754 = vmul.f32 %v233, %v233
    %v755 = vmul.f32 %v234, %v234
    %v756 = vmul.f32 %v235, %v235
    %v757 = vmul.f32 %v236, %v236
    %v758 = vmul.f32 %v237, %v237
    %v759 = vmul.f32 %v238, %v238
    %v760 = vmul.f32 %v239, %v239
    %v761 = vmul.f32 %v240, %v240
    %v762 = vmul.f32 %v241, %v241
    %v763 = vmul.f32 %v242, %v242
    %v764 = vmul.f32 %v243, %v243
    %v765 = vmul.f32 %v244, %v244
    %v766 = vmul.f32 %v245, %v245
    %v767 = vmul.f32 %v246, %v246
    %v768 = vmul.f32 %v247, %v247
    %v769 = vmul.f32 %v248, %v248
    %v770 = vmul.f32 %v249, %v249
    %v771 = vmul.f32 %v250, %v250
    %v772 = vmul.f32 %v251, %v251
    %v773 = vmul.f32 %v252, %v252
    %v774 = vmul.f32 %v253, %v253
    %v775 = vmul.f32 %v254, %v254
    %v776 = vmul.f32 %v255, %v255
    %v777 = vmul.f32 %v256, %v256
    %v778 = vmul.f32 %v257, %v257
    %v779 = vmul.f32 %v258, %v258
    %v780 = vmul.f32 %v259, %v259
    %v781 = vmul.f32 %v260, %v260
    %v782 = vmul.f32 %v261, %v261
    %v783 = vmul.f32 %v262, %v262
    %v784 = vmul.f32 %v263, %v263
    %v785 = vmul.f32 %v264, %v264
    %v786 = vmul.f32 %v265, %v265
    %v787 = vmul.f32 %v266, %v266
    %v788 = vmul.f32 %v267, %v267
    %v789 = vmul.f32 %v268, %v268
    %v790 = vmul.f32 %v269, %v269
    %v791 = vmul.f32 %v270, %v270
    %v792 = vmul.f32 %v271, %v271
    %v793 = vmul.f32 %v272, %v272
    %v794 = vmul.f32 %v273, %v273
    %v795 = vmul.f32 %v274, %v274
    %v796 = vmul.f32 %v275, %v275
    %v797 = vmul.f32 %v276, %v276
    %v798 = vmul.f32 %v277, %v277
    %v799 = vmul.f32 %v278, %v278
    %v800 = vmul.f32 %v279, %v279
    %v801 = vmul.f32 %v280, %v280
    %v802 = vmul.f32 %v281, %v281
    %v803 = vmul.f32 %v282, %v282
    %v804 = vmul.f32 %v283, %v283
    %v805 = vmul.f32 %v284, %v284
    %v806 = vmul.f32 %v285, %v285
    %v807 = vmul.f32 %v286, %v286
    %v808 = vmul.f32 %v287, %v287
    %v809 = vmul.f32 %v288, %v288
    %v810 = vmul.f32 %v289, %v289
    %v811 = vmul.f32 %v290, %v290
    %v812 = vmul.f32 %v291, %v291
    %v813 = vmul.f32 %v292, %v292
    %v814 = vmul.f32 %v293, %v293
    %v815 = vmul.f32 %v294, %v294
    %v816 = vmul.f32 %v295, %v295
    %v817 = vmul.f32 %v296, %v296
    %v818 = vmul.f32 %v297, %v297
    %v819 = vmul.f32 %v298, %v298
    %v820 = vmul.f32 %v299, %v299
    %v821 = vmul.f32 %v300, %v300
    %v822 = vmul.f32 %v301, %v301
    %v823 = vmul.f32 %v302, %v302
    %v824 = vmul.f32 %v303, %v303
    %v825 = vmul.f32 %v304, %v304
    %v826 = vmul.f32 %v305, %v305
    %v827 = vmul.f32 %v306, %v306
    %v828 = vmul.f32 %v307, %v307
    %v829 = vmul.f32 %v308, %v308
    %v830 = vmul.f32 %v309, %v309
    %v831 = vmul.f32 %v310, %v310
    %v832 = vmul.f32 %v311, %v311
    %v833 = vmul.f32 %v312, %v312
    %v834 = vmul.f32 %v313, %v313
    %v835 = vmul.f32 %v314, %v314
    %v836 = vmul.f32 %v315, %v315
    %v837 = vmul.f32 %v316, %v316
    %v838 = vmul.f32 %v317, %v317
    %v839 = vmul.f32 %v318, %v318
    %v840 = vmul.f32 %v319, %v319
    %v841 = vmul.f32 %v320, %v320
    %v842 = vadd.f32 %v586, %v587
    %v843 = vadd.f32 %v842, %v588
    %v844 = vadd.f32 %v843, %v589
    %v845 = vadd.f32 %v844, %v590
    %v846 = vadd.f32 %v845, %v591
    %v847 = vadd.f32 %v846, %v592
    %v848 = vadd.f32 %v847, %v593
    %v849 = vadd.f32 %v848, %v594
    %v850 = vadd.f32 %v849, %v595
    %v851 = vadd.f32 %v850, %v596
    %v852 = vadd.f32 %v851, %v597
    %v853 = vadd.f32 %v852, %v598
    %v854 = vadd.f32 %v853, %v599
    %v855 = vadd.f32 %v854, %v600
    %v856 = vadd.f32 %v855, %v601
    %v857 = vadd.f32 %v856, %v602
    %v858 = vadd.f32 %v857, %v603
    %v859 = vadd.f32 %v858, %v604
    %v860 = vadd.f32 %v859, %v605
    %v861 = vadd.f32 %v860, %v606
    %v862 = vadd.f32 %v861, %v607
    %v863 = vadd.f32 %v862, %v608
    %v864 = vadd.f32 %v863, %v609
    %v865 = vadd.f32 %v864, %v610
    %v866 = vadd.f32 %v865, %v611
    %v867 = vadd.f32 %v866, %v612
    %v868 = vadd.f32 %v867, %v613
    %v869 = vadd.f32 %v868, %v614
    %v870 = vadd.f32 %v869, %v615
    %v871 = vadd.f32 %v870, %v616
    %v872 = vadd.f32 %v871, %v617
    %v873 = vadd.f32 %v872, %v618
    %v874 = vadd.f32 %v873, %v619
    %v875 = vadd.f32 %v874, %v620
    %v876 = vadd.f32 %v875, %v621
    %v877 = vadd.f32 %v876, %v622
    %v878 = vadd.f32 %v877, %v623
    %v879 = vadd.f32 %v878, %v624
    %v880 = vadd.f32 %v879, %v625
    %v881 = vadd.f32 %v880, %v626
    %v882 = vadd.f32 %v881, %v627
    %v883 = vadd.f32 %v882, %v628
    %v884 = vadd.f32 %v883, %v629
    %v885 = vadd.f32 %v884, %v630
    %v886 = vadd.f32 %v885, %v631
    %v887 = vadd.f32 %v886, %v632
    %v888 = vadd.f32 %v887, %v633
    %v889 = vadd.f32 %v888, %v634
    %v890 = vadd.f32 %v889, %v635
    %v891 = vadd.f32 %v890, %v636
    %v892 = vadd.f32 %v891, %v637
    %v893 = vadd.f32 %v892, %v638
    %v894 = vadd.f32 %v893, %v639
    %v895 = vadd.f32 %v894, %v640
    %v896 = vadd.f32 %v895, %v641
    %v897 = vadd.f32 %v896, %v642
    %v898 = vadd.f32 %v897, %v643
    %v899 = vadd.f32 %v898, %v644
    %v900 = vadd.f32 %v899, %v645
    %v901 = vadd.f32 %v900, %v646
    %v902 = vadd.f32 %v901, %v647
    %v903 = vadd.f32 %v902, %v648
    %v904 = vadd.f32 %v903, %v649
    %v905 = vadd.f32 %v904, %v650
    %v906 = vadd.f32 %v905, %v651
    %v907 = vadd.f32 %v906, %v652
    %v908 = vadd.f32 %v907, %v653
    %v909 = vadd.f32 %v908, %v654
    %v910 = vadd.f32 %v909, %v655
    %v911 = vadd.f32 %v910, %v656
    %v912 = vadd.f32 %v911, %v657
    %v913 = vadd.f32 %v912, %v658
    %v914 = vadd.f32 %v913, %v659
    %v915 = vadd.f32 %v914, %v660
    %v916 = vadd.f32 %v915, %v661
    %v917 = vadd.f32 %v916, %v662
    %v918 = vadd.f32 %v917, %v663
    %v919 = vadd.f32 %v918, %v664
    %v920 = vadd.f32 %v919, %v665
    %v921 = vadd.f32 %v920, %v666
    %v922 = vadd.f32 %v921, %v667
    %v923 = vadd.f32 %v922, %v668
    %v924 = vadd.f32 %v923, %v669
    %v925 = vadd.f32 %v924, %v670
    %v926 = vadd.f32 %v925, %v671
    %v927 = vadd.f32 %v926, %v672
    %v928 = vadd.f32 %v927, %v673
    %v929 = vadd.f32 %v928, %v674
    %v930 = vadd.f32 %v929, %v675
    %v931 = vadd.f32 %v930, %v676
    %v932 = vadd.f32 %v931, %v677
    %v933 = vadd.f32 %v932, %v678
    %v934 = vadd.f32 %v933, %v679
    %v935 = vadd.f32 %v934, %v680
    %v936 = vadd.f32 %v935, %v681
    %v937 = vadd.f32 %v936, %v682
    %v938 = vadd.f32 %v937, %v683
    %v939 = vadd.f32 %v938, %v684
    %v940 = vadd.f32 %v939, %v685
    %v941 = vadd.f32 %v940, %v686
    %v942 = vadd.f32 %v941, %v687
    %v943 = vadd.f32 %v942, %v688
    %v944 = vadd.f32 %v943, %v689
    %v945 = vadd.f32 %v944, %v690
    %v946 = vadd.f32 %v945, %v691
    %v947 = vadd.f32 %v946, %v692
    %v948 = vadd.f32 %v947, %v693
    %v949 = vadd.f32 %v948, %v694
    %v950 = vadd.f32 %v949, %v695
    %v951 = vadd.f32 %v950, %v696
    %v952 = vadd.f32 %v951, %v697
    %v953 = vadd.f32 %v952, %v698
    %v954 = vadd.f32 %v953, %v699
    %v955 = vadd.f32 %v954, %v700
    %v956 = vadd.f32 %v955, %v701
    %v957 = vadd.f32 %v956, %v702
    %v958 = vadd.f32 %v957, %v703
    %v959 = vadd.f32 %v958, %v704
    %v960 = vadd.f32 %v959, %v705
    %v961 = vadd.f32 %v960, %v706
    %v962 = vadd.f32 %v961, %v707
    %v963 = vadd.f32 %v962, %v708
    %v964 = vadd.f32 %v963, %v709
    %v965 = vadd.f32 %v964, %v710
    %v966 = vadd.f32 %v965, %v711
    %v967 = vadd.f32 %v966, %v712
    %v968 = vadd.f32 %v967, %v713
    %v969 = vadd.f32 %v968, %v714
    %v970 = vadd.f32 %v969, %v715
    %v971 = vadd.f32 %v970, %v716
    %v972 = vadd.f32 %v971, %v717
    %v973 = vadd.f32 %v972, %v718
    %v974 = vadd.f32 %v973, %v719
    %v975 = vadd.f32 %v974, %v720
    %v976 = vadd.f32 %v975, %v721
    %v977 = vadd.f32 %v976, %v722
    %v978 = vadd.f32 %v977, %v723
    %v979 = vadd.f32 %v978, %v724
    %v980 = vadd.f32 %v979, %v725
    %v981 = vadd.f32 %v980, %v726
    %v982 = vadd.f32 %v981, %v727
    %v983 = vadd.f32 %v982, %v728
    %v984 = vadd.f32 %v983, %v729
    %v985 = vadd.f32 %v984, %v730
    %v986 = vadd.f32 %v985, %v731
    %v987 = vadd.f32 %v986, %v732
    %v988 = vadd.f32 %v987, %v733
    %v989 = vadd.f32 %v988, %v734
    %v990 = vadd.f32 %v989, %v735
    %v991 = vadd.f32 %v990, %v736
    %v992 = vadd.f32 %v991, %v737
    %v993 = vadd.f32 %v992, %v738
    %v994 = vadd.f32 %v993, %v739
    %v995 = vadd.f32 %v994, %v740
    %v996 = vadd.f32 %v995, %v741
    %v997 = vadd.f32 %v996, %v742
    %v998 = vadd.f32 %v997, %v743
    %v999 = vadd.f32 %v998, %v744
    %v1000 = vadd.f32 %v999, %v745
    %v1001 = vadd.f32 %v1000, %v746
    %v1002 = vadd.f32 %v1001, %v747
    %v1003 = vadd.f32 %v1002, %v748
    %v1004 = vadd.f32 %v1003, %v749
    %v1005 = vadd.f32 %v1004, %v750
    %v1006 = vadd.f32 %v1005, %v751
    %v1007 = vadd.f32 %v1006, %v752
    %v1008 = vadd.f32 %v1007, %v753
    %v1009 = vadd.f32 %v1008, %v754
    %v1010 = vadd.f32 %v1009, %v755
    %v1011 = vadd.f32 %v1010, %v756
    %v1012 = vadd.f32 %v1011, %v757
    %v1013 = vadd.f32 %v1012, %v758
    %v1014 = vadd.f32 %v1013, %v759
    %v1015 = vadd.f32 %v1014, %v760
    %v1016 = vadd.f32 %v1015, %v761
    %v1017 = vadd.f32 %v1016, %v762
    %v1018 = vadd.f32 %v1017, %v763
    %v1019 = vadd.f32 %v1018, %v764
    %v1020 = vadd.f32 %v1019, %v765
    %v1021 = vadd.f32 %v1020, %v766
    %v1022 = vadd.f32 %v1021, %v767
    %v1023 = vadd.f32 %v1022, %v768
    %v1024 = vadd.f32 %v1023, %v769
    %v1025 = vadd.f32 %v1024, %v770
    %v1026 = vadd.f32 %v1025, %v771
    %v1027 = vadd.f32 %v1026, %v772
    %v1028 = vadd.f32 %v1027, %v773
    %v1029 = vadd.f32 %v1028, %v774
    %v1030 = vadd.f32 %v1029, %v775
    %v1031 = vadd.f32 %v1030, %v776
    %v1032 = vadd.f32 %v1031, %v777
    %v1033 = vadd.f32 %v1032, %v778
    %v1034 = vadd.f32 %v1033, %v779
    %v1035 = vadd.f32 %v1034, %v780
    %v1036 = vadd.f32 %v1035, %v781
    %v1037 = vadd.f32 %v1036, %v782
    %v1038 = vadd.f32 %v1037, %v783
    %v1039 = vadd.f32 %v1038, %v784
    %v1040 = vadd.f32 %v1039, %v785
    %v1041 = vadd.f32 %v1040, %v786
    %v1042 = vadd.f32 %v1041, %v787
    %v1043 = vadd.f32 %v1042, %v788
    %v1044 = vadd.f32 %v1043, %v789
    %v1045 = vadd.f32 %v1044, %v790
    %v1046 = vadd.f32 %v1045, %v791
    %v1047 = vadd.f32 %v1046, %v792
    %v1048 = vadd.f32 %v1047, %v793
    %v1049 = vadd.f32 %v1048, %v794
    %v1050 = vadd.f32 %v1049, %v795
    %v1051 = vadd.f32 %v1050, %v796
    %v1052 = vadd.f32 %v1051, %v797
    %v1053 = vadd.f32 %v1052, %v798
    %v1054 = vadd.f32 %v1053, %v799
    %v1055 = vadd.f32 %v1054, %v800
    %v1056 = vadd.f32 %v1055, %v801
    %v1057 = vadd.f32 %v1056, %v802
    %v1058 = vadd.f32 %v1057, %v803
    %v1059 = vadd.f32 %v1058, %v804
    %v1060 = vadd.f32 %v1059, %v805
    %v1061 = vadd.f32 %v1060, %v806
    %v1062 = vadd.f32 %v1061, %v807
    %v1063 = vadd.f32 %v1062, %v808
    %v1064 = vadd.f32 %v1063, %v809
    %v1065 = vadd.f32 %v1064, %v810
    %v1066 = vadd.f32 %v1065, %v811
    %v1067 = vadd.f32 %v1066, %v812
    %v1068 = vadd.f32 %v1067, %v813
    %v1069 = vadd.f32 %v1068, %v814
    %v1070 = vadd.f32 %v1069, %v815
    %v1071 = vadd.f32 %v1070, %v816
    %v1072 = vadd.f32 %v1071, %v817
    %v1073 = vadd.f32 %v1072, %v818
    %v1074 = vadd.f32 %v1073, %v819
    %v1075 = vadd.f32 %v1074, %v820
    %v1076 = vadd.f32 %v1075, %v821
    %v1077 = vadd.f32 %v1076, %v822
    %v1078 = vadd.f32 %v1077, %v823
    %v1079 = vadd.f32 %v1078, %v824
    %v1080 = vadd.f32 %v1079, %v825
    %v1081 = vadd.f32 %v1080, %v826
    %v1082 = vadd.f32 %v1081, %v827
    %v1083 = vadd.f32 %v1082, %v828
    %v1084 = vadd.f32 %v1083, %v829
    %v1085 = vadd.f32 %v1084, %v830
    %v1086 = vadd.f32 %v1085, %v831
    %v1087 = vadd.f32 %v1086, %v832
    %v1088 = vadd.f32 %v1087, %v833
    %v1089 = vadd.f32 %v1088, %v834
    %v1090 = vadd.f32 %v1089, %v835
    %v1091 = vadd.f32 %v1090, %v836
    %v1092 = vadd.f32 %v1091, %v837
    %v1093 = vadd.f32 %v1092, %v838
    %v1094 = vadd.f32 %v1093, %v839
    %v1095 = vadd.f32 %v1094, %v840
    %v1096 = vadd.f32 %v1095, %v841
    %1097 = vadd.xlane.f32.xlu0 %v1096
    %v1098 = vpop.xlane.xlu0 %1097
    %v1099 = vrot.slane %v1098, 4
    %v1100 = vadd.f32 %v1098, %v1099
    %v1101 = vrot.slane %v1100, 2
    %v1102 = vadd.f32 %v1100, %v1101
    %v1103 = vrot.slane %v1102, 1
    %v1104 = vadd.f32 %v1102, %v1103
    %s1105 = vtos %v1104
    %s1106 = smul.f32 %s1105, 3.8146973e-06
    %s1107 = smul.f32 %s585, %s585
    %s1108 = ssub.f32 %s1106, %s1107
    %s1109 = smax.f32 %s1108, 0.0
    %s1110 = sadd.f32 %s1109, 1e-05
    %v1111 = vstv %s1110
    %v1112 = vrsqrt.pop %v1111
    %s1113 = vtos %v1112
    %v1114 = vstv %s585
    %v1115 = vmax.f32 %v65, %v1114
    %v1116 = vmax.f32 %v66, %v1114
    %v1117 = vmax.f32 %v67, %v1114
    %v1118 = vmax.f32 %v68, %v1114
    %v1119 = vmax.f32 %v69, %v1114
    %v1120 = vmax.f32 %v70, %v1114
    %v1121 = vmax.f32 %v71, %v1114
    %v1122 = vmax.f32 %v72, %v1114
    %v1123 = vmax.f32 %v73, %v1114
    %v1124 = vmax.f32 %v74, %v1114
    %v1125 = vmax.f32 %v75, %v1114
    %v1126 = vmax.f32 %v76, %v1114
    %v1127 = vmax.f32 %v77, %v1114
    %v1128 = vmax.f32 %v78, %v1114
    %v1129 = vmax.f32 %v79, %v1114
    %v1130 = vmax.f32 %v80, %v1114
    %v1131 = vmax.f32 %v81, %v1114
    %v1132 = vmax.f32 %v82, %v1114
    %v1133 = vmax.f32 %v83, %v1114
    %v1134 = vmax.f32 %v84, %v1114
    %v1135 = vmax.f32 %v85, %v1114
    %v1136 = vmax.f32 %v86, %v1114
    %v1137 = vmax.f32 %v87, %v1114
    %v1138 = vmax.f32 %v88, %v1114
    %v1139 = vmax.f32 %v89, %v1114
    %v1140 = vmax.f32 %v90, %v1114
    %v1141 = vmax.f32 %v91, %v1114
    %v1142 = vmax.f32 %v92, %v1114
    %v1143 = vmax.f32 %v93, %v1114
    %v1144 = vmax.f32 %v94, %v1114
    %v1145 = vmax.f32 %v95, %v1114
    %v1146 = vmax.f32 %v96, %v1114
    %v1147 = vmax.f32 %v97, %v1114
    %v1148 = vmax.f32 %v98, %v1114
    %v1149 = vmax.f32 %v99, %v1114
    %v1150 = vmax.f32 %v100, %v1114
    %v1151 = vmax.f32 %v101, %v1114
    %v1152 = vmax.f32 %v102, %v1114
    %v1153 = vmax.f32 %v103, %v1114
    %v1154 = vmax.f32 %v104, %v1114
    %v1155 = vmax.f32 %v105, %v1114
    %v1156 = vmax.f32 %v106, %v1114
    %v1157 = vmax.f32 %v107, %v1114
    %v1158 = vmax.f32 %v108, %v1114
    %v1159 = vmax.f32 %v109, %v1114
    %v1160 = vmax.f32 %v110, %v1114
    %v1161 = vmax.f32 %v111, %v1114
    %v1162 = vmax.f32 %v112, %v1114
    %v1163 = vmax.f32 %v113, %v1114
    %v1164 = vmax.f32 %v114, %v1114
    %v1165 = vmax.f32 %v115, %v1114
    %v1166 = vmax.f32 %v116, %v1114
    %v1167 = vmax.f32 %v117, %v1114
    %v1168 = vmax.f32 %v118, %v1114
    %v1169 = vmax.f32 %v119, %v1114
    %v1170 = vmax.f32 %v120, %v1114
    %v1171 = vmax.f32 %v121, %v1114
    %v1172 = vmax.f32 %v122, %v1114
    %v1173 = vmax.f32 %v123, %v1114
    %v1174 = vmax.f32 %v124, %v1114
    %v1175 = vmax.f32 %v125, %v1114
    %v1176 = vmax.f32 %v126, %v1114
    %v1177 = vmax.f32 %v127, %v1114
    %v1178 = vmax.f32 %v128, %v1114
    %v1179 = vmax.f32 %v129, %v1114
    %v1180 = vmax.f32 %v130, %v1114
    %v1181 = vmax.f32 %v131, %v1114
    %v1182 = vmax.f32 %v132, %v1114
    %v1183 = vmax.f32 %v133, %v1114
    %v1184 = vmax.f32 %v134, %v1114
    %v1185 = vmax.f32 %v135, %v1114
    %v1186 = vmax.f32 %v136, %v1114
    %v1187 = vmax.f32 %v137, %v1114
    %v1188 = vmax.f32 %v138, %v1114
    %v1189 = vmax.f32 %v139, %v1114
    %v1190 = vmax.f32 %v140, %v1114
    %v1191 = vmax.f32 %v141, %v1114
    %v1192 = vmax.f32 %v142, %v1114
    %v1193 = vmax.f32 %v143, %v1114
    %v1194 = vmax.f32 %v144, %v1114
    %v1195 = vmax.f32 %v145, %v1114
    %v1196 = vmax.f32 %v146, %v1114
    %v1197 = vmax.f32 %v147, %v1114
    %v1198 = vmax.f32 %v148, %v1114
    %v1199 = vmax.f32 %v149, %v1114
    %v1200 = vmax.f32 %v150, %v1114
    %v1201 = vmax.f32 %v151, %v1114
    %v1202 = vmax.f32 %v152, %v1114
    %v1203 = vmax.f32 %v153, %v1114
    %v1204 = vmax.f32 %v154, %v1114
    %v1205 = vmax.f32 %v155, %v1114
    %v1206 = vmax.f32 %v156, %v1114
    %v1207 = vmax.f32 %v157, %v1114
    %v1208 = vmax.f32 %v158, %v1114
    %v1209 = vmax.f32 %v159, %v1114
    %v1210 = vmax.f32 %v160, %v1114
    %v1211 = vmax.f32 %v161, %v1114
    %v1212 = vmax.f32 %v162, %v1114
    %v1213 = vmax.f32 %v163, %v1114
    %v1214 = vmax.f32 %v164, %v1114
    %v1215 = vmax.f32 %v165, %v1114
    %v1216 = vmax.f32 %v166, %v1114
    %v1217 = vmax.f32 %v167, %v1114
    %v1218 = vmax.f32 %v168, %v1114
    %v1219 = vmax.f32 %v169, %v1114
    %v1220 = vmax.f32 %v170, %v1114
    %v1221 = vmax.f32 %v171, %v1114
    %v1222 = vmax.f32 %v172, %v1114
    %v1223 = vmax.f32 %v173, %v1114
    %v1224 = vmax.f32 %v174, %v1114
    %v1225 = vmax.f32 %v175, %v1114
    %v1226 = vmax.f32 %v176, %v1114
    %v1227 = vmax.f32 %v177, %v1114
    %v1228 = vmax.f32 %v178, %v1114
    %v1229 = vmax.f32 %v179, %v1114
    %v1230 = vmax.f32 %v180, %v1114
    %v1231 = vmax.f32 %v181, %v1114
    %v1232 = vmax.f32 %v182, %v1114
    %v1233 = vmax.f32 %v183, %v1114
    %v1234 = vmax.f32 %v184, %v1114
    %v1235 = vmax.f32 %v185, %v1114
    %v1236 = vmax.f32 %v186, %v1114
    %v1237 = vmax.f32 %v187, %v1114
    %v1238 = vmax.f32 %v188, %v1114
    %v1239 = vmax.f32 %v189, %v1114
    %v1240 = vmax.f32 %v190, %v1114
    %v1241 = vmax.f32 %v191, %v1114
    %v1242 = vmax.f32 %v192, %v1114
    %v1243 = vmax.f32 %v193, %v1114
    %v1244 = vmax.f32 %v194, %v1114
    %v1245 = vmax.f32 %v195, %v1114
    %v1246 = vmax.f32 %v196, %v1114
    %v1247 = vmax.f32 %v197, %v1114
    %v1248 = vmax.f32 %v198, %v1114
    %v1249 = vmax.f32 %v199, %v1114
    %v1250 = vmax.f32 %v200, %v1114
    %v1251 = vmax.f32 %v201, %v1114
    %v1252 = vmax.f32 %v202, %v1114
    %v1253 = vmax.f32 %v203, %v1114
    %v1254 = vmax.f32 %v204, %v1114
    %v1255 = vmax.f32 %v205, %v1114
    %v1256 = vmax.f32 %v206, %v1114
    %v1257 = vmax.f32 %v207, %v1114
    %v1258 = vmax.f32 %v208, %v1114
    %v1259 = vmax.f32 %v209, %v1114
    %v1260 = vmax.f32 %v210, %v1114
    %v1261 = vmax.f32 %v211, %v1114
    %v1262 = vmax.f32 %v212, %v1114
    %v1263 = vmax.f32 %v213, %v1114
    %v1264 = vmax.f32 %v214, %v1114
    %v1265 = vmax.f32 %v215, %v1114
    %v1266 = vmax.f32 %v216, %v1114
    %v1267 = vmax.f32 %v217, %v1114
    %v1268 = vmax.f32 %v218, %v1114
    %v1269 = vmax.f32 %v219, %v1114
    %v1270 = vmax.f32 %v220, %v1114
    %v1271 = vmax.f32 %v221, %v1114
    %v1272 = vmax.f32 %v222, %v1114
    %v1273 = vmax.f32 %v223, %v1114
    %v1274 = vmax.f32 %v224, %v1114
    %v1275 = vmax.f32 %v225, %v1114
    %v1276 = vmax.f32 %v226, %v1114
    %v1277 = vmax.f32 %v227, %v1114
    %v1278 = vmax.f32 %v228, %v1114
    %v1279 = vmax.f32 %v229, %v1114
    %v1280 = vmax.f32 %v230, %v1114
    %v1281 = vmax.f32 %v231, %v1114
    %v1282 = vmax.f32 %v232, %v1114
    %v1283 = vmax.f32 %v233, %v1114
    %v1284 = vmax.f32 %v234, %v1114
    %v1285 = vmax.f32 %v235, %v1114
    %v1286 = vmax.f32 %v236, %v1114
    %v1287 = vmax.f32 %v237, %v1114
    %v1288 = vmax.f32 %v238, %v1114
    %v1289 = vmax.f32 %v239, %v1114
    %v1290 = vmax.f32 %v240, %v1114
    %v1291 = vmax.f32 %v241, %v1114
    %v1292 = vmax.f32 %v242, %v1114
    %v1293 = vmax.f32 %v243, %v1114
    %v1294 = vmax.f32 %v244, %v1114
    %v1295 = vmax.f32 %v245, %v1114
    %v1296 = vmax.f32 %v246, %v1114
    %v1297 = vmax.f32 %v247, %v1114
    %v1298 = vmax.f32 %v248, %v1114
    %v1299 = vmax.f32 %v249, %v1114
    %v1300 = vmax.f32 %v250, %v1114
    %v1301 = vmax.f32 %v251, %v1114
    %v1302 = vmax.f32 %v252, %v1114
    %v1303 = vmax.f32 %v253, %v1114
    %v1304 = vmax.f32 %v254, %v1114
    %v1305 = vmax.f32 %v255, %v1114
    %v1306 = vmax.f32 %v256, %v1114
    %v1307 = vmax.f32 %v257, %v1114
    %v1308 = vmax.f32 %v258, %v1114
    %v1309 = vmax.f32 %v259, %v1114
    %v1310 = vmax.f32 %v260, %v1114
    %v1311 = vmax.f32 %v261, %v1114
    %v1312 = vmax.f32 %v262, %v1114
    %v1313 = vmax.f32 %v263, %v1114
    %v1314 = vmax.f32 %v264, %v1114
    %v1315 = vmax.f32 %v265, %v1114
    %v1316 = vmax.f32 %v266, %v1114
    %v1317 = vmax.f32 %v267, %v1114
    %v1318 = vmax.f32 %v268, %v1114
    %v1319 = vmax.f32 %v269, %v1114
    %v1320 = vmax.f32 %v270, %v1114
    %v1321 = vmax.f32 %v271, %v1114
    %v1322 = vmax.f32 %v272, %v1114
    %v1323 = vmax.f32 %v273, %v1114
    %v1324 = vmax.f32 %v274, %v1114
    %v1325 = vmax.f32 %v275, %v1114
    %v1326 = vmax.f32 %v276, %v1114
    %v1327 = vmax.f32 %v277, %v1114
    %v1328 = vmax.f32 %v278, %v1114
    %v1329 = vmax.f32 %v279, %v1114
    %v1330 = vmax.f32 %v280, %v1114
    %v1331 = vmax.f32 %v281, %v1114
    %v1332 = vmax.f32 %v282, %v1114
    %v1333 = vmax.f32 %v283, %v1114
    %v1334 = vmax.f32 %v284, %v1114
    %v1335 = vmax.f32 %v285, %v1114
    %v1336 = vmax.f32 %v286, %v1114
    %v1337 = vmax.f32 %v287, %v1114
    %v1338 = vmax.f32 %v288, %v1114
    %v1339 = vmax.f32 %v289, %v1114
    %v1340 = vmax.f32 %v290, %v1114
    %v1341 = vmax.f32 %v291, %v1114
    %v1342 = vmax.f32 %v292, %v1114
    %v1343 = vmax.f32 %v293, %v1114
    %v1344 = vmax.f32 %v294, %v1114
    %v1345 = vmax.f32 %v295, %v1114
    %v1346 = vmax.f32 %v296, %v1114
    %v1347 = vmax.f32 %v297, %v1114
    %v1348 = vmax.f32 %v298, %v1114
    %v1349 = vmax.f32 %v299, %v1114
    %v1350 = vmax.f32 %v300, %v1114
    %v1351 = vmax.f32 %v301, %v1114
    %v1352 = vmax.f32 %v302, %v1114
    %v1353 = vmax.f32 %v303, %v1114
    %v1354 = vmax.f32 %v304, %v1114
    %v1355 = vmax.f32 %v305, %v1114
    %v1356 = vmax.f32 %v306, %v1114
    %v1357 = vmax.f32 %v307, %v1114
    %v1358 = vmax.f32 %v308, %v1114
    %v1359 = vmax.f32 %v309, %v1114
    %v1360 = vmax.f32 %v310, %v1114
    %v1361 = vmax.f32 %v311, %v1114
    %v1362 = vmax.f32 %v312, %v1114
    %v1363 = vmax.f32 %v313, %v1114
    %v1364 = vmax.f32 %v314, %v1114
    %v1365 = vmax.f32 %v315, %v1114
    %v1366 = vmax.f32 %v316, %v1114
    %v1367 = vmax.f32 %v317, %v1114
    %v1368 = vmax.f32 %v318, %v1114
    %v1369 = vmax.f32 %v319, %v1114
    %v1370 = vmax.f32 %v320, %v1114
    %v1371 = vsub.f32 %v1115, %v1114
    %v1372 = vsub.f32 %v1116, %v1114
    %v1373 = vsub.f32 %v1117, %v1114
    %v1374 = vsub.f32 %v1118, %v1114
    %v1375 = vsub.f32 %v1119, %v1114
    %v1376 = vsub.f32 %v1120, %v1114
    %v1377 = vsub.f32 %v1121, %v1114
    %v1378 = vsub.f32 %v1122, %v1114
    %v1379 = vsub.f32 %v1123, %v1114
    %v1380 = vsub.f32 %v1124, %v1114
    %v1381 = vsub.f32 %v1125, %v1114
    %v1382 = vsub.f32 %v1126, %v1114
    %v1383 = vsub.f32 %v1127, %v1114
    %v1384 = vsub.f32 %v1128, %v1114
    %v1385 = vsub.f32 %v1129, %v1114
    %v1386 = vsub.f32 %v1130, %v1114
    %v1387 = vsub.f32 %v1131, %v1114
    %v1388 = vsub.f32 %v1132, %v1114
    %v1389 = vsub.f32 %v1133, %v1114
    %v1390 = vsub.f32 %v1134, %v1114
    %v1391 = vsub.f32 %v1135, %v1114
    %v1392 = vsub.f32 %v1136, %v1114
    %v1393 = vsub.f32 %v1137, %v1114
    %v1394 = vsub.f32 %v1138, %v1114
    %v1395 = vsub.f32 %v1139, %v1114
    %v1396 = vsub.f32 %v1140, %v1114
    %v1397 = vsub.f32 %v1141, %v1114
    %v1398 = vsub.f32 %v1142, %v1114
    %v1399 = vsub.f32 %v1143, %v1114
    %v1400 = vsub.f32 %v1144, %v1114
    %v1401 = vsub.f32 %v1145, %v1114
    %v1402 = vsub.f32 %v1146, %v1114
    %v1403 = vsub.f32 %v1147, %v1114
    %v1404 = vsub.f32 %v1148, %v1114
    %v1405 = vsub.f32 %v1149, %v1114
    %v1406 = vsub.f32 %v1150, %v1114
    %v1407 = vsub.f32 %v1151, %v1114
    %v1408 = vsub.f32 %v1152, %v1114
    %v1409 = vsub.f32 %v1153, %v1114
    %v1410 = vsub.f32 %v1154, %v1114
    %v1411 = vsub.f32 %v1155, %v1114
    %v1412 = vsub.f32 %v1156, %v1114
    %v1413 = vsub.f32 %v1157, %v1114
    %v1414 = vsub.f32 %v1158, %v1114
    %v1415 = vsub.f32 %v1159, %v1114
    %v1416 = vsub.f32 %v1160, %v1114
    %v1417 = vsub.f32 %v1161, %v1114
    %v1418 = vsub.f32 %v1162, %v1114
    %v1419 = vsub.f32 %v1163, %v1114
    %v1420 = vsub.f32 %v1164, %v1114
    %v1421 = vsub.f32 %v1165, %v1114
    %v1422 = vsub.f32 %v1166, %v1114
    %v1423 = vsub.f32 %v1167, %v1114
    %v1424 = vsub.f32 %v1168, %v1114
    %v1425 = vsub.f32 %v1169, %v1114
    %v1426 = vsub.f32 %v1170, %v1114
    %v1427 = vsub.f32 %v1171, %v1114
    %v1428 = vsub.f32 %v1172, %v1114
    %v1429 = vsub.f32 %v1173, %v1114
    %v1430 = vsub.f32 %v1174, %v1114
    %v1431 = vsub.f32 %v1175, %v1114
    %v1432 = vsub.f32 %v1176, %v1114
    %v1433 = vsub.f32 %v1177, %v1114
    %v1434 = vsub.f32 %v1178, %v1114
    %v1435 = vsub.f32 %v1179, %v1114
    %v1436 = vsub.f32 %v1180, %v1114
    %v1437 = vsub.f32 %v1181, %v1114
    %v1438 = vsub.f32 %v1182, %v1114
    %v1439 = vsub.f32 %v1183, %v1114
    %v1440 = vsub.f32 %v1184, %v1114
    %v1441 = vsub.f32 %v1185, %v1114
    %v1442 = vsub.f32 %v1186, %v1114
    %v1443 = vsub.f32 %v1187, %v1114
    %v1444 = vsub.f32 %v1188, %v1114
    %v1445 = vsub.f32 %v1189, %v1114
    %v1446 = vsub.f32 %v1190, %v1114
    %v1447 = vsub.f32 %v1191, %v1114
    %v1448 = vsub.f32 %v1192, %v1114
    %v1449 = vsub.f32 %v1193, %v1114
    %v1450 = vsub.f32 %v1194, %v1114
    %v1451 = vsub.f32 %v1195, %v1114
    %v1452 = vsub.f32 %v1196, %v1114
    %v1453 = vsub.f32 %v1197, %v1114
    %v1454 = vsub.f32 %v1198, %v1114
    %v1455 = vsub.f32 %v1199, %v1114
    %v1456 = vsub.f32 %v1200, %v1114
    %v1457 = vsub.f32 %v1201, %v1114
    %v1458 = vsub.f32 %v1202, %v1114
    %v1459 = vsub.f32 %v1203, %v1114
    %v1460 = vsub.f32 %v1204, %v1114
    %v1461 = vsub.f32 %v1205, %v1114
    %v1462 = vsub.f32 %v1206, %v1114
    %v1463 = vsub.f32 %v1207, %v1114
    %v1464 = vsub.f32 %v1208, %v1114
    %v1465 = vsub.f32 %v1209, %v1114
    %v1466 = vsub.f32 %v1210, %v1114
    %v1467 = vsub.f32 %v1211, %v1114
    %v1468 = vsub.f32 %v1212, %v1114
    %v1469 = vsub.f32 %v1213, %v1114
    %v1470 = vsub.f32 %v1214, %v1114
    %v1471 = vsub.f32 %v1215, %v1114
    %v1472 = vsub.f32 %v1216, %v1114
    %v1473 = vsub.f32 %v1217, %v1114
    %v1474 = vsub.f32 %v1218, %v1114
    %v1475 = vsub.f32 %v1219, %v1114
    %v1476 = vsub.f32 %v1220, %v1114
    %v1477 = vsub.f32 %v1221, %v1114
    %v1478 = vsub.f32 %v1222, %v1114
    %v1479 = vsub.f32 %v1223, %v1114
    %v1480 = vsub.f32 %v1224, %v1114
    %v1481 = vsub.f32 %v1225, %v1114
    %v1482 = vsub.f32 %v1226, %v1114
    %v1483 = vsub.f32 %v1227, %v1114
    %v1484 = vsub.f32 %v1228, %v1114
    %v1485 = vsub.f32 %v1229, %v1114
    %v1486 = vsub.f32 %v1230, %v1114
    %v1487 = vsub.f32 %v1231, %v1114
    %v1488 = vsub.f32 %v1232, %v1114
    %v1489 = vsub.f32 %v1233, %v1114
    %v1490 = vsub.f32 %v1234, %v1114
    %v1491 = vsub.f32 %v1235, %v1114
    %v1492 = vsub.f32 %v1236, %v1114
    %v1493 = vsub.f32 %v1237, %v1114
    %v1494 = vsub.f32 %v1238, %v1114
    %v1495 = vsub.f32 %v1239, %v1114
    %v1496 = vsub.f32 %v1240, %v1114
    %v1497 = vsub.f32 %v1241, %v1114
    %v1498 = vsub.f32 %v1242, %v1114
    %v1499 = vsub.f32 %v1243, %v1114
    %v1500 = vsub.f32 %v1244, %v1114
    %v1501 = vsub.f32 %v1245, %v1114
    %v1502 = vsub.f32 %v1246, %v1114
    %v1503 = vsub.f32 %v1247, %v1114
    %v1504 = vsub.f32 %v1248, %v1114
    %v1505 = vsub.f32 %v1249, %v1114
    %v1506 = vsub.f32 %v1250, %v1114
    %v1507 = vsub.f32 %v1251, %v1114
    %v1508 = vsub.f32 %v1252, %v1114
    %v1509 = vsub.f32 %v1253, %v1114
    %v1510 = vsub.f32 %v1254, %v1114
    %v1511 = vsub.f32 %v1255, %v1114
    %v1512 = vsub.f32 %v1256, %v1114
    %v1513 = vsub.f32 %v1257, %v1114
    %v1514 = vsub.f32 %v1258, %v1114
    %v1515 = vsub.f32 %v1259, %v1114
    %v1516 = vsub.f32 %v1260, %v1114
    %v1517 = vsub.f32 %v1261, %v1114
    %v1518 = vsub.f32 %v1262, %v1114
    %v1519 = vsub.f32 %v1263, %v1114
    %v1520 = vsub.f32 %v1264, %v1114
    %v1521 = vsub.f32 %v1265, %v1114
    %v1522 = vsub.f32 %v1266, %v1114
    %v1523 = vsub.f32 %v1267, %v1114
    %v1524 = vsub.f32 %v1268, %v1114
    %v1525 = vsub.f32 %v1269, %v1114
    %v1526 = vsub.f32 %v1270, %v1114
    %v1527 = vsub.f32 %v1271, %v1114
    %v1528 = vsub.f32 %v1272, %v1114
    %v1529 = vsub.f32 %v1273, %v1114
    %v1530 = vsub.f32 %v1274, %v1114
    %v1531 = vsub.f32 %v1275, %v1114
    %v1532 = vsub.f32 %v1276, %v1114
    %v1533 = vsub.f32 %v1277, %v1114
    %v1534 = vsub.f32 %v1278, %v1114
    %v1535 = vsub.f32 %v1279, %v1114
    %v1536 = vsub.f32 %v1280, %v1114
    %v1537 = vsub.f32 %v1281, %v1114
    %v1538 = vsub.f32 %v1282, %v1114
    %v1539 = vsub.f32 %v1283, %v1114
    %v1540 = vsub.f32 %v1284, %v1114
    %v1541 = vsub.f32 %v1285, %v1114
    %v1542 = vsub.f32 %v1286, %v1114
    %v1543 = vsub.f32 %v1287, %v1114
    %v1544 = vsub.f32 %v1288, %v1114
    %v1545 = vsub.f32 %v1289, %v1114
    %v1546 = vsub.f32 %v1290, %v1114
    %v1547 = vsub.f32 %v1291, %v1114
    %v1548 = vsub.f32 %v1292, %v1114
    %v1549 = vsub.f32 %v1293, %v1114
    %v1550 = vsub.f32 %v1294, %v1114
    %v1551 = vsub.f32 %v1295, %v1114
    %v1552 = vsub.f32 %v1296, %v1114
    %v1553 = vsub.f32 %v1297, %v1114
    %v1554 = vsub.f32 %v1298, %v1114
    %v1555 = vsub.f32 %v1299, %v1114
    %v1556 = vsub.f32 %v1300, %v1114
    %v1557 = vsub.f32 %v1301, %v1114
    %v1558 = vsub.f32 %v1302, %v1114
    %v1559 = vsub.f32 %v1303, %v1114
    %v1560 = vsub.f32 %v1304, %v1114
    %v1561 = vsub.f32 %v1305, %v1114
    %v1562 = vsub.f32 %v1306, %v1114
    %v1563 = vsub.f32 %v1307, %v1114
    %v1564 = vsub.f32 %v1308, %v1114
    %v1565 = vsub.f32 %v1309, %v1114
    %v1566 = vsub.f32 %v1310, %v1114
    %v1567 = vsub.f32 %v1311, %v1114
    %v1568 = vsub.f32 %v1312, %v1114
    %v1569 = vsub.f32 %v1313, %v1114
    %v1570 = vsub.f32 %v1314, %v1114
    %v1571 = vsub.f32 %v1315, %v1114
    %v1572 = vsub.f32 %v1316, %v1114
    %v1573 = vsub.f32 %v1317, %v1114
    %v1574 = vsub.f32 %v1318, %v1114
    %v1575 = vsub.f32 %v1319, %v1114
    %v1576 = vsub.f32 %v1320, %v1114
    %v1577 = vsub.f32 %v1321, %v1114
    %v1578 = vsub.f32 %v1322, %v1114
    %v1579 = vsub.f32 %v1323, %v1114
    %v1580 = vsub.f32 %v1324, %v1114
    %v1581 = vsub.f32 %v1325, %v1114
    %v1582 = vsub.f32 %v1326, %v1114
    %v1583 = vsub.f32 %v1327, %v1114
    %v1584 = vsub.f32 %v1328, %v1114
    %v1585 = vsub.f32 %v1329, %v1114
    %v1586 = vsub.f32 %v1330, %v1114
    %v1587 = vsub.f32 %v1331, %v1114
    %v1588 = vsub.f32 %v1332, %v1114
    %v1589 = vsub.f32 %v1333, %v1114
    %v1590 = vsub.f32 %v1334, %v1114
    %v1591 = vsub.f32 %v1335, %v1114
    %v1592 = vsub.f32 %v1336, %v1114
    %v1593 = vsub.f32 %v1337, %v1114
    %v1594 = vsub.f32 %v1338, %v1114
    %v1595 = vsub.f32 %v1339, %v1114
    %v1596 = vsub.f32 %v1340, %v1114
    %v1597 = vsub.f32 %v1341, %v1114
    %v1598 = vsub.f32 %v1342, %v1114
    %v1599 = vsub.f32 %v1343, %v1114
    %v1600 = vsub.f32 %v1344, %v1114
    %v1601 = vsub.f32 %v1345, %v1114
    %v1602 = vsub.f32 %v1346, %v1114
    %v1603 = vsub.f32 %v1347, %v1114
    %v1604 = vsub.f32 %v1348, %v1114
    %v1605 = vsub.f32 %v1349, %v1114
    %v1606 = vsub.f32 %v1350, %v1114
    %v1607 = vsub.f32 %v1351, %v1114
    %v1608 = vsub.f32 %v1352, %v1114
    %v1609 = vsub.f32 %v1353, %v1114
    %v1610 = vsub.f32 %v1354, %v1114
    %v1611 = vsub.f32 %v1355, %v1114
    %v1612 = vsub.f32 %v1356, %v1114
    %v1613 = vsub.f32 %v1357, %v1114
    %v1614 = vsub.f32 %v1358, %v1114
    %v1615 = vsub.f32 %v1359, %v1114
    %v1616 = vsub.f32 %v1360, %v1114
    %v1617 = vsub.f32 %v1361, %v1114
    %v1618 = vsub.f32 %v1362, %v1114
    %v1619 = vsub.f32 %v1363, %v1114
    %v1620 = vsub.f32 %v1364, %v1114
    %v1621 = vsub.f32 %v1365, %v1114
    %v1622 = vsub.f32 %v1366, %v1114
    %v1623 = vsub.f32 %v1367, %v1114
    %v1624 = vsub.f32 %v1368, %v1114
    %v1625 = vsub.f32 %v1369, %v1114
    %v1626 = vsub.f32 %v1370, %v1114
    %v1627 = vstv %s1113
    %v1628 = vmul.f32 %v1371, %v1627
    %v1629 = vmul.f32 %v1372, %v1627
    %v1630 = vmul.f32 %v1373, %v1627
    %v1631 = vmul.f32 %v1374, %v1627
    %v1632 = vmul.f32 %v1375, %v1627
    %v1633 = vmul.f32 %v1376, %v1627
    %v1634 = vmul.f32 %v1377, %v1627
    %v1635 = vmul.f32 %v1378, %v1627
    %v1636 = vmul.f32 %v1379, %v1627
    %v1637 = vmul.f32 %v1380, %v1627
    %v1638 = vmul.f32 %v1381, %v1627
    %v1639 = vmul.f32 %v1382, %v1627
    %v1640 = vmul.f32 %v1383, %v1627
    %v1641 = vmul.f32 %v1384, %v1627
    %v1642 = vmul.f32 %v1385, %v1627
    %v1643 = vmul.f32 %v1386, %v1627
    %v1644 = vmul.f32 %v1387, %v1627
    %v1645 = vmul.f32 %v1388, %v1627
    %v1646 = vmul.f32 %v1389, %v1627
    %v1647 = vmul.f32 %v1390, %v1627
    %v1648 = vmul.f32 %v1391, %v1627
    %v1649 = vmul.f32 %v1392, %v1627
    %v1650 = vmul.f32 %v1393, %v1627
    %v1651 = vmul.f32 %v1394, %v1627
    %v1652 = vmul.f32 %v1395, %v1627
    %v1653 = vmul.f32 %v1396, %v1627
    %v1654 = vmul.f32 %v1397, %v1627
    %v1655 = vmul.f32 %v1398, %v1627
    %v1656 = vmul.f32 %v1399, %v1627
    %v1657 = vmul.f32 %v1400, %v1627
    %v1658 = vmul.f32 %v1401, %v1627
    %v1659 = vmul.f32 %v1402, %v1627
    %v1660 = vmul.f32 %v1403, %v1627
    %v1661 = vmul.f32 %v1404, %v1627
    %v1662 = vmul.f32 %v1405, %v1627
    %v1663 = vmul.f32 %v1406, %v1627
    %v1664 = vmul.f32 %v1407, %v1627
    %v1665 = vmul.f32 %v1408, %v1627
    %v1666 = vmul.f32 %v1409, %v1627
    %v1667 = vmul.f32 %v1410, %v1627
    %v1668 = vmul.f32 %v1411, %v1627
    %v1669 = vmul.f32 %v1412, %v1627
    %v1670 = vmul.f32 %v1413, %v1627
    %v1671 = vmul.f32 %v1414, %v1627
    %v1672 = vmul.f32 %v1415, %v1627
    %v1673 = vmul.f32 %v1416, %v1627
    %v1674 = vmul.f32 %v1417, %v1627
    %v1675 = vmul.f32 %v1418, %v1627
    %v1676 = vmul.f32 %v1419, %v1627
    %v1677 = vmul.f32 %v1420, %v1627
    %v1678 = vmul.f32 %v1421, %v1627
    %v1679 = vmul.f32 %v1422, %v1627
    %v1680 = vmul.f32 %v1423, %v1627
    %v1681 = vmul.f32 %v1424, %v1627
    %v1682 = vmul.f32 %v1425, %v1627
    %v1683 = vmul.f32 %v1426, %v1627
    %v1684 = vmul.f32 %v1427, %v1627
    %v1685 = vmul.f32 %v1428, %v1627
    %v1686 = vmul.f32 %v1429, %v1627
    %v1687 = vmul.f32 %v1430, %v1627
    %v1688 = vmul.f32 %v1431, %v1627
    %v1689 = vmul.f32 %v1432, %v1627
    %v1690 = vmul.f32 %v1433, %v1627
    %v1691 = vmul.f32 %v1434, %v1627
    %v1692 = vmul.f32 %v1435, %v1627
    %v1693 = vmul.f32 %v1436, %v1627
    %v1694 = vmul.f32 %v1437, %v1627
    %v1695 = vmul.f32 %v1438, %v1627
    %v1696 = vmul.f32 %v1439, %v1627
    %v1697 = vmul.f32 %v1440, %v1627
    %v1698 = vmul.f32 %v1441, %v1627
    %v1699 = vmul.f32 %v1442, %v1627
    %v1700 = vmul.f32 %v1443, %v1627
    %v1701 = vmul.f32 %v1444, %v1627
    %v1702 = vmul.f32 %v1445, %v1627
    %v1703 = vmul.f32 %v1446, %v1627
    %v1704 = vmul.f32 %v1447, %v1627
    %v1705 = vmul.f32 %v1448, %v1627
    %v1706 = vmul.f32 %v1449, %v1627
    %v1707 = vmul.f32 %v1450, %v1627
    %v1708 = vmul.f32 %v1451, %v1627
    %v1709 = vmul.f32 %v1452, %v1627
    %v1710 = vmul.f32 %v1453, %v1627
    %v1711 = vmul.f32 %v1454, %v1627
    %v1712 = vmul.f32 %v1455, %v1627
    %v1713 = vmul.f32 %v1456, %v1627
    %v1714 = vmul.f32 %v1457, %v1627
    %v1715 = vmul.f32 %v1458, %v1627
    %v1716 = vmul.f32 %v1459, %v1627
    %v1717 = vmul.f32 %v1460, %v1627
    %v1718 = vmul.f32 %v1461, %v1627
    %v1719 = vmul.f32 %v1462, %v1627
    %v1720 = vmul.f32 %v1463, %v1627
    %v1721 = vmul.f32 %v1464, %v1627
    %v1722 = vmul.f32 %v1465, %v1627
    %v1723 = vmul.f32 %v1466, %v1627
    %v1724 = vmul.f32 %v1467, %v1627
    %v1725 = vmul.f32 %v1468, %v1627
    %v1726 = vmul.f32 %v1469, %v1627
    %v1727 = vmul.f32 %v1470, %v1627
    %v1728 = vmul.f32 %v1471, %v1627
    %v1729 = vmul.f32 %v1472, %v1627
    %v1730 = vmul.f32 %v1473, %v1627
    %v1731 = vmul.f32 %v1474, %v1627
    %v1732 = vmul.f32 %v1475, %v1627
    %v1733 = vmul.f32 %v1476, %v1627
    %v1734 = vmul.f32 %v1477, %v1627
    %v1735 = vmul.f32 %v1478, %v1627
    %v1736 = vmul.f32 %v1479, %v1627
    %v1737 = vmul.f32 %v1480, %v1627
    %v1738 = vmul.f32 %v1481, %v1627
    %v1739 = vmul.f32 %v1482, %v1627
    %v1740 = vmul.f32 %v1483, %v1627
    %v1741 = vmul.f32 %v1484, %v1627
    %v1742 = vmul.f32 %v1485, %v1627
    %v1743 = vmul.f32 %v1486, %v1627
    %v1744 = vmul.f32 %v1487, %v1627
    %v1745 = vmul.f32 %v1488, %v1627
    %v1746 = vmul.f32 %v1489, %v1627
    %v1747 = vmul.f32 %v1490, %v1627
    %v1748 = vmul.f32 %v1491, %v1627
    %v1749 = vmul.f32 %v1492, %v1627
    %v1750 = vmul.f32 %v1493, %v1627
    %v1751 = vmul.f32 %v1494, %v1627
    %v1752 = vmul.f32 %v1495, %v1627
    %v1753 = vmul.f32 %v1496, %v1627
    %v1754 = vmul.f32 %v1497, %v1627
    %v1755 = vmul.f32 %v1498, %v1627
    %v1756 = vmul.f32 %v1499, %v1627
    %v1757 = vmul.f32 %v1500, %v1627
    %v1758 = vmul.f32 %v1501, %v1627
    %v1759 = vmul.f32 %v1502, %v1627
    %v1760 = vmul.f32 %v1503, %v1627
    %v1761 = vmul.f32 %v1504, %v1627
    %v1762 = vmul.f32 %v1505, %v1627
    %v1763 = vmul.f32 %v1506, %v1627
    %v1764 = vmul.f32 %v1507, %v1627
    %v1765 = vmul.f32 %v1508, %v1627
    %v1766 = vmul.f32 %v1509, %v1627
    %v1767 = vmul.f32 %v1510, %v1627
    %v1768 = vmul.f32 %v1511, %v1627
    %v1769 = vmul.f32 %v1512, %v1627
    %v1770 = vmul.f32 %v1513, %v1627
    %v1771 = vmul.f32 %v1514, %v1627
    %v1772 = vmul.f32 %v1515, %v1627
    %v1773 = vmul.f32 %v1516, %v1627
    %v1774 = vmul.f32 %v1517, %v1627
    %v1775 = vmul.f32 %v1518, %v1627
    %v1776 = vmul.f32 %v1519, %v1627
    %v1777 = vmul.f32 %v1520, %v1627
    %v1778 = vmul.f32 %v1521, %v1627
    %v1779 = vmul.f32 %v1522, %v1627
    %v1780 = vmul.f32 %v1523, %v1627
    %v1781 = vmul.f32 %v1524, %v1627
    %v1782 = vmul.f32 %v1525, %v1627
    %v1783 = vmul.f32 %v1526, %v1627
    %v1784 = vmul.f32 %v1527, %v1627
    %v1785 = vmul.f32 %v1528, %v1627
    %v1786 = vmul.f32 %v1529, %v1627
    %v1787 = vmul.f32 %v1530, %v1627
    %v1788 = vmul.f32 %v1531, %v1627
    %v1789 = vmul.f32 %v1532, %v1627
    %v1790 = vmul.f32 %v1533, %v1627
    %v1791 = vmul.f32 %v1534, %v1627
    %v1792 = vmul.f32 %v1535, %v1627
    %v1793 = vmul.f32 %v1536, %v1627
    %v1794 = vmul.f32 %v1537, %v1627
    %v1795 = vmul.f32 %v1538, %v1627
    %v1796 = vmul.f32 %v1539, %v1627
    %v1797 = vmul.f32 %v1540, %v1627
    %v1798 = vmul.f32 %v1541, %v1627
    %v1799 = vmul.f32 %v1542, %v1627
    %v1800 = vmul.f32 %v1543, %v1627
    %v1801 = vmul.f32 %v1544, %v1627
    %v1802 = vmul.f32 %v1545, %v1627
    %v1803 = vmul.f32 %v1546, %v1627
    %v1804 = vmul.f32 %v1547, %v1627
    %v1805 = vmul.f32 %v1548, %v1627
    %v1806 = vmul.f32 %v1549, %v1627
    %v1807 = vmul.f32 %v1550, %v1627
    %v1808 = vmul.f32 %v1551, %v1627
    %v1809 = vmul.f32 %v1552, %v1627
    %v1810 = vmul.f32 %v1553, %v1627
    %v1811 = vmul.f32 %v1554, %v1627
    %v1812 = vmul.f32 %v1555, %v1627
    %v1813 = vmul.f32 %v1556, %v1627
    %v1814 = vmul.f32 %v1557, %v1627
    %v1815 = vmul.f32 %v1558, %v1627
    %v1816 = vmul.f32 %v1559, %v1627
    %v1817 = vmul.f32 %v1560, %v1627
    %v1818 = vmul.f32 %v1561, %v1627
    %v1819 = vmul.f32 %v1562, %v1627
    %v1820 = vmul.f32 %v1563, %v1627
    %v1821 = vmul.f32 %v1564, %v1627
    %v1822 = vmul.f32 %v1565, %v1627
    %v1823 = vmul.f32 %v1566, %v1627
    %v1824 = vmul.f32 %v1567, %v1627
    %v1825 = vmul.f32 %v1568, %v1627
    %v1826 = vmul.f32 %v1569, %v1627
    %v1827 = vmul.f32 %v1570, %v1627
    %v1828 = vmul.f32 %v1571, %v1627
    %v1829 = vmul.f32 %v1572, %v1627
    %v1830 = vmul.f32 %v1573, %v1627
    %v1831 = vmul.f32 %v1574, %v1627
    %v1832 = vmul.f32 %v1575, %v1627
    %v1833 = vmul.f32 %v1576, %v1627
    %v1834 = vmul.f32 %v1577, %v1627
    %v1835 = vmul.f32 %v1578, %v1627
    %v1836 = vmul.f32 %v1579, %v1627
    %v1837 = vmul.f32 %v1580, %v1627
    %v1838 = vmul.f32 %v1581, %v1627
    %v1839 = vmul.f32 %v1582, %v1627
    %v1840 = vmul.f32 %v1583, %v1627
    %v1841 = vmul.f32 %v1584, %v1627
    %v1842 = vmul.f32 %v1585, %v1627
    %v1843 = vmul.f32 %v1586, %v1627
    %v1844 = vmul.f32 %v1587, %v1627
    %v1845 = vmul.f32 %v1588, %v1627
    %v1846 = vmul.f32 %v1589, %v1627
    %v1847 = vmul.f32 %v1590, %v1627
    %v1848 = vmul.f32 %v1591, %v1627
    %v1849 = vmul.f32 %v1592, %v1627
    %v1850 = vmul.f32 %v1593, %v1627
    %v1851 = vmul.f32 %v1594, %v1627
    %v1852 = vmul.f32 %v1595, %v1627
    %v1853 = vmul.f32 %v1596, %v1627
    %v1854 = vmul.f32 %v1597, %v1627
    %v1855 = vmul.f32 %v1598, %v1627
    %v1856 = vmul.f32 %v1599, %v1627
    %v1857 = vmul.f32 %v1600, %v1627
    %v1858 = vmul.f32 %v1601, %v1627
    %v1859 = vmul.f32 %v1602, %v1627
    %v1860 = vmul.f32 %v1603, %v1627
    %v1861 = vmul.f32 %v1604, %v1627
    %v1862 = vmul.f32 %v1605, %v1627
    %v1863 = vmul.f32 %v1606, %v1627
    %v1864 = vmul.f32 %v1607, %v1627
    %v1865 = vmul.f32 %v1608, %v1627
    %v1866 = vmul.f32 %v1609, %v1627
    %v1867 = vmul.f32 %v1610, %v1627
    %v1868 = vmul.f32 %v1611, %v1627
    %v1869 = vmul.f32 %v1612, %v1627
    %v1870 = vmul.f32 %v1613, %v1627
    %v1871 = vmul.f32 %v1614, %v1627
    %v1872 = vmul.f32 %v1615, %v1627
    %v1873 = vmul.f32 %v1616, %v1627
    %v1874 = vmul.f32 %v1617, %v1627
    %v1875 = vmul.f32 %v1618, %v1627
    %v1876 = vmul.f32 %v1619, %v1627
    %v1877 = vmul.f32 %v1620, %v1627
    %v1878 = vmul.f32 %v1621, %v1627
    %v1879 = vmul.f32 %v1622, %v1627
    %v1880 = vmul.f32 %v1623, %v1627
    %v1881 = vmul.f32 %v1624, %v1627
    %v1882 = vmul.f32 %v1625, %v1627
    %v1883 = vmul.f32 %v1626, %v1627
    %v1884 = vpack.c.bf16 %v1636, %v1628
    %v1885 = vpack.c.bf16 %v1637, %v1629
    %v1886 = vpack.c.bf16 %v1638, %v1630
    %v1887 = vpack.c.bf16 %v1639, %v1631
    %v1888 = vpack.c.bf16 %v1640, %v1632
    %v1889 = vpack.c.bf16 %v1641, %v1633
    %v1890 = vpack.c.bf16 %v1642, %v1634
    %v1891 = vpack.c.bf16 %v1643, %v1635
    %v1892 = vpack.c.bf16 %v1652, %v1644
    %v1893 = vpack.c.bf16 %v1653, %v1645
    %v1894 = vpack.c.bf16 %v1654, %v1646
    %v1895 = vpack.c.bf16 %v1655, %v1647
    %v1896 = vpack.c.bf16 %v1656, %v1648
    %v1897 = vpack.c.bf16 %v1657, %v1649
    %v1898 = vpack.c.bf16 %v1658, %v1650
    %v1899 = vpack.c.bf16 %v1659, %v1651
    %v1900 = vpack.c.bf16 %v1668, %v1660
    %v1901 = vpack.c.bf16 %v1669, %v1661
    %v1902 = vpack.c.bf16 %v1670, %v1662
    %v1903 = vpack.c.bf16 %v1671, %v1663
    %v1904 = vpack.c.bf16 %v1672, %v1664
    %v1905 = vpack.c.bf16 %v1673, %v1665
    %v1906 = vpack.c.bf16 %v1674, %v1666
    %v1907 = vpack.c.bf16 %v1675, %v1667
    %v1908 = vpack.c.bf16 %v1684, %v1676
    %v1909 = vpack.c.bf16 %v1685, %v1677
    %v1910 = vpack.c.bf16 %v1686, %v1678
    %v1911 = vpack.c.bf16 %v1687, %v1679
    %v1912 = vpack.c.bf16 %v1688, %v1680
    %v1913 = vpack.c.bf16 %v1689, %v1681
    %v1914 = vpack.c.bf16 %v1690, %v1682
    %v1915 = vpack.c.bf16 %v1691, %v1683
    %v1916 = vpack.c.bf16 %v1700, %v1692
    %v1917 = vpack.c.bf16 %v1701, %v1693
    %v1918 = vpack.c.bf16 %v1702, %v1694
    %v1919 = vpack.c.bf16 %v1703, %v1695
    %v1920 = vpack.c.bf16 %v1704, %v1696
    %v1921 = vpack.c.bf16 %v1705, %v1697
    %v1922 = vpack.c.bf16 %v1706, %v1698
    %v1923 = vpack.c.bf16 %v1707, %v1699
    %v1924 = vpack.c.bf16 %v1716, %v1708
    %v1925 = vpack.c.bf16 %v1717, %v1709
    %v1926 = vpack.c.bf16 %v1718, %v1710
    %v1927 = vpack.c.bf16 %v1719, %v1711
    %v1928 = vpack.c.bf16 %v1720, %v1712
    %v1929 = vpack.c.bf16 %v1721, %v1713
    %v1930 = vpack.c.bf16 %v1722, %v1714
    %v1931 = vpack.c.bf16 %v1723, %v1715
    %v1932 = vpack.c.bf16 %v1732, %v1724
    %v1933 = vpack.c.bf16 %v1733, %v1725
    %v1934 = vpack.c.bf16 %v1734, %v1726
    %v1935 = vpack.c.bf16 %v1735, %v1727
    %v1936 = vpack.c.bf16 %v1736, %v1728
    %v1937 = vpack.c.bf16 %v1737, %v1729
    %v1938 = vpack.c.bf16 %v1738, %v1730
    %v1939 = vpack.c.bf16 %v1739, %v1731
    %v1940 = vpack.c.bf16 %v1748, %v1740
    %v1941 = vpack.c.bf16 %v1749, %v1741
    %v1942 = vpack.c.bf16 %v1750, %v1742
    %v1943 = vpack.c.bf16 %v1751, %v1743
    %v1944 = vpack.c.bf16 %v1752, %v1744
    %v1945 = vpack.c.bf16 %v1753, %v1745
    %v1946 = vpack.c.bf16 %v1754, %v1746
    %v1947 = vpack.c.bf16 %v1755, %v1747
    %v1948 = vpack.c.bf16 %v1764, %v1756
    %v1949 = vpack.c.bf16 %v1765, %v1757
    %v1950 = vpack.c.bf16 %v1766, %v1758
    %v1951 = vpack.c.bf16 %v1767, %v1759
    %v1952 = vpack.c.bf16 %v1768, %v1760
    %v1953 = vpack.c.bf16 %v1769, %v1761
    %v1954 = vpack.c.bf16 %v1770, %v1762
    %v1955 = vpack.c.bf16 %v1771, %v1763
    %v1956 = vpack.c.bf16 %v1780, %v1772
    %v1957 = vpack.c.bf16 %v1781, %v1773
    %v1958 = vpack.c.bf16 %v1782, %v1774
    %v1959 = vpack.c.bf16 %v1783, %v1775
    %v1960 = vpack.c.bf16 %v1784, %v1776
    %v1961 = vpack.c.bf16 %v1785, %v1777
    %v1962 = vpack.c.bf16 %v1786, %v1778
    %v1963 = vpack.c.bf16 %v1787, %v1779
    %v1964 = vpack.c.bf16 %v1796, %v1788
    %v1965 = vpack.c.bf16 %v1797, %v1789
    %v1966 = vpack.c.bf16 %v1798, %v1790
    %v1967 = vpack.c.bf16 %v1799, %v1791
    %v1968 = vpack.c.bf16 %v1800, %v1792
    %v1969 = vpack.c.bf16 %v1801, %v1793
    %v1970 = vpack.c.bf16 %v1802, %v1794
    %v1971 = vpack.c.bf16 %v1803, %v1795
    %v1972 = vpack.c.bf16 %v1812, %v1804
    %v1973 = vpack.c.bf16 %v1813, %v1805
    %v1974 = vpack.c.bf16 %v1814, %v1806
    %v1975 = vpack.c.bf16 %v1815, %v1807
    %v1976 = vpack.c.bf16 %v1816, %v1808
    %v1977 = vpack.c.bf16 %v1817, %v1809
    %v1978 = vpack.c.bf16 %v1818, %v1810
    %v1979 = vpack.c.bf16 %v1819, %v1811
    %v1980 = vpack.c.bf16 %v1828, %v1820
    %v1981 = vpack.c.bf16 %v1829, %v1821
    %v1982 = vpack.c.bf16 %v1830, %v1822
    %v1983 = vpack.c.bf16 %v1831, %v1823
    %v1984 = vpack.c.bf16 %v1832, %v1824
    %v1985 = vpack.c.bf16 %v1833, %v1825
    %v1986 = vpack.c.bf16 %v1834, %v1826
    %v1987 = vpack.c.bf16 %v1835, %v1827
    %v1988 = vpack.c.bf16 %v1844, %v1836
    %v1989 = vpack.c.bf16 %v1845, %v1837
    %v1990 = vpack.c.bf16 %v1846, %v1838
    %v1991 = vpack.c.bf16 %v1847, %v1839
    %v1992 = vpack.c.bf16 %v1848, %v1840
    %v1993 = vpack.c.bf16 %v1849, %v1841
    %v1994 = vpack.c.bf16 %v1850, %v1842
    %v1995 = vpack.c.bf16 %v1851, %v1843
    %v1996 = vpack.c.bf16 %v1860, %v1852
    %v1997 = vpack.c.bf16 %v1861, %v1853
    %v1998 = vpack.c.bf16 %v1862, %v1854
    %v1999 = vpack.c.bf16 %v1863, %v1855
    %v2000 = vpack.c.bf16 %v1864, %v1856
    %v2001 = vpack.c.bf16 %v1865, %v1857
    %v2002 = vpack.c.bf16 %v1866, %v1858
    %v2003 = vpack.c.bf16 %v1867, %v1859
    %v2004 = vpack.c.bf16 %v1876, %v1868
    %v2005 = vpack.c.bf16 %v1877, %v1869
    %v2006 = vpack.c.bf16 %v1878, %v1870
    %v2007 = vpack.c.bf16 %v1879, %v1871
    %v2008 = vpack.c.bf16 %v1880, %v1872
    %v2009 = vpack.c.bf16 %v1881, %v1873
    %v2010 = vpack.c.bf16 %v1882, %v1874
    %v2011 = vpack.c.bf16 %v1883, %v1875
    %v2012 = vld [vmem:[#allocation5] sm:$0xf]
    %v2013 = vld [vmem:[#allocation5 + $0x4] sm:$0xf]
    %v2014 = vld [vmem:[#allocation5 + $0x8] sm:$0xf]
    %v2015 = vld [vmem:[#allocation5 + $0xc] sm:$0xf]
    %v2016 = vld [vmem:[#allocation5 + $0x10] sm:$0xf]
    %v2017 = vld [vmem:[#allocation5 + $0x14] sm:$0xf]
    %v2018 = vld [vmem:[#allocation5 + $0x18] sm:$0xf]
    %v2019 = vld [vmem:[#allocation5 + $0x1c] sm:$0xf]
    %v2020 = vld [vmem:[#allocation5 + $0x20] sm:$0xf]
    %v2021 = vld [vmem:[#allocation5 + $0x24] sm:$0xf]
    %v2022 = vld [vmem:[#allocation5 + $0x28] sm:$0xf]
    %v2023 = vld [vmem:[#allocation5 + $0x2c] sm:$0xf]
    %v2024 = vld [vmem:[#allocation5 + $0x30] sm:$0xf]
    %v2025 = vld [vmem:[#allocation5 + $0x34] sm:$0xf]
    %v2026 = vld [vmem:[#allocation5 + $0x38] sm:$0xf]
    %v2027 = vld [vmem:[#allocation5 + $0x3c] sm:$0xf]
    %v2028 = vld [vmem:[#allocation5 + $0x40] sm:$0xf]
    %v2029 = vld [vmem:[#allocation5 + $0x44] sm:$0xf]
    %v2030 = vld [vmem:[#allocation5 + $0x48] sm:$0xf]
    %v2031 = vld [vmem:[#allocation5 + $0x4c] sm:$0xf]
    %v2032 = vld [vmem:[#allocation5 + $0x50] sm:$0xf]
    %v2033 = vld [vmem:[#allocation5 + $0x54] sm:$0xf]
    %v2034 = vld [vmem:[#allocation5 + $0x58] sm:$0xf]
    %v2035 = vld [vmem:[#allocation5 + $0x5c] sm:$0xf]
    %v2036 = vld [vmem:[#allocation5 + $0x60] sm:$0xf]
    %v2037 = vld [vmem:[#allocation5 + $0x64] sm:$0xf]
    %v2038 = vld [vmem:[#allocation5 + $0x68] sm:$0xf]
    %v2039 = vld [vmem:[#allocation5 + $0x6c] sm:$0xf]
    %v2040 = vld [vmem:[#allocation5 + $0x70] sm:$0xf]
    %v2041 = vld [vmem:[#allocation5 + $0x74] sm:$0xf]
    %v2042 = vld [vmem:[#allocation5 + $0x78] sm:$0xf]
    %v2043 = vld [vmem:[#allocation5 + $0x7c] sm:$0xf]
    %v2044 = vld [vmem:[#allocation5 + $0x80] sm:$0xf]
    %v2045 = vld [vmem:[#allocation5 + $0x84] sm:$0xf]
    %v2046 = vld [vmem:[#allocation5 + $0x88] sm:$0xf]
    %v2047 = vld [vmem:[#allocation5 + $0x8c] sm:$0xf]
    %v2048 = vld [vmem:[#allocation5 + $0x90] sm:$0xf]
    %v2049 = vld [vmem:[#allocation5 + $0x94] sm:$0xf]
    %v2050 = vld [vmem:[#allocation5 + $0x98] sm:$0xf]
    %v2051 = vld [vmem:[#allocation5 + $0x9c] sm:$0xf]
    %v2052 = vld [vmem:[#allocation5 + $0xa0] sm:$0xf]
    %v2053 = vld [vmem:[#allocation5 + $0xa4] sm:$0xf]
    %v2054 = vld [vmem:[#allocation5 + $0xa8] sm:$0xf]
    %v2055 = vld [vmem:[#allocation5 + $0xac] sm:$0xf]
    %v2056 = vld [vmem:[#allocation5 + $0xb0] sm:$0xf]
    %v2057 = vld [vmem:[#allocation5 + $0xb4] sm:$0xf]
    %v2058 = vld [vmem:[#allocation5 + $0xb8] sm:$0xf]
    %v2059 = vld [vmem:[#allocation5 + $0xbc] sm:$0xf]
    %v2060 = vld [vmem:[#allocation5 + $0xc0] sm:$0xf]
    %v2061 = vld [vmem:[#allocation5 + $0xc4] sm:$0xf]
    %v2062 = vld [vmem:[#allocation5 + $0xc8] sm:$0xf]
    %v2063 = vld [vmem:[#allocation5 + $0xcc] sm:$0xf]
    %v2064 = vld [vmem:[#allocation5 + $0xd0] sm:$0xf]
    %v2065 = vld [vmem:[#allocation5 + $0xd4] sm:$0xf]
    %v2066 = vld [vmem:[#allocation5 + $0xd8] sm:$0xf]
    %v2067 = vld [vmem:[#allocation5 + $0xdc] sm:$0xf]
    %v2068 = vld [vmem:[#allocation5 + $0xe0] sm:$0xf]
    %v2069 = vld [vmem:[#allocation5 + $0xe4] sm:$0xf]
    %v2070 = vld [vmem:[#allocation5 + $0xe8] sm:$0xf]
    %v2071 = vld [vmem:[#allocation5 + $0xec] sm:$0xf]
    %v2072 = vld [vmem:[#allocation5 + $0xf0] sm:$0xf]
    %v2073 = vld [vmem:[#allocation5 + $0xf4] sm:$0xf]
    %v2074 = vld [vmem:[#allocation5 + $0xf8] sm:$0xf]
    %v2075 = vld [vmem:[#allocation5 + $0xfc] sm:$0xf]
    %v2076 = vld [vmem:[#allocation5 + $0x100] sm:$0xf]
    %v2077 = vld [vmem:[#allocation5 + $0x104] sm:$0xf]
    %v2078 = vld [vmem:[#allocation5 + $0x108] sm:$0xf]
    %v2079 = vld [vmem:[#allocation5 + $0x10c] sm:$0xf]
    %v2080 = vld [vmem:[#allocation5 + $0x110] sm:$0xf]
    %v2081 = vld [vmem:[#allocation5 + $0x114] sm:$0xf]
    %v2082 = vld [vmem:[#allocation5 + $0x118] sm:$0xf]
    %v2083 = vld [vmem:[#allocation5 + $0x11c] sm:$0xf]
    %v2084 = vld [vmem:[#allocation5 + $0x120] sm:$0xf]
    %v2085 = vld [vmem:[#allocation5 + $0x124] sm:$0xf]
    %v2086 = vld [vmem:[#allocation5 + $0x128] sm:$0xf]
    %v2087 = vld [vmem:[#allocation5 + $0x12c] sm:$0xf]
    %v2088 = vld [vmem:[#allocation5 + $0x130] sm:$0xf]
    %v2089 = vld [vmem:[#allocation5 + $0x134] sm:$0xf]
    %v2090 = vld [vmem:[#allocation5 + $0x138] sm:$0xf]
    %v2091 = vld [vmem:[#allocation5 + $0x13c] sm:$0xf]
    %v2092 = vld [vmem:[#allocation5 + $0x140] sm:$0xf]
    %v2093 = vld [vmem:[#allocation5 + $0x144] sm:$0xf]
    %v2094 = vld [vmem:[#allocation5 + $0x148] sm:$0xf]
    %v2095 = vld [vmem:[#allocation5 + $0x14c] sm:$0xf]
    %v2096 = vld [vmem:[#allocation5 + $0x150] sm:$0xf]
    %v2097 = vld [vmem:[#allocation5 + $0x154] sm:$0xf]
    %v2098 = vld [vmem:[#allocation5 + $0x158] sm:$0xf]
    %v2099 = vld [vmem:[#allocation5 + $0x15c] sm:$0xf]
    %v2100 = vld [vmem:[#allocation5 + $0x160] sm:$0xf]
    %v2101 = vld [vmem:[#allocation5 + $0x164] sm:$0xf]
    %v2102 = vld [vmem:[#allocation5 + $0x168] sm:$0xf]
    %v2103 = vld [vmem:[#allocation5 + $0x16c] sm:$0xf]
    %v2104 = vld [vmem:[#allocation5 + $0x170] sm:$0xf]
    %v2105 = vld [vmem:[#allocation5 + $0x174] sm:$0xf]
    %v2106 = vld [vmem:[#allocation5 + $0x178] sm:$0xf]
    %v2107 = vld [vmem:[#allocation5 + $0x17c] sm:$0xf]
    %v2108 = vld [vmem:[#allocation5 + $0x180] sm:$0xf]
    %v2109 = vld [vmem:[#allocation5 + $0x184] sm:$0xf]
    %v2110 = vld [vmem:[#allocation5 + $0x188] sm:$0xf]
    %v2111 = vld [vmem:[#allocation5 + $0x18c] sm:$0xf]
    %v2112 = vld [vmem:[#allocation5 + $0x190] sm:$0xf]
    %v2113 = vld [vmem:[#allocation5 + $0x194] sm:$0xf]
    %v2114 = vld [vmem:[#allocation5 + $0x198] sm:$0xf]
    %v2115 = vld [vmem:[#allocation5 + $0x19c] sm:$0xf]
    %v2116 = vld [vmem:[#allocation5 + $0x1a0] sm:$0xf]
    %v2117 = vld [vmem:[#allocation5 + $0x1a4] sm:$0xf]
    %v2118 = vld [vmem:[#allocation5 + $0x1a8] sm:$0xf]
    %v2119 = vld [vmem:[#allocation5 + $0x1ac] sm:$0xf]
    %v2120 = vld [vmem:[#allocation5 + $0x1b0] sm:$0xf]
    %v2121 = vld [vmem:[#allocation5 + $0x1b4] sm:$0xf]
    %v2122 = vld [vmem:[#allocation5 + $0x1b8] sm:$0xf]
    %v2123 = vld [vmem:[#allocation5 + $0x1bc] sm:$0xf]
    %v2124 = vld [vmem:[#allocation5 + $0x1c0] sm:$0xf]
    %v2125 = vld [vmem:[#allocation5 + $0x1c4] sm:$0xf]
    %v2126 = vld [vmem:[#allocation5 + $0x1c8] sm:$0xf]
    %v2127 = vld [vmem:[#allocation5 + $0x1cc] sm:$0xf]
    %v2128 = vld [vmem:[#allocation5 + $0x1d0] sm:$0xf]
    %v2129 = vld [vmem:[#allocation5 + $0x1d4] sm:$0xf]
    %v2130 = vld [vmem:[#allocation5 + $0x1d8] sm:$0xf]
    %v2131 = vld [vmem:[#allocation5 + $0x1dc] sm:$0xf]
    %v2132 = vld [vmem:[#allocation5 + $0x1e0] sm:$0xf]
    %v2133 = vld [vmem:[#allocation5 + $0x1e4] sm:$0xf]
    %v2134 = vld [vmem:[#allocation5 + $0x1e8] sm:$0xf]
    %v2135 = vld [vmem:[#allocation5 + $0x1ec] sm:$0xf]
    %v2136 = vld [vmem:[#allocation5 + $0x1f0] sm:$0xf]
    %v2137 = vld [vmem:[#allocation5 + $0x1f4] sm:$0xf]
    %v2138 = vld [vmem:[#allocation5 + $0x1f8] sm:$0xf]
    %v2139 = vld [vmem:[#allocation5 + $0x1fc] sm:$0xf]
    %v2140 = vld [vmem:[%s2] sm:$0x1]
    %v2142 = vlaneseq
    %v2143 = vshrl.u32 %v2142, 7
    %v2144 = vsub.s32 0, %v2143
    %v2145 = vrot.slane %v2140, %v2144
    %v2275 = vunpack.c.l.b16 %v2012
    %v2276 = vunpack.c.l.b16 %v2013
    %v2277 = vunpack.c.l.b16 %v2014
    %v2278 = vunpack.c.l.b16 %v2015
    %v2279 = vunpack.c.l.b16 %v2016
    %v2280 = vunpack.c.l.b16 %v2017
    %v2281 = vunpack.c.l.b16 %v2018
    %v2282 = vunpack.c.l.b16 %v2019
    %v2283 = vunpack.c.l.b16 %v2020
    %v2284 = vunpack.c.l.b16 %v2021
    %v2285 = vunpack.c.l.b16 %v2022
    %v2286 = vunpack.c.l.b16 %v2023
    %v2287 = vunpack.c.l.b16 %v2024
    %v2288 = vunpack.c.l.b16 %v2025
    %v2289 = vunpack.c.l.b16 %v2026
    %v2290 = vunpack.c.l.b16 %v2027
    %v2291 = vunpack.c.l.b16 %v2028
    %v2292 = vunpack.c.l.b16 %v2029
    %v2293 = vunpack.c.l.b16 %v2030
    %v2294 = vunpack.c.l.b16 %v2031
    %v2295 = vunpack.c.l.b16 %v2032
    %v2296 = vunpack.c.l.b16 %v2033
    %v2297 = vunpack.c.l.b16 %v2034
    %v2298 = vunpack.c.l.b16 %v2035
    %v2299 = vunpack.c.l.b16 %v2036
    %v2300 = vunpack.c.l.b16 %v2037
    %v2301 = vunpack.c.l.b16 %v2038
    %v2302 = vunpack.c.l.b16 %v2039
    %v2303 = vunpack.c.l.b16 %v2040
    %v2304 = vunpack.c.l.b16 %v2041
    %v2305 = vunpack.c.l.b16 %v2042
    %v2306 = vunpack.c.l.b16 %v2043
    %v2307 = vunpack.c.l.b16 %v2044
    %v2308 = vunpack.c.l.b16 %v2045
    %v2309 = vunpack.c.l.b16 %v2046
    %v2310 = vunpack.c.l.b16 %v2047
    %v2311 = vunpack.c.l.b16 %v2048
    %v2312 = vunpack.c.l.b16 %v2049
    %v2313 = vunpack.c.l.b16 %v2050
    %v2314 = vunpack.c.l.b16 %v2051
    %v2315 = vunpack.c.l.b16 %v2052
    %v2316 = vunpack.c.l.b16 %v2053
    %v2317 = vunpack.c.l.b16 %v2054
    %v2318 = vunpack.c.l.b16 %v2055
    %v2319 = vunpack.c.l.b16 %v2056
    %v2320 = vunpack.c.l.b16 %v2057
    %v2321 = vunpack.c.l.b16 %v2058
    %v2322 = vunpack.c.l.b16 %v2059
    %v2323 = vunpack.c.l.b16 %v2060
    %v2324 = vunpack.c.l.b16 %v2061
    %v2325 = vunpack.c.l.b16 %v2062
    %v2326 = vunpack.c.l.b16 %v2063
    %v2327 = vunpack.c.l.b16 %v2064
    %v2328 = vunpack.c.l.b16 %v2065
    %v2329 = vunpack.c.l.b16 %v2066
    %v2330 = vunpack.c.l.b16 %v2067
    %v2331 = vunpack.c.l.b16 %v2068
    %v2332 = vunpack.c.l.b16 %v2069
    %v2333 = vunpack.c.l.b16 %v2070
    %v2334 = vunpack.c.l.b16 %v2071
    %v2335 = vunpack.c.l.b16 %v2072
    %v2336 = vunpack.c.l.b16 %v2073
    %v2337 = vunpack.c.l.b16 %v2074
    %v2338 = vunpack.c.l.b16 %v2075
    %v2339 = vunpack.c.l.b16 %v2076
    %v2340 = vunpack.c.l.b16 %v2077
    %v2341 = vunpack.c.l.b16 %v2078
    %v2342 = vunpack.c.l.b16 %v2079
    %v2343 = vunpack.c.l.b16 %v2080
    %v2344 = vunpack.c.l.b16 %v2081
    %v2345 = vunpack.c.l.b16 %v2082
    %v2346 = vunpack.c.l.b16 %v2083
    %v2347 = vunpack.c.l.b16 %v2084
    %v2348 = vunpack.c.l.b16 %v2085
    %v2349 = vunpack.c.l.b16 %v2086
    %v2350 = vunpack.c.l.b16 %v2087
    %v2351 = vunpack.c.l.b16 %v2088
    %v2352 = vunpack.c.l.b16 %v2089
    %v2353 = vunpack.c.l.b16 %v2090
    %v2354 = vunpack.c.l.b16 %v2091
    %v2355 = vunpack.c.l.b16 %v2092
    %v2356 = vunpack.c.l.b16 %v2093
    %v2357 = vunpack.c.l.b16 %v2094
    %v2358 = vunpack.c.l.b16 %v2095
    %v2359 = vunpack.c.l.b16 %v2096
    %v2360 = vunpack.c.l.b16 %v2097
    %v2361 = vunpack.c.l.b16 %v2098
    %v2362 = vunpack.c.l.b16 %v2099
    %v2363 = vunpack.c.l.b16 %v2100
    %v2364 = vunpack.c.l.b16 %v2101
    %v2365 = vunpack.c.l.b16 %v2102
    %v2366 = vunpack.c.l.b16 %v2103
    %v2367 = vunpack.c.l.b16 %v2104
    %v2368 = vunpack.c.l.b16 %v2105
    %v2369 = vunpack.c.l.b16 %v2106
    %v2370 = vunpack.c.l.b16 %v2107
    %v2371 = vunpack.c.l.b16 %v2108
    %v2372 = vunpack.c.l.b16 %v2109
    %v2373 = vunpack.c.l.b16 %v2110
    %v2374 = vunpack.c.l.b16 %v2111
    %v2375 = vunpack.c.l.b16 %v2112
    %v2376 = vunpack.c.l.b16 %v2113
    %v2377 = vunpack.c.l.b16 %v2114
    %v2378 = vunpack.c.l.b16 %v2115
    %v2379 = vunpack.c.l.b16 %v2116
    %v2380 = vunpack.c.l.b16 %v2117
    %v2381 = vunpack.c.l.b16 %v2118
    %v2382 = vunpack.c.l.b16 %v2119
    %v2383 = vunpack.c.l.b16 %v2120
    %v2384 = vunpack.c.l.b16 %v2121
    %v2385 = vunpack.c.l.b16 %v2122
    %v2386 = vunpack.c.l.b16 %v2123
    %v2387 = vunpack.c.l.b16 %v2124
    %v2388 = vunpack.c.l.b16 %v2125
    %v2389 = vunpack.c.l.b16 %v2126
    %v2390 = vunpack.c.l.b16 %v2127
    %v2391 = vunpack.c.l.b16 %v2128
    %v2392 = vunpack.c.l.b16 %v2129
    %v2393 = vunpack.c.l.b16 %v2130
    %v2394 = vunpack.c.l.b16 %v2131
    %v2395 = vunpack.c.l.b16 %v2132
    %v2396 = vunpack.c.l.b16 %v2133
    %v2397 = vunpack.c.l.b16 %v2134
    %v2398 = vunpack.c.l.b16 %v2135
    %v2399 = vunpack.c.l.b16 %v2136
    %v2400 = vunpack.c.l.b16 %v2137
    %v2401 = vunpack.c.l.b16 %v2138
    %v2402 = vunpack.c.l.b16 %v2139
    %v2403 = vpack.c.b16 %v2276, %v2275
    %v2404 = vpack.c.b16 %v2278, %v2277
    %v2405 = vpack.c.b16 %v2280, %v2279
    %v2406 = vpack.c.b16 %v2282, %v2281
    %v2407 = vpack.c.b16 %v2284, %v2283
    %v2408 = vpack.c.b16 %v2286, %v2285
    %v2409 = vpack.c.b16 %v2288, %v2287
    %v2410 = vpack.c.b16 %v2290, %v2289
    %v2411 = vpack.c.b16 %v2292, %v2291
    %v2412 = vpack.c.b16 %v2294, %v2293
    %v2413 = vpack.c.b16 %v2296, %v2295
    %v2414 = vpack.c.b16 %v2298, %v2297
    %v2415 = vpack.c.b16 %v2300, %v2299
    %v2416 = vpack.c.b16 %v2302, %v2301
    %v2417 = vpack.c.b16 %v2304, %v2303
    %v2418 = vpack.c.b16 %v2306, %v2305
    %v2419 = vpack.c.b16 %v2308, %v2307
    %v2420 = vpack.c.b16 %v2310, %v2309
    %v2421 = vpack.c.b16 %v2312, %v2311
    %v2422 = vpack.c.b16 %v2314, %v2313
    %v2423 = vpack.c.b16 %v2316, %v2315
    %v2424 = vpack.c.b16 %v2318, %v2317
    %v2425 = vpack.c.b16 %v2320, %v2319
    %v2426 = vpack.c.b16 %v2322, %v2321
    %v2427 = vpack.c.b16 %v2324, %v2323
    %v2428 = vpack.c.b16 %v2326, %v2325
    %v2429 = vpack.c.b16 %v2328, %v2327
    %v2430 = vpack.c.b16 %v2330, %v2329
    %v2431 = vpack.c.b16 %v2332, %v2331
    %v2432 = vpack.c.b16 %v2334, %v2333
    %v2433 = vpack.c.b16 %v2336, %v2335
    %v2434 = vpack.c.b16 %v2338, %v2337
    %v2435 = vpack.c.b16 %v2340, %v2339
    %v2436 = vpack.c.b16 %v2342, %v2341
    %v2437 = vpack.c.b16 %v2344, %v2343
    %v2438 = vpack.c.b16 %v2346, %v2345
    %v2439 = vpack.c.b16 %v2348, %v2347
    %v2440 = vpack.c.b16 %v2350, %v2349
    %v2441 = vpack.c.b16 %v2352, %v2351
    %v2442 = vpack.c.b16 %v2354, %v2353
    %v2443 = vpack.c.b16 %v2356, %v2355
    %v2444 = vpack.c.b16 %v2358, %v2357
    %v2445 = vpack.c.b16 %v2360, %v2359
    %v2446 = vpack.c.b16 %v2362, %v2361
    %v2447 = vpack.c.b16 %v2364, %v2363
    %v2448 = vpack.c.b16 %v2366, %v2365
    %v2449 = vpack.c.b16 %v2368, %v2367
    %v2450 = vpack.c.b16 %v2370, %v2369
    %v2451 = vpack.c.b16 %v2372, %v2371
    %v2452 = vpack.c.b16 %v2374, %v2373
    %v2453 = vpack.c.b16 %v2376, %v2375
    %v2454 = vpack.c.b16 %v2378, %v2377
    %v2455 = vpack.c.b16 %v2380, %v2379
    %v2456 = vpack.c.b16 %v2382, %v2381
    %v2457 = vpack.c.b16 %v2384, %v2383
    %v2458 = vpack.c.b16 %v2386, %v2385
    %v2459 = vpack.c.b16 %v2388, %v2387
    %v2460 = vpack.c.b16 %v2390, %v2389
    %v2461 = vpack.c.b16 %v2392, %v2391
    %v2462 = vpack.c.b16 %v2394, %v2393
    %v2463 = vpack.c.b16 %v2396, %v2395
    %v2464 = vpack.c.b16 %v2398, %v2397
    %v2465 = vpack.c.b16 %v2400, %v2399
    %v2466 = vpack.c.b16 %v2402, %v2401
    %2531 = vmatprep.subr.bf16.mxu0 0
    %2532 = vmatpush1.bf16.msra.mxu0 %v2403
    %2533 = vmatprep.subr.bf16.mxu0 0
    %2534 = vmatpush1.bf16.msra.mxu0 %v2404
    %2535 = vmatprep.subr.bf16.mxu0 0
    %2536 = vmatpush1.bf16.msra.mxu0 %v2405
    %2537 = vmatprep.subr.bf16.mxu0 0
    %2538 = vmatpush1.bf16.msra.mxu0 %v2406
    %2539 = vmatprep.subr.bf16.mxu0 0
    %2540 = vmatpush1.bf16.msra.mxu0 %v2407
    %2541 = vmatprep.subr.bf16.mxu0 0
    %2542 = vmatpush1.bf16.msra.mxu0 %v2408
    %2543 = vmatprep.subr.bf16.mxu0 0
    %2544 = vmatpush1.bf16.msra.mxu0 %v2409
    %2545 = vmatprep.subr.bf16.mxu0 0
    %2546 = vmatpush1.bf16.msra.mxu0 %v2410
    %2547 = vmatprep.subr.bf16.mxu0 0
    %2548 = vmatpush1.bf16.msra.mxu0 %v2411
    %2549 = vmatprep.subr.bf16.mxu0 0
    %2550 = vmatpush1.bf16.msra.mxu0 %v2412
    %2551 = vmatprep.subr.bf16.mxu0 0
    %2552 = vmatpush1.bf16.msra.mxu0 %v2413
    %2553 = vmatprep.subr.bf16.mxu0 0
    %2554 = vmatpush1.bf16.msra.mxu0 %v2414
    %2555 = vmatprep.subr.bf16.mxu0 0
    %2556 = vmatpush1.bf16.msra.mxu0 %v2415
    %2557 = vmatprep.subr.bf16.mxu0 0
    %2558 = vmatpush1.bf16.msra.mxu0 %v2416
    %2559 = vmatprep.subr.bf16.mxu0 0
    %2560 = vmatpush1.bf16.msra.mxu0 %v2417
    %2561 = vmatprep.subr.bf16.mxu0 0
    %2562 = vmatpush1.bf16.msra.mxu0 %v2418
    %2563 = vmatprep.mubr.bf16.mxu0 %v1885
    %2564 = vmatmul.mubr.bf16.gmra.mrb[0].mxu0 %v1884
    %v2565 = vpop.f32.mrb[0].mxu0
    %v2566 = vadd.f32 %v2145, %v2565
    %v2567 = vpop.f32.mrb[0].mxu0
    %v2568 = vpop.f32.mrb[0].mxu0
    %v2569 = vadd.f32 %v2145, %v2568
    %v2570 = vpop.f32.mrb[0].mxu0
    %2571 = vmatprep.mubr.bf16.mxu0 %v1893
    %2572 = vmatmul.mubr.bf16.gmra.mrb[0].mxu0 %v1892
    %v2573 = vpop.f32.mrb[0].mxu0
    %v2574 = vadd.f32 %v2145, %v2573
    %v2575 = vpop.f32.mrb[0].mxu0
    %v2576 = vpop.f32.mrb[0].mxu0
    %v2577 = vadd.f32 %v2145, %v2576
    %v2578 = vpop.f32.mrb[0].mxu0
    %2579 = vmatprep.mubr.bf16.mxu0 %v1901
    %2580 = vmatmul.mubr.bf16.gmra.mrb[0].mxu0 %v1900
    %v2581 = vpop.f32.mrb[0].mxu0
    %v2582 = vadd.f32 %v2145, %v2581
    %v2583 = vpop.f32.mrb[0].mxu0
    %v2584 = vpop.f32.mrb[0].mxu0
    %v2585 = vadd.f32 %v2145, %v2584
    %v2586 = vpop.f32.mrb[0].mxu0
    %2587 = vmatprep.mubr.bf16.mxu0 %v1909
    %2588 = vmatmul.mubr.bf16.gmra.mrb[0].mxu0 %v1908
    %v2589 = vpop.f32.mrb[0].mxu0
    %v2590 = vadd.f32 %v2145, %v2589
    %v2591 = vpop.f32.mrb[0].mxu0
    %v2592 = vpop.f32.mrb[0].mxu0
    %v2593 = vadd.f32 %v2145, %v2592
    %v2594 = vpop.f32.mrb[0].mxu0
    %2595 = vmatprep.mubr.bf16.mxu0 %v1917
    %2596 = vmatmul.mubr.bf16.gmra.mrb[0].mxu0 %v1916
    %v2597 = vpop.f32.mrb[0].mxu0
    %v2598 = vadd.f32 %v2145, %v2597
    %v2599 = vpop.f32.mrb[0].mxu0
    %v2600 = vpop.f32.mrb[0].mxu0
    %v2601 = vadd.f32 %v2145, %v2600
    %v2602 = vpop.f32.mrb[0].mxu0
    %2603 = vmatprep.mubr.bf16.mxu0 %v1925
    %2604 = vmatmul.mubr.bf16.gmra.mrb[0].mxu0 %v1924
    %v2605 = vpop.f32.mrb[0].mxu0
    %v2606 = vadd.f32 %v2145, %v2605
    %v2607 = vpop.f32.mrb[0].mxu0
    %v2608 = vpop.f32.mrb[0].mxu0
    %v2609 = vadd.f32 %v2145, %v2608
    %v2610 = vpop.f32.mrb[0].mxu0
    %2611 = vmatprep.mubr.bf16.mxu0 %v1933
    %2612 = vmatmul.mubr.bf16.gmra.mrb[0].mxu0 %v1932
    %v2613 = vpop.f32.mrb[0].mxu0
    %v2614 = vadd.f32 %v2145, %v2613
    %v2615 = vpop.f32.mrb[0].mxu0
    %v2616 = vpop.f32.mrb[0].mxu0
    %v2617 = vadd.f32 %v2145, %v2616
    %v2618 = vpop.f32.mrb[0].mxu0
    %2619 = vmatprep.mubr.bf16.mxu0 %v1941
    %2620 = vmatmul.mubr.bf16.gmra.mrb[0].mxu0 %v1940
    %v2621 = vpop.f32.mrb[0].mxu0
    %v2622 = vadd.f32 %v2145, %v2621
    %v2623 = vpop.f32.mrb[0].mxu0
    %v2624 = vpop.f32.mrb[0].mxu0
    %v2625 = vadd.f32 %v2145, %v2624
    %v2626 = vpop.f32.mrb[0].mxu0
    %2627 = vmatprep.mubr.bf16.mxu0 %v1949
    %2628 = vmatmul.mubr.bf16.gmra.mrb[0].mxu0 %v1948
    %v2629 = vpop.f32.mrb[0].mxu0
    %v2630 = vadd.f32 %v2145, %v2629
    %v2631 = vpop.f32.mrb[0].mxu0
    %v2632 = vpop.f32.mrb[0].mxu0
    %v2633 = vadd.f32 %v2145, %v2632
    %v2634 = vpop.f32.mrb[0].mxu0
    %2635 = vmatprep.mubr.bf16.mxu0 %v1957
    %2636 = vmatmul.mubr.bf16.gmra.mrb[0].mxu0 %v1956
    %v2637 = vpop.f32.mrb[0].mxu0
    %v2638 = vadd.f32 %v2145, %v2637
    %v2639 = vpop.f32.mrb[0].mxu0
    %v2640 = vpop.f32.mrb[0].mxu0
    %v2641 = vadd.f32 %v2145, %v2640
    %v2642 = vpop.f32.mrb[0].mxu0
    %2643 = vmatprep.mubr.bf16.mxu0 %v1965
    %2644 = vmatmul.mubr.bf16.gmra.mrb[0].mxu0 %v1964
    %v2645 = vpop.f32.mrb[0].mxu0
    %v2646 = vadd.f32 %v2145, %v2645
    %v2647 = vpop.f32.mrb[0].mxu0
    %v2648 = vpop.f32.mrb[0].mxu0
    %v2649 = vadd.f32 %v2145, %v2648
    %v2650 = vpop.f32.mrb[0].mxu0
    %2651 = vmatprep.mubr.bf16.mxu0 %v1973
    %2652 = vmatmul.mubr.bf16.gmra.mrb[0].mxu0 %v1972
    %v2653 = vpop.f32.mrb[0].mxu0
    %v2654 = vadd.f32 %v2145, %v2653
    %v2655 = vpop.f32.mrb[0].mxu0
    %v2656 = vpop.f32.mrb[0].mxu0
    %v2657 = vadd.f32 %v2145, %v2656
    %v2658 = vpop.f32.mrb[0].mxu0
    %2659 = vmatprep.mubr.bf16.mxu0 %v1981
    %2660 = vmatmul.mubr.bf16.gmra.mrb[0].mxu0 %v1980
    %v2661 = vpop.f32.mrb[0].mxu0
    %v2662 = vadd.f32 %v2145, %v2661
    %v2663 = vpop.f32.mrb[0].mxu0
    %v2664 = vpop.f32.mrb[0].mxu0
    %v2665 = vadd.f32 %v2145, %v2664
    %v2666 = vpop.f32.mrb[0].mxu0
    %2667 = vmatprep.mubr.bf16.mxu0 %v1989
    %2668 = vmatmul.mubr.bf16.gmra.mrb[0].mxu0 %v1988
    %v2669 = vpop.f32.mrb[0].mxu0
    %v2670 = vadd.f32 %v2145, %v2669
    %v2671 = vpop.f32.mrb[0].mxu0
    %v2672 = vpop.f32.mrb[0].mxu0
    %v2673 = vadd.f32 %v2145, %v2672
    %v2674 = vpop.f32.mrb[0].mxu0
    %2675 = vmatprep.mubr.bf16.mxu0 %v1997
    %2676 = vmatmul.mubr.bf16.gmra.mrb[0].mxu0 %v1996
    %v2677 = vpop.f32.mrb[0].mxu0
    %v2678 = vadd.f32 %v2145, %v2677
    %v2679 = vpop.f32.mrb[0].mxu0
    %v2680 = vpop.f32.mrb[0].mxu0
    %v2681 = vadd.f32 %v2145, %v2680
    %v2682 = vpop.f32.mrb[0].mxu0
    %2683 = vmatprep.mubr.bf16.mxu0 %v2005
    %2684 = vmatmul.mubr.bf16.gmra.mrb[0].mxu0 %v2004
    %v2685 = vpop.f32.mrb[0].mxu0
    %v2686 = vadd.f32 %v2145, %v2685
    %v2687 = vpop.f32.mrb[0].mxu0
    %v2688 = vpop.f32.mrb[0].mxu0
    %v2689 = vadd.f32 %v2145, %v2688
    %v2690 = vpop.f32.mrb[0].mxu0
    %2691 = vdwg.mxu0
    %2692 = vmatprep.subr.bf16.mxu0 0
    %2693 = vmatpush1.bf16.msra.mxu0 %v2419
    %2694 = vmatprep.subr.bf16.mxu0 0
    %2695 = vmatpush1.bf16.msra.mxu0 %v2420
    %2696 = vmatprep.subr.bf16.mxu0 0
    %2697 = vmatpush1.bf16.msra.mxu0 %v2421
    %2698 = vmatprep.subr.bf16.mxu0 0
    %2699 = vmatpush1.bf16.msra.mxu0 %v2422
    %2700 = vmatprep.subr.bf16.mxu0 0
    %2701 = vmatpush1.bf16.msra.mxu0 %v2423
    %2702 = vmatprep.subr.bf16.mxu0 0
    %2703 = vmatpush1.bf16.msra.mxu0 %v2424
    %2704 = vmatprep.subr.bf16.mxu0 0
    %2705 = vmatpush1.bf16.msra.mxu0 %v2425
    %2706 = vmatprep.subr.bf16.mxu0 0
    %2707 = vmatpush1.bf16.msra.mxu0 %v2426
    %2708 = vmatprep.subr.bf16.mxu0 0
    %2709 = vmatpush1.bf16.msra.mxu0 %v2427
    %2710 = vmatprep.subr.bf16.mxu0 0
    %2711 = vmatpush1.bf16.msra.mxu0 %v2428
    %2712 = vmatprep.subr.bf16.mxu0 0
    %2713 = vmatpush1.bf16.msra.mxu0 %v2429
    %2714 = vmatprep.subr.bf16.mxu0 0
    %2715 = vmatpush1.bf16.msra.mxu0 %v2430
    %2716 = vmatprep.subr.bf16.mxu0 0
    %2717 = vmatpush1.bf16.msra.mxu0 %v2431
    %2718 = vmatprep.subr.bf16.mxu0 0
    %2719 = vmatpush1.bf16.msra.mxu0 %v2432
    %2720 = vmatprep.subr.bf16.mxu0 0
    %2721 = vmatpush1.bf16.msra.mxu0 %v2433
    %2722 = vmatprep.subr.bf16.mxu0 0
    %2723 = vmatpush1.bf16.msra.mxu0 %v2434
    %2724 = vmatprep.mubr.bf16.mxu0 %v1887
    %2725 = vmatmul.mubr.bf16.gmra.mrb[0].mxu0 %v1886
    %v2726 = vpop.f32.mrb[0].mxu0
    %v2727 = vadd.f32 %v2566, %v2726
    %v2728 = vpop.f32.mrb[0].mxu0
    %v2729 = vpop.f32.mrb[0].mxu0
    %v2730 = vadd.f32 %v2569, %v2729
    %v2731 = vpop.f32.mrb[0].mxu0
    %2732 = vmatprep.mubr.bf16.mxu0 %v1895
    %2733 = vmatmul.mubr.bf16.gmra.mrb[0].mxu0 %v1894
    %v2734 = vpop.f32.mrb[0].mxu0
    %v2735 = vadd.f32 %v2574, %v2734
    %v2736 = vpop.f32.mrb[0].mxu0
    %v2737 = vpop.f32.mrb[0].mxu0
    %v2738 = vadd.f32 %v2577, %v2737
    %v2739 = vpop.f32.mrb[0].mxu0
    %2740 = vmatprep.mubr.bf16.mxu0 %v1903
    %2741 = vmatmul.mubr.bf16.gmra.mrb[0].mxu0 %v1902
    %v2742 = vpop.f32.mrb[0].mxu0
    %v2743 = vadd.f32 %v2582, %v2742
    %v2744 = vpop.f32.mrb[0].mxu0
    %v2745 = vpop.f32.mrb[0].mxu0
    %v2746 = vadd.f32 %v2585, %v2745
    %v2747 = vpop.f32.mrb[0].mxu0
    %2748 = vmatprep.mubr.bf16.mxu0 %v1911
    %2749 = vmatmul.mubr.bf16.gmra.mrb[0].mxu0 %v1910
    %v2750 = vpop.f32.mrb[0].mxu0
    %v2751 = vadd.f32 %v2590, %v2750
    %v2752 = vpop.f32.mrb[0].mxu0
    %v2753 = vpop.f32.mrb[0].mxu0
    %v2754 = vadd.f32 %v2593, %v2753
    %v2755 = vpop.f32.mrb[0].mxu0
    %2756 = vmatprep.mubr.bf16.mxu0 %v1919
    %2757 = vmatmul.mubr.bf16.gmra.mrb[0].mxu0 %v1918
    %v2758 = vpop.f32.mrb[0].mxu0
    %v2759 = vadd.f32 %v2598, %v2758
    %v2760 = vpop.f32.mrb[0].mxu0
    %v2761 = vpop.f32.mrb[0].mxu0
    %v2762 = vadd.f32 %v2601, %v2761
    %v2763 = vpop.f32.mrb[0].mxu0
    %2764 = vmatprep.mubr.bf16.mxu0 %v1927
    %2765 = vmatmul.mubr.bf16.gmra.mrb[0].mxu0 %v1926
    %v2766 = vpop.f32.mrb[0].mxu0
    %v2767 = vadd.f32 %v2606, %v2766
    %v2768 = vpop.f32.mrb[0].mxu0
    %v2769 = vpop.f32.mrb[0].mxu0
    %v2770 = vadd.f32 %v2609, %v2769
    %v2771 = vpop.f32.mrb[0].mxu0
    %2772 = vmatprep.mubr.bf16.mxu0 %v1935
    %2773 = vmatmul.mubr.bf16.gmra.mrb[0].mxu0 %v1934
    %v2774 = vpop.f32.mrb[0].mxu0
    %v2775 = vadd.f32 %v2614, %v2774
    %v2776 = vpop.f32.mrb[0].mxu0
    %v2777 = vpop.f32.mrb[0].mxu0
    %v2778 = vadd.f32 %v2617, %v2777
    %v2779 = vpop.f32.mrb[0].mxu0
    %2780 = vmatprep.mubr.bf16.mxu0 %v1943
    %2781 = vmatmul.mubr.bf16.gmra.mrb[0].mxu0 %v1942
    %v2782 = vpop.f32.mrb[0].mxu0
    %v2783 = vadd.f32 %v2622, %v2782
    %v2784 = vpop.f32.mrb[0].mxu0
    %v2785 = vpop.f32.mrb[0].mxu0
    %v2786 = vadd.f32 %v2625, %v2785
    %v2787 = vpop.f32.mrb[0].mxu0
    %2788 = vmatprep.mubr.bf16.mxu0 %v1951
    %2789 = vmatmul.mubr.bf16.gmra.mrb[0].mxu0 %v1950
    %v2790 = vpop.f32.mrb[0].mxu0
    %v2791 = vadd.f32 %v2630, %v2790
    %v2792 = vpop.f32.mrb[0].mxu0
    %v2793 = vpop.f32.mrb[0].mxu0
    %v2794 = vadd.f32 %v2633, %v2793
    %v2795 = vpop.f32.mrb[0].mxu0
    %2796 = vmatprep.mubr.bf16.mxu0 %v1959
    %2797 = vmatmul.mubr.bf16.gmra.mrb[0].mxu0 %v1958
    %v2798 = vpop.f32.mrb[0].mxu0
    %v2799 = vadd.f32 %v2638, %v2798
    %v2800 = vpop.f32.mrb[0].mxu0
    %v2801 = vpop.f32.mrb[0].mxu0
    %v2802 = vadd.f32 %v2641, %v2801
    %v2803 = vpop.f32.mrb[0].mxu0
    %2804 = vmatprep.mubr.bf16.mxu0 %v1967
    %2805 = vmatmul.mubr.bf16.gmra.mrb[0].mxu0 %v1966
    %v2806 = vpop.f32.mrb[0].mxu0
    %v2807 = vadd.f32 %v2646, %v2806
    %v2808 = vpop.f32.mrb[0].mxu0
    %v2809 = vpop.f32.mrb[0].mxu0
    %v2810 = vadd.f32 %v2649, %v2809
    %v2811 = vpop.f32.mrb[0].mxu0
    %2812 = vmatprep.mubr.bf16.mxu0 %v1975
    %2813 = vmatmul.mubr.bf16.gmra.mrb[0].mxu0 %v1974
    %v2814 = vpop.f32.mrb[0].mxu0
    %v2815 = vadd.f32 %v2654, %v2814
    %v2816 = vpop.f32.mrb[0].mxu0
    %v2817 = vpop.f32.mrb[0].mxu0
    %v2818 = vadd.f32 %v2657, %v2817
    %v2819 = vpop.f32.mrb[0].mxu0
    %2820 = vmatprep.mubr.bf16.mxu0 %v1983
    %2821 = vmatmul.mubr.bf16.gmra.mrb[0].mxu0 %v1982
    %v2822 = vpop.f32.mrb[0].mxu0
    %v2823 = vadd.f32 %v2662, %v2822
    %v2824 = vpop.f32.mrb[0].mxu0
    %v2825 = vpop.f32.mrb[0].mxu0
    %v2826 = vadd.f32 %v2665, %v2825
    %v2827 = vpop.f32.mrb[0].mxu0
    %2828 = vmatprep.mubr.bf16.mxu0 %v1991
    %2829 = vmatmul.mubr.bf16.gmra.mrb[0].mxu0 %v1990
    %v2830 = vpop.f32.mrb[0].mxu0
    %v2831 = vadd.f32 %v2670, %v2830
    %v2832 = vpop.f32.mrb[0].mxu0
    %v2833 = vpop.f32.mrb[0].mxu0
    %v2834 = vadd.f32 %v2673, %v2833
    %v2835 = vpop.f32.mrb[0].mxu0
    %2836 = vmatprep.mubr.bf16.mxu0 %v1999
    %2837 = vmatmul.mubr.bf16.gmra.mrb[0].mxu0 %v1998
    %v2838 = vpop.f32.mrb[0].mxu0
    %v2839 = vadd.f32 %v2678, %v2838
    %v2840 = vpop.f32.mrb[0].mxu0
    %v2841 = vpop.f32.mrb[0].mxu0
    %v2842 = vadd.f32 %v2681, %v2841
    %v2843 = vpop.f32.mrb[0].mxu0
    %2844 = vmatprep.mubr.bf16.mxu0 %v2007
    %2845 = vmatmul.mubr.bf16.gmra.mrb[0].mxu0 %v2006
    %v2846 = vpop.f32.mrb[0].mxu0
    %v2847 = vadd.f32 %v2686, %v2846
    %v2848 = vpop.f32.mrb[0].mxu0
    %v2849 = vpop.f32.mrb[0].mxu0
    %v2850 = vadd.f32 %v2689, %v2849
    %v2851 = vpop.f32.mrb[0].mxu0
    %2852 = vdwg.mxu0
    %2853 = vmatprep.subr.bf16.mxu0 0
    %2854 = vmatpush1.bf16.msra.mxu0 %v2435
    %2855 = vmatprep.subr.bf16.mxu0 0
    %2856 = vmatpush1.bf16.msra.mxu0 %v2436
    %2857 = vmatprep.subr.bf16.mxu0 0
    %2858 = vmatpush1.bf16.msra.mxu0 %v2437
    %2859 = vmatprep.subr.bf16.mxu0 0
    %2860 = vmatpush1.bf16.msra.mxu0 %v2438
    %2861 = vmatprep.subr.bf16.mxu0 0
    %2862 = vmatpush1.bf16.msra.mxu0 %v2439
    %2863 = vmatprep.subr.bf16.mxu0 0
    %2864 = vmatpush1.bf16.msra.mxu0 %v2440
    %2865 = vmatprep.subr.bf16.mxu0 0
    %2866 = vmatpush1.bf16.msra.mxu0 %v2441
    %2867 = vmatprep.subr.bf16.mxu0 0
    %2868 = vmatpush1.bf16.msra.mxu0 %v2442
    %2869 = vmatprep.subr.bf16.mxu0 0
    %2870 = vmatpush1.bf16.msra.mxu0 %v2443
    %2871 = vmatprep.subr.bf16.mxu0 0
    %2872 = vmatpush1.bf16.msra.mxu0 %v2444
    %2873 = vmatprep.subr.bf16.mxu0 0
    %2874 = vmatpush1.bf16.msra.mxu0 %v2445
    %2875 = vmatprep.subr.bf16.mxu0 0
    %2876 = vmatpush1.bf16.msra.mxu0 %v2446
    %2877 = vmatprep.subr.bf16.mxu0 0
    %2878 = vmatpush1.bf16.msra.mxu0 %v2447
    %2879 = vmatprep.subr.bf16.mxu0 0
    %2880 = vmatpush1.bf16.msra.mxu0 %v2448
    %2881 = vmatprep.subr.bf16.mxu0 0
    %2882 = vmatpush1.bf16.msra.mxu0 %v2449
    %2883 = vmatprep.subr.bf16.mxu0 0
    %2884 = vmatpush1.bf16.msra.mxu0 %v2450
    %2885 = vmatprep.mubr.bf16.mxu0 %v1889
    %2886 = vmatmul.mubr.bf16.gmra.mrb[0].mxu0 %v1888
    %v2887 = vpop.f32.mrb[0].mxu0
    %v2888 = vadd.f32 %v2727, %v2887
    %v2889 = vpop.f32.mrb[0].mxu0
    %v2890 = vpop.f32.mrb[0].mxu0
    %v2891 = vadd.f32 %v2730, %v2890
    %v2892 = vpop.f32.mrb[0].mxu0
    %2893 = vmatprep.mubr.bf16.mxu0 %v1897
    %2894 = vmatmul.mubr.bf16.gmra.mrb[0].mxu0 %v1896
    %v2895 = vpop.f32.mrb[0].mxu0
    %v2896 = vadd.f32 %v2735, %v2895
    %v2897 = vpop.f32.mrb[0].mxu0
    %v2898 = vpop.f32.mrb[0].mxu0
    %v2899 = vadd.f32 %v2738, %v2898
    %v2900 = vpop.f32.mrb[0].mxu0
    %2901 = vmatprep.mubr.bf16.mxu0 %v1905
    %2902 = vmatmul.mubr.bf16.gmra.mrb[0].mxu0 %v1904
    %v2903 = vpop.f32.mrb[0].mxu0
    %v2904 = vadd.f32 %v2743, %v2903
    %v2905 = vpop.f32.mrb[0].mxu0
    %v2906 = vpop.f32.mrb[0].mxu0
    %v2907 = vadd.f32 %v2746, %v2906
    %v2908 = vpop.f32.mrb[0].mxu0
    %2909 = vmatprep.mubr.bf16.mxu0 %v1913
    %2910 = vmatmul.mubr.bf16.gmra.mrb[0].mxu0 %v1912
    %v2911 = vpop.f32.mrb[0].mxu0
    %v2912 = vadd.f32 %v2751, %v2911
    %v2913 = vpop.f32.mrb[0].mxu0
    %v2914 = vpop.f32.mrb[0].mxu0
    %v2915 = vadd.f32 %v2754, %v2914
    %v2916 = vpop.f32.mrb[0].mxu0
    %2917 = vmatprep.mubr.bf16.mxu0 %v1921
    %2918 = vmatmul.mubr.bf16.gmra.mrb[0].mxu0 %v1920
    %v2919 = vpop.f32.mrb[0].mxu0
    %v2920 = vadd.f32 %v2759, %v2919
    %v2921 = vpop.f32.mrb[0].mxu0
    %v2922 = vpop.f32.mrb[0].mxu0
    %v2923 = vadd.f32 %v2762, %v2922
    %v2924 = vpop.f32.mrb[0].mxu0
    %2925 = vmatprep.mubr.bf16.mxu0 %v1929
    %2926 = vmatmul.mubr.bf16.gmra.mrb[0].mxu0 %v1928
    %v2927 = vpop.f32.mrb[0].mxu0
    %v2928 = vadd.f32 %v2767, %v2927
    %v2929 = vpop.f32.mrb[0].mxu0
    %v2930 = vpop.f32.mrb[0].mxu0
    %v2931 = vadd.f32 %v2770, %v2930
    %v2932 = vpop.f32.mrb[0].mxu0
    %2933 = vmatprep.mubr.bf16.mxu0 %v1937
    %2934 = vmatmul.mubr.bf16.gmra.mrb[0].mxu0 %v1936
    %v2935 = vpop.f32.mrb[0].mxu0
    %v2936 = vadd.f32 %v2775, %v2935
    %v2937 = vpop.f32.mrb[0].mxu0
    %v2938 = vpop.f32.mrb[0].mxu0
    %v2939 = vadd.f32 %v2778, %v2938
    %v2940 = vpop.f32.mrb[0].mxu0
    %2941 = vmatprep.mubr.bf16.mxu0 %v1945
    %2942 = vmatmul.mubr.bf16.gmra.mrb[0].mxu0 %v1944
    %v2943 = vpop.f32.mrb[0].mxu0
    %v2944 = vadd.f32 %v2783, %v2943
    %v2945 = vpop.f32.mrb[0].mxu0
    %v2946 = vpop.f32.mrb[0].mxu0
    %v2947 = vadd.f32 %v2786, %v2946
    %v2948 = vpop.f32.mrb[0].mxu0
    %2949 = vmatprep.mubr.bf16.mxu0 %v1953
    %2950 = vmatmul.mubr.bf16.gmra.mrb[0].mxu0 %v1952
    %v2951 = vpop.f32.mrb[0].mxu0
    %v2952 = vadd.f32 %v2791, %v2951
    %v2953 = vpop.f32.mrb[0].mxu0
    %v2954 = vpop.f32.mrb[0].mxu0
    %v2955 = vadd.f32 %v2794, %v2954
    %v2956 = vpop.f32.mrb[0].mxu0
    %2957 = vmatprep.mubr.bf16.mxu0 %v1961
    %2958 = vmatmul.mubr.bf16.gmra.mrb[0].mxu0 %v1960
    %v2959 = vpop.f32.mrb[0].mxu0
    %v2960 = vadd.f32 %v2799, %v2959
    %v2961 = vpop.f32.mrb[0].mxu0
    %v2962 = vpop.f32.mrb[0].mxu0
    %v2963 = vadd.f32 %v2802, %v2962
    %v2964 = vpop.f32.mrb[0].mxu0
    %2965 = vmatprep.mubr.bf16.mxu0 %v1969
    %2966 = vmatmul.mubr.bf16.gmra.mrb[0].mxu0 %v1968
    %v2967 = vpop.f32.mrb[0].mxu0
    %v2968 = vadd.f32 %v2807, %v2967
    %v2969 = vpop.f32.mrb[0].mxu0
    %v2970 = vpop.f32.mrb[0].mxu0
    %v2971 = vadd.f32 %v2810, %v2970
    %v2972 = vpop.f32.mrb[0].mxu0
    %2973 = vmatprep.mubr.bf16.mxu0 %v1977
    %2974 = vmatmul.mubr.bf16.gmra.mrb[0].mxu0 %v1976
    %v2975 = vpop.f32.mrb[0].mxu0
    %v2976 = vadd.f32 %v2815, %v2975
    %v2977 = vpop.f32.mrb[0].mxu0
    %v2978 = vpop.f32.mrb[0].mxu0
    %v2979 = vadd.f32 %v2818, %v2978
    %v2980 = vpop.f32.mrb[0].mxu0
    %2981 = vmatprep.mubr.bf16.mxu0 %v1985
    %2982 = vmatmul.mubr.bf16.gmra.mrb[0].mxu0 %v1984
    %v2983 = vpop.f32.mrb[0].mxu0
    %v2984 = vadd.f32 %v2823, %v2983
    %v2985 = vpop.f32.mrb[0].mxu0
    %v2986 = vpop.f32.mrb[0].mxu0
    %v2987 = vadd.f32 %v2826, %v2986
    %v2988 = vpop.f32.mrb[0].mxu0
    %2989 = vmatprep.mubr.bf16.mxu0 %v1993
    %2990 = vmatmul.mubr.bf16.gmra.mrb[0].mxu0 %v1992
    %v2991 = vpop.f32.mrb[0].mxu0
    %v2992 = vadd.f32 %v2831, %v2991
    %v2993 = vpop.f32.mrb[0].mxu0
    %v2994 = vpop.f32.mrb[0].mxu0
    %v2995 = vadd.f32 %v2834, %v2994
    %v2996 = vpop.f32.mrb[0].mxu0
    %2997 = vmatprep.mubr.bf16.mxu0 %v2001
    %2998 = vmatmul.mubr.bf16.gmra.mrb[0].mxu0 %v2000
    %v2999 = vpop.f32.mrb[0].mxu0
    %v3000 = vadd.f32 %v2839, %v2999
    %v3001 = vpop.f32.mrb[0].mxu0
    %v3002 = vpop.f32.mrb[0].mxu0
    %v3003 = vadd.f32 %v2842, %v3002
    %v3004 = vpop.f32.mrb[0].mxu0
    %3005 = vmatprep.mubr.bf16.mxu0 %v2009
    %3006 = vmatmul.mubr.bf16.gmra.mrb[0].mxu0 %v2008
    %v3007 = vpop.f32.mrb[0].mxu0
    %v3008 = vadd.f32 %v2847, %v3007
    %v3009 = vpop.f32.mrb[0].mxu0
    %v3010 = vpop.f32.mrb[0].mxu0
    %v3011 = vadd.f32 %v2850, %v3010
    %v3012 = vpop.f32.mrb[0].mxu0
    %3013 = vdwg.mxu0
    %3014 = vmatprep.subr.bf16.mxu0 0
    %3015 = vmatpush1.bf16.msra.mxu0 %v2451
    %3016 = vmatprep.subr.bf16.mxu0 0
    %3017 = vmatpush1.bf16.msra.mxu0 %v2452
    %3018 = vmatprep.subr.bf16.mxu0 0
    %3019 = vmatpush1.bf16.msra.mxu0 %v2453
    %3020 = vmatprep.subr.bf16.mxu0 0
    %3021 = vmatpush1.bf16.msra.mxu0 %v2454
    %3022 = vmatprep.subr.bf16.mxu0 0
    %3023 = vmatpush1.bf16.msra.mxu0 %v2455
    %3024 = vmatprep.subr.bf16.mxu0 0
    %3025 = vmatpush1.bf16.msra.mxu0 %v2456
    %3026 = vmatprep.subr.bf16.mxu0 0
    %3027 = vmatpush1.bf16.msra.mxu0 %v2457
    %3028 = vmatprep.subr.bf16.mxu0 0
    %3029 = vmatpush1.bf16.msra.mxu0 %v2458
    %3030 = vmatprep.subr.bf16.mxu0 0
    %3031 = vmatpush1.bf16.msra.mxu0 %v2459
    %3032 = vmatprep.subr.bf16.mxu0 0
    %3033 = vmatpush1.bf16.msra.mxu0 %v2460
    %3034 = vmatprep.subr.bf16.mxu0 0
    %3035 = vmatpush1.bf16.msra.mxu0 %v2461
    %3036 = vmatprep.subr.bf16.mxu0 0
    %3037 = vmatpush1.bf16.msra.mxu0 %v2462
    %3038 = vmatprep.subr.bf16.mxu0 0
    %3039 = vmatpush1.bf16.msra.mxu0 %v2463
    %3040 = vmatprep.subr.bf16.mxu0 0
    %3041 = vmatpush1.bf16.msra.mxu0 %v2464
    %3042 = vmatprep.subr.bf16.mxu0 0
    %3043 = vmatpush1.bf16.msra.mxu0 %v2465
    %3044 = vmatprep.subr.bf16.mxu0 0
    %3045 = vmatpush1.bf16.msra.mxu0 %v2466
    %3046 = vmatprep.mubr.bf16.mxu0 %v1891
    %3047 = vmatmul.mubr.bf16.gmra.mrb[0].mxu0 %v1890
    %v3048 = vpop.f32.mrb[0].mxu0
    %v3049 = vadd.f32 %v2888, %v3048
    %v3050 = vpop.f32.mrb[0].mxu0
    %v3051 = vpop.f32.mrb[0].mxu0
    %v3052 = vadd.f32 %v2891, %v3051
    %v3053 = vpop.f32.mrb[0].mxu0
    %3054 = vmatprep.mubr.bf16.mxu0 %v1899
    %3055 = vmatmul.mubr.bf16.gmra.mrb[0].mxu0 %v1898
    %v3056 = vpop.f32.mrb[0].mxu0
    %v3057 = vadd.f32 %v2896, %v3056
    %v3058 = vpop.f32.mrb[0].mxu0
    %v3059 = vpop.f32.mrb[0].mxu0
    %v3060 = vadd.f32 %v2899, %v3059
    %v3061 = vpop.f32.mrb[0].mxu0
    %3062 = vmatprep.mubr.bf16.mxu0 %v1907
    %3063 = vmatmul.mubr.bf16.gmra.mrb[0].mxu0 %v1906
    %v3064 = vpop.f32.mrb[0].mxu0
    %v3065 = vadd.f32 %v2904, %v3064
    %v3066 = vpop.f32.mrb[0].mxu0
    %v3067 = vpop.f32.mrb[0].mxu0
    %v3068 = vadd.f32 %v2907, %v3067
    %v3069 = vpop.f32.mrb[0].mxu0
    %3070 = vmatprep.mubr.bf16.mxu0 %v1915
    %3071 = vmatmul.mubr.bf16.gmra.mrb[0].mxu0 %v1914
    %v3072 = vpop.f32.mrb[0].mxu0
    %v3073 = vadd.f32 %v2912, %v3072
    %v3074 = vpop.f32.mrb[0].mxu0
    %v3075 = vpop.f32.mrb[0].mxu0
    %v3076 = vadd.f32 %v2915, %v3075
    %v3077 = vpop.f32.mrb[0].mxu0
    %3078 = vmatprep.mubr.bf16.mxu0 %v1923
    %3079 = vmatmul.mubr.bf16.gmra.mrb[0].mxu0 %v1922
    %v3080 = vpop.f32.mrb[0].mxu0
    %v3081 = vadd.f32 %v2920, %v3080
    %v3082 = vpop.f32.mrb[0].mxu0
    %v3083 = vpop.f32.mrb[0].mxu0
    %v3084 = vadd.f32 %v2923, %v3083
    %v3085 = vpop.f32.mrb[0].mxu0
    %3086 = vmatprep.mubr.bf16.mxu0 %v1931
    %3087 = vmatmul.mubr.bf16.gmra.mrb[0].mxu0 %v1930
    %v3088 = vpop.f32.mrb[0].mxu0
    %v3089 = vadd.f32 %v2928, %v3088
    %v3090 = vpop.f32.mrb[0].mxu0
    %v3091 = vpop.f32.mrb[0].mxu0
    %v3092 = vadd.f32 %v2931, %v3091
    %v3093 = vpop.f32.mrb[0].mxu0
    %3094 = vmatprep.mubr.bf16.mxu0 %v1939
    %3095 = vmatmul.mubr.bf16.gmra.mrb[0].mxu0 %v1938
    %v3096 = vpop.f32.mrb[0].mxu0
    %v3097 = vadd.f32 %v2936, %v3096
    %v3098 = vpop.f32.mrb[0].mxu0
    %v3099 = vpop.f32.mrb[0].mxu0
    %v3100 = vadd.f32 %v2939, %v3099
    %v3101 = vpop.f32.mrb[0].mxu0
    %3102 = vmatprep.mubr.bf16.mxu0 %v1947
    %3103 = vmatmul.mubr.bf16.gmra.mrb[0].mxu0 %v1946
    %v3104 = vpop.f32.mrb[0].mxu0
    %v3105 = vadd.f32 %v2944, %v3104
    %v3106 = vpop.f32.mrb[0].mxu0
    %v3107 = vpop.f32.mrb[0].mxu0
    %v3108 = vadd.f32 %v2947, %v3107
    %v3109 = vpop.f32.mrb[0].mxu0
    %3110 = vmatprep.mubr.bf16.mxu0 %v1955
    %3111 = vmatmul.mubr.bf16.gmra.mrb[0].mxu0 %v1954
    %v3112 = vpop.f32.mrb[0].mxu0
    %v3113 = vadd.f32 %v2952, %v3112
    %v3114 = vpop.f32.mrb[0].mxu0
    %v3115 = vpop.f32.mrb[0].mxu0
    %v3116 = vadd.f32 %v2955, %v3115
    %v3117 = vpop.f32.mrb[0].mxu0
    %3118 = vmatprep.mubr.bf16.mxu0 %v1963
    %3119 = vmatmul.mubr.bf16.gmra.mrb[0].mxu0 %v1962
    %v3120 = vpop.f32.mrb[0].mxu0
    %v3121 = vadd.f32 %v2960, %v3120
    %v3122 = vpop.f32.mrb[0].mxu0
    %v3123 = vpop.f32.mrb[0].mxu0
    %v3124 = vadd.f32 %v2963, %v3123
    %v3125 = vpop.f32.mrb[0].mxu0
    %3126 = vmatprep.mubr.bf16.mxu0 %v1971
    %3127 = vmatmul.mubr.bf16.gmra.mrb[0].mxu0 %v1970
    %v3128 = vpop.f32.mrb[0].mxu0
    %v3129 = vadd.f32 %v2968, %v3128
    %v3130 = vpop.f32.mrb[0].mxu0
    %v3131 = vpop.f32.mrb[0].mxu0
    %v3132 = vadd.f32 %v2971, %v3131
    %v3133 = vpop.f32.mrb[0].mxu0
    %3134 = vmatprep.mubr.bf16.mxu0 %v1979
    %3135 = vmatmul.mubr.bf16.gmra.mrb[0].mxu0 %v1978
    %v3136 = vpop.f32.mrb[0].mxu0
    %v3137 = vadd.f32 %v2976, %v3136
    %v3138 = vpop.f32.mrb[0].mxu0
    %v3139 = vpop.f32.mrb[0].mxu0
    %v3140 = vadd.f32 %v2979, %v3139
    %v3141 = vpop.f32.mrb[0].mxu0
    %3142 = vmatprep.mubr.bf16.mxu0 %v1987
    %3143 = vmatmul.mubr.bf16.gmra.mrb[0].mxu0 %v1986
    %v3144 = vpop.f32.mrb[0].mxu0
    %v3145 = vadd.f32 %v2984, %v3144
    %v3146 = vpop.f32.mrb[0].mxu0
    %v3147 = vpop.f32.mrb[0].mxu0
    %v3148 = vadd.f32 %v2987, %v3147
    %v3149 = vpop.f32.mrb[0].mxu0
    %3150 = vmatprep.mubr.bf16.mxu0 %v1995
    %3151 = vmatmul.mubr.bf16.gmra.mrb[0].mxu0 %v1994
    %v3152 = vpop.f32.mrb[0].mxu0
    %v3153 = vadd.f32 %v2992, %v3152
    %v3154 = vpop.f32.mrb[0].mxu0
    %v3155 = vpop.f32.mrb[0].mxu0
    %v3156 = vadd.f32 %v2995, %v3155
    %v3157 = vpop.f32.mrb[0].mxu0
    %3158 = vmatprep.mubr.bf16.mxu0 %v2003
    %3159 = vmatmul.mubr.bf16.gmra.mrb[0].mxu0 %v2002
    %v3160 = vpop.f32.mrb[0].mxu0
    %v3161 = vadd.f32 %v3000, %v3160
    %v3162 = vpop.f32.mrb[0].mxu0
    %v3163 = vpop.f32.mrb[0].mxu0
    %v3164 = vadd.f32 %v3003, %v3163
    %v3165 = vpop.f32.mrb[0].mxu0
    %3166 = vmatprep.mubr.bf16.mxu0 %v2011
    %3167 = vmatmul.mubr.bf16.gmra.mrb[0].mxu0 %v2010
    %v3168 = vpop.f32.mrb[0].mxu0
    %v3169 = vadd.f32 %v3008, %v3168
    %v3170 = vpop.f32.mrb[0].mxu0
    %v3171 = vpop.f32.mrb[0].mxu0
    %v3172 = vadd.f32 %v3011, %v3171
    %v3173 = vpop.f32.mrb[0].mxu0
    %3174 = vdwg.mxu0
    %v3175 = vadd.f32 %v3049, %v3052
    %v3176 = vadd.f32 %v3175, %v3057
    %v3177 = vadd.f32 %v3176, %v3060
    %v3178 = vadd.f32 %v3177, %v3065
    %v3179 = vadd.f32 %v3178, %v3068
    %v3180 = vadd.f32 %v3179, %v3073
    %v3181 = vadd.f32 %v3180, %v3076
    %v3182 = vadd.f32 %v3181, %v3081
    %v3183 = vadd.f32 %v3182, %v3084
    %v3184 = vadd.f32 %v3183, %v3089
    %v3185 = vadd.f32 %v3184, %v3092
    %v3186 = vadd.f32 %v3185, %v3097
    %v3187 = vadd.f32 %v3186, %v3100
    %v3188 = vadd.f32 %v3187, %v3105
    %v3189 = vadd.f32 %v3188, %v3108
    %v3190 = vadd.f32 %v3189, %v3113
    %v3191 = vadd.f32 %v3190, %v3116
    %v3192 = vadd.f32 %v3191, %v3121
    %v3193 = vadd.f32 %v3192, %v3124
    %v3194 = vadd.f32 %v3193, %v3129
    %v3195 = vadd.f32 %v3194, %v3132
    %v3196 = vadd.f32 %v3195, %v3137
    %v3197 = vadd.f32 %v3196, %v3140
    %v3198 = vadd.f32 %v3197, %v3145
    %v3199 = vadd.f32 %v3198, %v3148
    %v3200 = vadd.f32 %v3199, %v3153
    %v3201 = vadd.f32 %v3200, %v3156
    %v3202 = vadd.f32 %v3201, %v3161
    %v3203 = vadd.f32 %v3202, %v3164
    %v3204 = vadd.f32 %v3203, %v3169
    %v3205 = vadd.f32 %v3204, %v3172
    %3206 = vadd.xlane.f32.xlu0 %v3205
    %v3207 = vpop.xlane.xlu0 %3206
    %v3208 = vrot.slane %v3207, 4
    %v3209 = vadd.f32 %v3207, %v3208
    %v3210 = vrot.slane %v3209, 2
    %v3211 = vadd.f32 %v3209, %v3210
    %v3212 = vrot.slane %v3211, 1
    %v3213 = vadd.f32 %v3211, %v3212
    %s3214 = vtos %v3213
    %s3215 = smul.f32 %s3214, 3.0517578e-05
    %v3216 = vmul.f32 %v3049, %v3049
    %v3217 = vmul.f32 %v3052, %v3052
    %v3218 = vmul.f32 %v3057, %v3057
    %v3219 = vmul.f32 %v3060, %v3060
    %v3220 = vmul.f32 %v3065, %v3065
    %v3221 = vmul.f32 %v3068, %v3068
    %v3222 = vmul.f32 %v3073, %v3073
    %v3223 = vmul.f32 %v3076, %v3076
    %v3224 = vmul.f32 %v3081, %v3081
    %v3225 = vmul.f32 %v3084, %v3084
    %v3226 = vmul.f32 %v3089, %v3089
    %v3227 = vmul.f32 %v3092, %v3092
    %v3228 = vmul.f32 %v3097, %v3097
    %v3229 = vmul.f32 %v3100, %v3100
    %v3230 = vmul.f32 %v3105, %v3105
    %v3231 = vmul.f32 %v3108, %v3108
    %v3232 = vmul.f32 %v3113, %v3113
    %v3233 = vmul.f32 %v3116, %v3116
    %v3234 = vmul.f32 %v3121, %v3121
    %v3235 = vmul.f32 %v3124, %v3124
    %v3236 = vmul.f32 %v3129, %v3129
    %v3237 = vmul.f32 %v3132, %v3132
    %v3238 = vmul.f32 %v3137, %v3137
    %v3239 = vmul.f32 %v3140, %v3140
    %v3240 = vmul.f32 %v3145, %v3145
    %v3241 = vmul.f32 %v3148, %v3148
    %v3242 = vmul.f32 %v3153, %v3153
    %v3243 = vmul.f32 %v3156, %v3156
    %v3244 = vmul.f32 %v3161, %v3161
    %v3245 = vmul.f32 %v3164, %v3164
    %v3246 = vmul.f32 %v3169, %v3169
    %v3247 = vmul.f32 %v3172, %v3172
    %v3248 = vadd.f32 %v3216, %v3217
    %v3249 = vadd.f32 %v3248, %v3218
    %v3250 = vadd.f32 %v3249, %v3219
    %v3251 = vadd.f32 %v3250, %v3220
    %v3252 = vadd.f32 %v3251, %v3221
    %v3253 = vadd.f32 %v3252, %v3222
    %v3254 = vadd.f32 %v3253, %v3223
    %v3255 = vadd.f32 %v3254, %v3224
    %v3256 = vadd.f32 %v3255, %v3225
    %v3257 = vadd.f32 %v3256, %v3226
    %v3258 = vadd.f32 %v3257, %v3227
    %v3259 = vadd.f32 %v3258, %v3228
    %v3260 = vadd.f32 %v3259, %v3229
    %v3261 = vadd.f32 %v3260, %v3230
    %v3262 = vadd.f32 %v3261, %v3231
    %v3263 = vadd.f32 %v3262, %v3232
    %v3264 = vadd.f32 %v3263, %v3233
    %v3265 = vadd.f32 %v3264, %v3234
    %v3266 = vadd.f32 %v3265, %v3235
    %v3267 = vadd.f32 %v3266, %v3236
    %v3268 = vadd.f32 %v3267, %v3237
    %v3269 = vadd.f32 %v3268, %v3238
    %v3270 = vadd.f32 %v3269, %v3239
    %v3271 = vadd.f32 %v3270, %v3240
    %v3272 = vadd.f32 %v3271, %v3241
    %v3273 = vadd.f32 %v3272, %v3242
    %v3274 = vadd.f32 %v3273, %v3243
    %v3275 = vadd.f32 %v3274, %v3244
    %v3276 = vadd.f32 %v3275, %v3245
    %v3277 = vadd.f32 %v3276, %v3246
    %v3278 = vadd.f32 %v3277, %v3247
    %3279 = vadd.xlane.f32.xlu0 %v3278
    %v3280 = vpop.xlane.xlu0 %3279
    %v3281 = vrot.slane %v3280, 4
    %v3282 = vadd.f32 %v3280, %v3281
    %v3283 = vrot.slane %v3282, 2
    %v3284 = vadd.f32 %v3282, %v3283
    %v3285 = vrot.slane %v3284, 1
    %v3286 = vadd.f32 %v3284, %v3285
    %s3287 = vtos %v3286
    %s3288 = smul.f32 %s3287, 3.0517578e-05
    %s3289 = smul.f32 %s3215, %s3215
    %s3290 = ssub.f32 %s3288, %s3289
    %s3291 = smax.f32 %s3290, 0.0
    %s3292 = sadd.f32 %s3291, 1e-05
    %v3293 = vstv %s3292
    %v3294 = vrsqrt.pop %v3293
    %s3295 = vtos %v3294
    %v3296 = vstv %s3215
    %v3297 = vsub.f32 %v3049, %v3296
    %v3298 = vsub.f32 %v3052, %v3296
    %v3299 = vsub.f32 %v3057, %v3296
    %v3300 = vsub.f32 %v3060, %v3296
    %v3301 = vsub.f32 %v3065, %v3296
    %v3302 = vsub.f32 %v3068, %v3296
    %v3303 = vsub.f32 %v3073, %v3296
    %v3304 = vsub.f32 %v3076, %v3296
    %v3305 = vsub.f32 %v3081, %v3296
    %v3306 = vsub.f32 %v3084, %v3296
    %v3307 = vsub.f32 %v3089, %v3296
    %v3308 = vsub.f32 %v3092, %v3296
    %v3309 = vsub.f32 %v3097, %v3296
    %v3310 = vsub.f32 %v3100, %v3296
    %v3311 = vsub.f32 %v3105, %v3296
    %v3312 = vsub.f32 %v3108, %v3296
    %v3313 = vsub.f32 %v3113, %v3296
    %v3314 = vsub.f32 %v3116, %v3296
    %v3315 = vsub.f32 %v3121, %v3296
    %v3316 = vsub.f32 %v3124, %v3296
    %v3317 = vsub.f32 %v3129, %v3296
    %v3318 = vsub.f32 %v3132, %v3296
    %v3319 = vsub.f32 %v3137, %v3296
    %v3320 = vsub.f32 %v3140, %v3296
    %v3321 = vsub.f32 %v3145, %v3296
    %v3322 = vsub.f32 %v3148, %v3296
    %v3323 = vsub.f32 %v3153, %v3296
    %v3324 = vsub.f32 %v3156, %v3296
    %v3325 = vsub.f32 %v3161, %v3296
    %v3326 = vsub.f32 %v3164, %v3296
    %v3327 = vsub.f32 %v3169, %v3296
    %v3328 = vsub.f32 %v3172, %v3296
    %v3329 = vstv %s3295
    %v3330 = vmul.f32 %v3297, %v3329
    %v3331 = vmul.f32 %v3298, %v3329
    %v3332 = vmul.f32 %v3299, %v3329
    %v3333 = vmul.f32 %v3300, %v3329
    %v3334 = vmul.f32 %v3301, %v3329
    %v3335 = vmul.f32 %v3302, %v3329
    %v3336 = vmul.f32 %v3303, %v3329
    %v3337 = vmul.f32 %v3304, %v3329
    %v3338 = vmul.f32 %v3305, %v3329
    %v3339 = vmul.f32 %v3306, %v3329
    %v3340 = vmul.f32 %v3307, %v3329
    %v3341 = vmul.f32 %v3308, %v3329
    %v3342 = vmul.f32 %v3309, %v3329
    %v3343 = vmul.f32 %v3310, %v3329
    %v3344 = vmul.f32 %v3311, %v3329
    %v3345 = vmul.f32 %v3312, %v3329
    %v3346 = vmul.f32 %v3313, %v3329
    %v3347 = vmul.f32 %v3314, %v3329
    %v3348 = vmul.f32 %v3315, %v3329
    %v3349 = vmul.f32 %v3316, %v3329
    %v3350 = vmul.f32 %v3317, %v3329
    %v3351 = vmul.f32 %v3318, %v3329
    %v3352 = vmul.f32 %v3319, %v3329
    %v3353 = vmul.f32 %v3320, %v3329
    %v3354 = vmul.f32 %v3321, %v3329
    %v3355 = vmul.f32 %v3322, %v3329
    %v3356 = vmul.f32 %v3323, %v3329
    %v3357 = vmul.f32 %v3324, %v3329
    %v3358 = vmul.f32 %v3325, %v3329
    %v3359 = vmul.f32 %v3326, %v3329
    %v3360 = vmul.f32 %v3327, %v3329
    %v3361 = vmul.f32 %v3328, %v3329
    %v3362 = vld [vmem:[%s3] sm:$0xff]
    %v3363 = vld [vmem:[%s3 + $0x8] sm:$0xff]
    %v3364 = vld [vmem:[%s3 + $0x10] sm:$0xff]
    %v3365 = vld [vmem:[%s3 + $0x18] sm:$0xff]
    %v3366 = vld [vmem:[%s3 + $0x20] sm:$0xff]
    %v3367 = vld [vmem:[%s3 + $0x28] sm:$0xff]
    %v3368 = vld [vmem:[%s3 + $0x30] sm:$0xff]
    %v3369 = vld [vmem:[%s3 + $0x38] sm:$0xff]
    %v3370 = vld [vmem:[%s3 + $0x40] sm:$0xff]
    %v3371 = vld [vmem:[%s3 + $0x48] sm:$0xff]
    %v3372 = vld [vmem:[%s3 + $0x50] sm:$0xff]
    %v3373 = vld [vmem:[%s3 + $0x58] sm:$0xff]
    %v3374 = vld [vmem:[%s3 + $0x60] sm:$0xff]
    %v3375 = vld [vmem:[%s3 + $0x68] sm:$0xff]
    %v3376 = vld [vmem:[%s3 + $0x70] sm:$0xff]
    %v3377 = vld [vmem:[%s3 + $0x78] sm:$0xff]
    %v3378 = vld [vmem:[%s4] sm:$0x1]
    %v3380 = vlaneseq
    %v3381 = vshrl.u32 %v3380, 7
    %v3382 = vsub.s32 0, %v3381
    %v3383 = vrot.slane %v3378, %v3382
    %3385 = vmatprep.subr.mxu0 0.0
    %3386 = vmatpush1.msra.mxu0 %v3362
    %3387 = vmatprep.subr.mxu0 0.0
    %3388 = vmatpush1.msra.mxu0 %v3363
    %3389 = vmatprep.subr.mxu0 0.0
    %3390 = vmatpush1.msra.mxu0 %v3364
    %3391 = vmatprep.subr.mxu0 0.0
    %3392 = vmatpush1.msra.mxu0 %v3365
    %3393 = vmatprep.subr.mxu0 0.0
    %3394 = vmatpush1.msra.mxu0 %v3366
    %3395 = vmatprep.subr.mxu0 0.0
    %3396 = vmatpush1.msra.mxu0 %v3367
    %3397 = vmatprep.subr.mxu0 0.0
    %3398 = vmatpush1.msra.mxu0 %v3368
    %3399 = vmatprep.subr.mxu0 0.0
    %3400 = vmatpush1.msra.mxu0 %v3369
    %3401 = vmatprep.subr.mxu0 0.0
    %3402 = vmatpush1.msra.mxu0 %v3370
    %3403 = vmatprep.subr.mxu0 0.0
    %3404 = vmatpush1.msra.mxu0 %v3371
    %3405 = vmatprep.subr.mxu0 0.0
    %3406 = vmatpush1.msra.mxu0 %v3372
    %3407 = vmatprep.subr.mxu0 0.0
    %3408 = vmatpush1.msra.mxu0 %v3373
    %3409 = vmatprep.subr.mxu0 0.0
    %3410 = vmatpush1.msra.mxu0 %v3374
    %3411 = vmatprep.subr.mxu0 0.0
    %3412 = vmatpush1.msra.mxu0 %v3375
    %3413 = vmatprep.subr.mxu0 0.0
    %3414 = vmatpush1.msra.mxu0 %v3376
    %3415 = vmatprep.subr.mxu0 0.0
    %3416 = vmatpush1.msra.mxu0 %v3377
    %3417 = vmatprep.subr.mxu0 0.0
    %3418 = vmatpush1.msra.mxu0 0.0
    %3419 = vmatprep.subr.mxu0 0.0
    %3420 = vmatpush1.msra.mxu0 0.0
    %3421 = vmatprep.subr.mxu0 0.0
    %3422 = vmatpush1.msra.mxu0 0.0
    %3423 = vmatprep.subr.mxu0 0.0
    %3424 = vmatpush1.msra.mxu0 0.0
    %3425 = vmatprep.subr.mxu0 0.0
    %3426 = vmatpush1.msra.mxu0 0.0
    %3427 = vmatprep.subr.mxu0 0.0
    %3428 = vmatpush1.msra.mxu0 0.0
    %3429 = vmatprep.subr.mxu0 0.0
    %3430 = vmatpush1.msra.mxu0 0.0
    %3431 = vmatprep.subr.mxu0 0.0
    %3432 = vmatpush1.msra.mxu0 0.0
    %3433 = vmatprep.subr.mxu0 0.0
    %3434 = vmatpush1.msra.mxu0 0.0
    %3435 = vmatprep.subr.mxu0 0.0
    %3436 = vmatpush1.msra.mxu0 0.0
    %3437 = vmatprep.subr.mxu0 0.0
    %3438 = vmatpush1.msra.mxu0 0.0
    %3439 = vmatprep.subr.mxu0 0.0
    %3440 = vmatpush1.msra.mxu0 0.0
    %3441 = vmatprep.subr.mxu0 0.0
    %3442 = vmatpush1.msra.mxu0 0.0
    %3443 = vmatprep.subr.mxu0 0.0
    %3444 = vmatpush1.msra.mxu0 0.0
    %3445 = vmatprep.subr.mxu0 0.0
    %3446 = vmatpush1.msra.mxu0 0.0
    %3447 = vmatprep.subr.mxu0 0.0
    %3448 = vmatpush1.msra.mxu0 0.0
    %3449 = vmatprep.mubr.f32.mxu0 0.0
    %3450 = vmatmul.mubr.f32.gmra.mrb[0].mxu0 %v3330
    %v3451 = vpop.f32.mrb[0].mxu0
    %v3452 = vadd.f32 %v3383, %v3451
    %v3453 = vpop.f32.mrb[0].mxu0
    %3454 = vmatprep.mubr.f32.mxu0 0.0
    %3455 = vmatmul.mubr.f32.gmra.mrb[0].mxu0 %v3331
    %v3456 = vpop.f32.mrb[0].mxu0
    %v3457 = vadd.f32 %v3383, %v3456
    %v3458 = vpop.f32.mrb[0].mxu0
    %3459 = vmatprep.mubr.f32.mxu0 0.0
    %3460 = vmatmul.mubr.f32.gmra.mrb[0].mxu0 %v3332
    %v3461 = vpop.f32.mrb[0].mxu0
    %v3462 = vadd.f32 %v3383, %v3461
    %v3463 = vpop.f32.mrb[0].mxu0
    %3464 = vmatprep.mubr.f32.mxu0 0.0
    %3465 = vmatmul.mubr.f32.gmra.mrb[0].mxu0 %v3333
    %v3466 = vpop.f32.mrb[0].mxu0
    %v3467 = vadd.f32 %v3383, %v3466
    %v3468 = vpop.f32.mrb[0].mxu0
    %3469 = vmatprep.mubr.f32.mxu0 0.0
    %3470 = vmatmul.mubr.f32.gmra.mrb[0].mxu0 %v3334
    %v3471 = vpop.f32.mrb[0].mxu0
    %v3472 = vadd.f32 %v3383, %v3471
    %v3473 = vpop.f32.mrb[0].mxu0
    %3474 = vmatprep.mubr.f32.mxu0 0.0
    %3475 = vmatmul.mubr.f32.gmra.mrb[0].mxu0 %v3335
    %v3476 = vpop.f32.mrb[0].mxu0
    %v3477 = vadd.f32 %v3383, %v3476
    %v3478 = vpop.f32.mrb[0].mxu0
    %3479 = vmatprep.mubr.f32.mxu0 0.0
    %3480 = vmatmul.mubr.f32.gmra.mrb[0].mxu0 %v3336
    %v3481 = vpop.f32.mrb[0].mxu0
    %v3482 = vadd.f32 %v3383, %v3481
    %v3483 = vpop.f32.mrb[0].mxu0
    %3484 = vmatprep.mubr.f32.mxu0 0.0
    %3485 = vmatmul.mubr.f32.gmra.mrb[0].mxu0 %v3337
    %v3486 = vpop.f32.mrb[0].mxu0
    %v3487 = vadd.f32 %v3383, %v3486
    %v3488 = vpop.f32.mrb[0].mxu0
    %3489 = vmatprep.mubr.f32.mxu0 0.0
    %3490 = vmatmul.mubr.f32.gmra.mrb[0].mxu0 %v3338
    %v3491 = vpop.f32.mrb[0].mxu0
    %v3492 = vadd.f32 %v3383, %v3491
    %v3493 = vpop.f32.mrb[0].mxu0
    %3494 = vmatprep.mubr.f32.mxu0 0.0
    %3495 = vmatmul.mubr.f32.gmra.mrb[0].mxu0 %v3339
    %v3496 = vpop.f32.mrb[0].mxu0
    %v3497 = vadd.f32 %v3383, %v3496
    %v3498 = vpop.f32.mrb[0].mxu0
    %3499 = vmatprep.mubr.f32.mxu0 0.0
    %3500 = vmatmul.mubr.f32.gmra.mrb[0].mxu0 %v3340
    %v3501 = vpop.f32.mrb[0].mxu0
    %v3502 = vadd.f32 %v3383, %v3501
    %v3503 = vpop.f32.mrb[0].mxu0
    %3504 = vmatprep.mubr.f32.mxu0 0.0
    %3505 = vmatmul.mubr.f32.gmra.mrb[0].mxu0 %v3341
    %v3506 = vpop.f32.mrb[0].mxu0
    %v3507 = vadd.f32 %v3383, %v3506
    %v3508 = vpop.f32.mrb[0].mxu0
    %3509 = vmatprep.mubr.f32.mxu0 0.0
    %3510 = vmatmul.mubr.f32.gmra.mrb[0].mxu0 %v3342
    %v3511 = vpop.f32.mrb[0].mxu0
    %v3512 = vadd.f32 %v3383, %v3511
    %v3513 = vpop.f32.mrb[0].mxu0
    %3514 = vmatprep.mubr.f32.mxu0 0.0
    %3515 = vmatmul.mubr.f32.gmra.mrb[0].mxu0 %v3343
    %v3516 = vpop.f32.mrb[0].mxu0
    %v3517 = vadd.f32 %v3383, %v3516
    %v3518 = vpop.f32.mrb[0].mxu0
    %3519 = vmatprep.mubr.f32.mxu0 0.0
    %3520 = vmatmul.mubr.f32.gmra.mrb[0].mxu0 %v3344
    %v3521 = vpop.f32.mrb[0].mxu0
    %v3522 = vadd.f32 %v3383, %v3521
    %v3523 = vpop.f32.mrb[0].mxu0
    %3524 = vmatprep.mubr.f32.mxu0 0.0
    %3525 = vmatmul.mubr.f32.gmra.mrb[0].mxu0 %v3345
    %v3526 = vpop.f32.mrb[0].mxu0
    %v3527 = vadd.f32 %v3383, %v3526
    %v3528 = vpop.f32.mrb[0].mxu0
    %3529 = vmatprep.mubr.f32.mxu0 0.0
    %3530 = vmatmul.mubr.f32.gmra.mrb[0].mxu0 %v3346
    %v3531 = vpop.f32.mrb[0].mxu0
    %v3532 = vadd.f32 %v3383, %v3531
    %v3533 = vpop.f32.mrb[0].mxu0
    %3534 = vmatprep.mubr.f32.mxu0 0.0
    %3535 = vmatmul.mubr.f32.gmra.mrb[0].mxu0 %v3347
    %v3536 = vpop.f32.mrb[0].mxu0
    %v3537 = vadd.f32 %v3383, %v3536
    %v3538 = vpop.f32.mrb[0].mxu0
    %3539 = vmatprep.mubr.f32.mxu0 0.0
    %3540 = vmatmul.mubr.f32.gmra.mrb[0].mxu0 %v3348
    %v3541 = vpop.f32.mrb[0].mxu0
    %v3542 = vadd.f32 %v3383, %v3541
    %v3543 = vpop.f32.mrb[0].mxu0
    %3544 = vmatprep.mubr.f32.mxu0 0.0
    %3545 = vmatmul.mubr.f32.gmra.mrb[0].mxu0 %v3349
    %v3546 = vpop.f32.mrb[0].mxu0
    %v3547 = vadd.f32 %v3383, %v3546
    %v3548 = vpop.f32.mrb[0].mxu0
    %3549 = vmatprep.mubr.f32.mxu0 0.0
    %3550 = vmatmul.mubr.f32.gmra.mrb[0].mxu0 %v3350
    %v3551 = vpop.f32.mrb[0].mxu0
    %v3552 = vadd.f32 %v3383, %v3551
    %v3553 = vpop.f32.mrb[0].mxu0
    %3554 = vmatprep.mubr.f32.mxu0 0.0
    %3555 = vmatmul.mubr.f32.gmra.mrb[0].mxu0 %v3351
    %v3556 = vpop.f32.mrb[0].mxu0
    %v3557 = vadd.f32 %v3383, %v3556
    %v3558 = vpop.f32.mrb[0].mxu0
    %3559 = vmatprep.mubr.f32.mxu0 0.0
    %3560 = vmatmul.mubr.f32.gmra.mrb[0].mxu0 %v3352
    %v3561 = vpop.f32.mrb[0].mxu0
    %v3562 = vadd.f32 %v3383, %v3561
    %v3563 = vpop.f32.mrb[0].mxu0
    %3564 = vmatprep.mubr.f32.mxu0 0.0
    %3565 = vmatmul.mubr.f32.gmra.mrb[0].mxu0 %v3353
    %v3566 = vpop.f32.mrb[0].mxu0
    %v3567 = vadd.f32 %v3383, %v3566
    %v3568 = vpop.f32.mrb[0].mxu0
    %3569 = vmatprep.mubr.f32.mxu0 0.0
    %3570 = vmatmul.mubr.f32.gmra.mrb[0].mxu0 %v3354
    %v3571 = vpop.f32.mrb[0].mxu0
    %v3572 = vadd.f32 %v3383, %v3571
    %v3573 = vpop.f32.mrb[0].mxu0
    %3574 = vmatprep.mubr.f32.mxu0 0.0
    %3575 = vmatmul.mubr.f32.gmra.mrb[0].mxu0 %v3355
    %v3576 = vpop.f32.mrb[0].mxu0
    %v3577 = vadd.f32 %v3383, %v3576
    %v3578 = vpop.f32.mrb[0].mxu0
    %3579 = vmatprep.mubr.f32.mxu0 0.0
    %3580 = vmatmul.mubr.f32.gmra.mrb[0].mxu0 %v3356
    %v3581 = vpop.f32.mrb[0].mxu0
    %v3582 = vadd.f32 %v3383, %v3581
    %v3583 = vpop.f32.mrb[0].mxu0
    %3584 = vmatprep.mubr.f32.mxu0 0.0
    %3585 = vmatmul.mubr.f32.gmra.mrb[0].mxu0 %v3357
    %v3586 = vpop.f32.mrb[0].mxu0
    %v3587 = vadd.f32 %v3383, %v3586
    %v3588 = vpop.f32.mrb[0].mxu0
    %3589 = vmatprep.mubr.f32.mxu0 0.0
    %3590 = vmatmul.mubr.f32.gmra.mrb[0].mxu0 %v3358
    %v3591 = vpop.f32.mrb[0].mxu0
    %v3592 = vadd.f32 %v3383, %v3591
    %v3593 = vpop.f32.mrb[0].mxu0
    %3594 = vmatprep.mubr.f32.mxu0 0.0
    %3595 = vmatmul.mubr.f32.gmra.mrb[0].mxu0 %v3359
    %v3596 = vpop.f32.mrb[0].mxu0
    %v3597 = vadd.f32 %v3383, %v3596
    %v3598 = vpop.f32.mrb[0].mxu0
    %3599 = vmatprep.mubr.f32.mxu0 0.0
    %3600 = vmatmul.mubr.f32.gmra.mrb[0].mxu0 %v3360
    %v3601 = vpop.f32.mrb[0].mxu0
    %v3602 = vadd.f32 %v3383, %v3601
    %v3603 = vpop.f32.mrb[0].mxu0
    %3604 = vmatprep.mubr.f32.mxu0 0.0
    %3605 = vmatmul.mubr.f32.gmra.mrb[0].mxu0 %v3361
    %v3606 = vpop.f32.mrb[0].mxu0
    %v3607 = vadd.f32 %v3383, %v3606
    %v3608 = vpop.f32.mrb[0].mxu0
    %3609 = vdwg.mxu0
    %v3610 = vtanh.pop %v3452
    %v3611 = vtanh.pop %v3457
    %v3612 = vtanh.pop %v3462
    %v3613 = vtanh.pop %v3467
    %v3614 = vtanh.pop %v3472
    %v3615 = vtanh.pop %v3477
    %v3616 = vtanh.pop %v3482
    %v3617 = vtanh.pop %v3487
    %v3618 = vtanh.pop %v3492
    %v3619 = vtanh.pop %v3497
    %v3620 = vtanh.pop %v3502
    %v3621 = vtanh.pop %v3507
    %v3622 = vtanh.pop %v3512
    %v3623 = vtanh.pop %v3517
    %v3624 = vtanh.pop %v3522
    %v3625 = vtanh.pop %v3527
    %v3626 = vtanh.pop %v3532
    %v3627 = vtanh.pop %v3537
    %v3628 = vtanh.pop %v3542
    %v3629 = vtanh.pop %v3547
    %v3630 = vtanh.pop %v3552
    %v3631 = vtanh.pop %v3557
    %v3632 = vtanh.pop %v3562
    %v3633 = vtanh.pop %v3567
    %v3634 = vtanh.pop %v3572
    %v3635 = vtanh.pop %v3577
    %v3636 = vtanh.pop %v3582
    %v3637 = vtanh.pop %v3587
    %v3638 = vtanh.pop %v3592
    %v3639 = vtanh.pop %v3597
    %v3640 = vtanh.pop %v3602
    %v3641 = vtanh.pop %v3607
    %v3642 = vld [vmem:[%s5] sm:$0x3]
    %v3643 = vld [vmem:[%s6] sm:$0x3]
    %3645 = vset.pattern.permute.xlu0 0
    %3646 = vperm.xlu0 %3645, %v3643
    %v3647 = vpop.permute.xlu0 %3646
    %3649 = vmatprep.subr.mxu0 0.0
    %3650 = vmatpush1.xpose.msra.mxu0 %v3610
    %3651 = vmatprep.subr.mxu0 0.0
    %3652 = vmatpush1.xpose.msra.mxu0 %v3611
    %3653 = vmatprep.subr.mxu0 0.0
    %3654 = vmatpush1.xpose.msra.mxu0 %v3612
    %3655 = vmatprep.subr.mxu0 0.0
    %3656 = vmatpush1.xpose.msra.mxu0 %v3613
    %3657 = vmatprep.subr.mxu0 0.0
    %3658 = vmatpush1.xpose.msra.mxu0 %v3614
    %3659 = vmatprep.subr.mxu0 0.0
    %3660 = vmatpush1.xpose.msra.mxu0 %v3615
    %3661 = vmatprep.subr.mxu0 0.0
    %3662 = vmatpush1.xpose.msra.mxu0 %v3616
    %3663 = vmatprep.subr.mxu0 0.0
    %3664 = vmatpush1.xpose.msra.mxu0 %v3617
    %3665 = vmatprep.subr.mxu0 0.0
    %3666 = vmatpush1.xpose.msra.mxu0 %v3618
    %3667 = vmatprep.subr.mxu0 0.0
    %3668 = vmatpush1.xpose.msra.mxu0 %v3619
    %3669 = vmatprep.subr.mxu0 0.0
    %3670 = vmatpush1.xpose.msra.mxu0 %v3620
    %3671 = vmatprep.subr.mxu0 0.0
    %3672 = vmatpush1.xpose.msra.mxu0 %v3621
    %3673 = vmatprep.subr.mxu0 0.0
    %3674 = vmatpush1.xpose.msra.mxu0 %v3622
    %3675 = vmatprep.subr.mxu0 0.0
    %3676 = vmatpush1.xpose.msra.mxu0 %v3623
    %3677 = vmatprep.subr.mxu0 0.0
    %3678 = vmatpush1.xpose.msra.mxu0 %v3624
    %3679 = vmatprep.subr.mxu0 0.0
    %3680 = vmatpush1.xpose.msra.mxu0 %v3625
    %3681 = vmatprep.subr.mxu0 0.0
    %3682 = vmatpush1.xpose.msra.mxu0 %v3626
    %3683 = vmatprep.subr.mxu0 0.0
    %3684 = vmatpush1.xpose.msra.mxu0 %v3627
    %3685 = vmatprep.subr.mxu0 0.0
    %3686 = vmatpush1.xpose.msra.mxu0 %v3628
    %3687 = vmatprep.subr.mxu0 0.0
    %3688 = vmatpush1.xpose.msra.mxu0 %v3629
    %3689 = vmatprep.subr.mxu0 0.0
    %3690 = vmatpush1.xpose.msra.mxu0 %v3630
    %3691 = vmatprep.subr.mxu0 0.0
    %3692 = vmatpush1.xpose.msra.mxu0 %v3631
    %3693 = vmatprep.subr.mxu0 0.0
    %3694 = vmatpush1.xpose.msra.mxu0 %v3632
    %3695 = vmatprep.subr.mxu0 0.0
    %3696 = vmatpush1.xpose.msra.mxu0 %v3633
    %3697 = vmatprep.subr.mxu0 0.0
    %3698 = vmatpush1.xpose.msra.mxu0 %v3634
    %3699 = vmatprep.subr.mxu0 0.0
    %3700 = vmatpush1.xpose.msra.mxu0 %v3635
    %3701 = vmatprep.subr.mxu0 0.0
    %3702 = vmatpush1.xpose.msra.mxu0 %v3636
    %3703 = vmatprep.subr.mxu0 0.0
    %3704 = vmatpush1.xpose.msra.mxu0 %v3637
    %3705 = vmatprep.subr.mxu0 0.0
    %3706 = vmatpush1.xpose.msra.mxu0 %v3638
    %3707 = vmatprep.subr.mxu0 0.0
    %3708 = vmatpush1.xpose.msra.mxu0 %v3639
    %3709 = vmatprep.subr.mxu0 0.0
    %3710 = vmatpush1.xpose.msra.mxu0 %v3640
    %3711 = vmatprep.subr.mxu0 0.0
    %3712 = vmatpush1.xpose.msra.mxu0 %v3641
    %3713 = vmatprep.mubr.f32.mxu0 0.0
    %3714 = vmatmul.mubr.f32.gmra.mrb[0].mxu0 %v3642
    %v3715 = vpop.f32.mrb[0].mxu0
    %v3716 = vadd.f32 %v3647, %v3715
    %v3717 = vpop.f32.mrb[0].mxu0
    %v3718 = vadd.f32 %v3647, %v3717
    %3719 = vdwg.mxu0
    %vm3720 = vcmask 1041408
    %v3721 = vsel %vm3720, %v3716, -inf
    %v3722 = vsel %vm3720, %v3718, -inf
    %v3723 = vmax.f32 %v3721, %v3722
    %3724 = vmax.xlane.f32.xlu0 %v3723
    %v3725 = vpop.xlane.xlu0 %3724
    %v3726 = vsub.f32 %v3716, %v3725
    %v3727 = vsub.f32 %v3718, %v3725
    %v3728 = vmul.f32 %v3726, 1.442695
    %v3729 = vpow.pop %v3728
    %v3730 = vmul.f32 %v3727, 1.442695
    %v3731 = vpow.pop %v3730
    %v3732 = vsel %vm3720, %v3729, 0.0
    %v3733 = vsel %vm3720, %v3731, 0.0
    %v3734 = vadd.f32 %v3732, %v3733
    %3735 = vadd.xlane.f32.xlu0 %v3734
    %v3736 = vpop.xlane.xlu0 %3735
    %v3737 = vrcp.pop %v3736
    %v3738 = vmul.f32 %v3729, %v3737
    %v3739 = vmul.f32 %v3731, %v3737
    %3740 = vmatprep.subr.mxu0 0.0
    %3741 = vmatpush1.msra.mxu0 %v3330
    %3742 = vmatprep.subr.mxu0 0.0
    %3743 = vmatpush1.msra.mxu0 %v3331
    %3744 = vmatprep.subr.mxu0 0.0
    %3745 = vmatpush1.msra.mxu0 %v3332
    %3746 = vmatprep.subr.mxu0 0.0
    %3747 = vmatpush1.msra.mxu0 %v3333
    %3748 = vmatprep.subr.mxu0 0.0
    %3749 = vmatpush1.msra.mxu0 %v3334
    %3750 = vmatprep.subr.mxu0 0.0
    %3751 = vmatpush1.msra.mxu0 %v3335
    %3752 = vmatprep.subr.mxu0 0.0
    %3753 = vmatpush1.msra.mxu0 %v3336
    %3754 = vmatprep.subr.mxu0 0.0
    %3755 = vmatpush1.msra.mxu0 %v3337
    %3756 = vmatprep.subr.mxu0 0.0
    %3757 = vmatpush1.msra.mxu0 %v3338
    %3758 = vmatprep.subr.mxu0 0.0
    %3759 = vmatpush1.msra.mxu0 %v3339
    %3760 = vmatprep.subr.mxu0 0.0
    %3761 = vmatpush1.msra.mxu0 %v3340
    %3762 = vmatprep.subr.mxu0 0.0
    %3763 = vmatpush1.msra.mxu0 %v3341
    %3764 = vmatprep.subr.mxu0 0.0
    %3765 = vmatpush1.msra.mxu0 %v3342
    %3766 = vmatprep.subr.mxu0 0.0
    %3767 = vmatpush1.msra.mxu0 %v3343
    %3768 = vmatprep.subr.mxu0 0.0
    %3769 = vmatpush1.msra.mxu0 %v3344
    %3770 = vmatprep.subr.mxu0 0.0
    %3771 = vmatpush1.msra.mxu0 %v3345
    %3772 = vmatprep.subr.mxu0 0.0
    %3773 = vmatpush1.msra.mxu0 %v3346
    %3774 = vmatprep.subr.mxu0 0.0
    %3775 = vmatpush1.msra.mxu0 %v3347
    %3776 = vmatprep.subr.mxu0 0.0
    %3777 = vmatpush1.msra.mxu0 %v3348
    %3778 = vmatprep.subr.mxu0 0.0
    %3779 = vmatpush1.msra.mxu0 %v3349
    %3780 = vmatprep.subr.mxu0 0.0
    %3781 = vmatpush1.msra.mxu0 %v3350
    %3782 = vmatprep.subr.mxu0 0.0
    %3783 = vmatpush1.msra.mxu0 %v3351
    %3784 = vmatprep.subr.mxu0 0.0
    %3785 = vmatpush1.msra.mxu0 %v3352
    %3786 = vmatprep.subr.mxu0 0.0
    %3787 = vmatpush1.msra.mxu0 %v3353
    %3788 = vmatprep.subr.mxu0 0.0
    %3789 = vmatpush1.msra.mxu0 %v3354
    %3790 = vmatprep.subr.mxu0 0.0
    %3791 = vmatpush1.msra.mxu0 %v3355
    %3792 = vmatprep.subr.mxu0 0.0
    %3793 = vmatpush1.msra.mxu0 %v3356
    %3794 = vmatprep.subr.mxu0 0.0
    %3795 = vmatpush1.msra.mxu0 %v3357
    %3796 = vmatprep.subr.mxu0 0.0
    %3797 = vmatpush1.msra.mxu0 %v3358
    %3798 = vmatprep.subr.mxu0 0.0
    %3799 = vmatpush1.msra.mxu0 %v3359
    %3800 = vmatprep.subr.mxu0 0.0
    %3801 = vmatpush1.msra.mxu0 %v3360
    %3802 = vmatprep.subr.mxu0 0.0
    %3803 = vmatpush1.msra.mxu0 %v3361
    %3804 = vmatprep.mubr.f32.mxu0 %v3739
    %3805 = vmatmul.mubr.f32.gmra.mrb[0].mxu0 %v3738
    %v3806 = vpop.f32.mrb[0].mxu0
    %v3807 = vadd.f32 0.0, %v3806
    %v3808 = vpop.f32.mrb[0].mxu0
    %3809 = vdwg.mxu0
    %v3810 = vsel %vm3720, %v3807, 0.0
    %3811 = vadd.xlane.f32.xlu0 %v3810
    %v3812 = vpop.xlane.xlu0 %3811
    %v3813 = vrcp.pop 128.0
    %v3814 = vmul.f32 %v3812, %v3813
    %v3815 = vmul.f32 %v3807, %v3807
    %v3816 = vsel %vm3720, %v3815, 0.0
    %3817 = vadd.xlane.f32.xlu0 %v3816
    %v3818 = vpop.xlane.xlu0 %3817
    %v3819 = vmul.f32 %v3818, %v3813
    %v3820 = vmul.f32 %v3814, %v3814
    %v3821 = vsub.f32 %v3819, %v3820
    %v3822 = vmax.f32 %v3821, 0.0
    %v3823 = vsub.f32 %v3807, %v3814
    %v3824 = vadd.f32 %v3822, 1e-05
    %v3825 = vrsqrt.pop %v3824
    %v3826 = vmul.f32 %v3823, %v3825
    %v3827 = vsel %vm3720, %v3826, 0.0
    %3828 = vadd.xlane.f32.xlu0 %v3827
    %v3829 = vpop.xlane.xlu0 %3828
    %v3830 = vrot.slane %v3829, 4
    %v3831 = vadd.f32 %v3829, %v3830
    %v3832 = vrot.slane %v3831, 2
    %v3833 = vadd.f32 %v3831, %v3832
    %v3834 = vrot.slane %v3833, 1
    %v3835 = vadd.f32 %v3833, %v3834
    %s3836 = vtos %v3835
    %s3837 = smul.f32 %s3836, 0.00390625
    %v3838 = vmul.f32 %v3826, %v3826
    %v3839 = vsel %vm3720, %v3838, 0.0
    %3840 = vadd.xlane.f32.xlu0 %v3839
    %v3841 = vpop.xlane.xlu0 %3840
    %v3842 = vrot.slane %v3841, 4
    %v3843 = vadd.f32 %v3841, %v3842
    %v3844 = vrot.slane %v3843, 2
    %v3845 = vadd.f32 %v3843, %v3844
    %v3846 = vrot.slane %v3845, 1
    %v3847 = vadd.f32 %v3845, %v3846
    %s3848 = vtos %v3847
    %s3849 = smul.f32 %s3848, 0.00390625
    %s3850 = smul.f32 %s3837, %s3837
    %s3851 = ssub.f32 %s3849, %s3850
    %s3852 = smax.f32 %s3851, 0.0
    %s3853 = sadd.f32 %s3852, 1e-05
    %v3854 = vstv %s3853
    %v3855 = vrsqrt.pop %v3854
    %s3856 = vtos %v3855
    %v3857 = vstv %s3837
    %v3858 = vsub.f32 %v3826, %v3857
    %v3859 = vstv %s3856
    %v3860 = vmul.f32 %v3858, %v3859
    %v3861 = vld [vmem:[%s8] sm:$0x1]
    %v3862 = vld [vmem:[%s7] sm:$0xff]
    %v3863 = vld [vmem:[%s7 + $0x8] sm:$0xff]
    %v3864 = vld [vmem:[%s7 + $0x10] sm:$0xff]
    %v3865 = vld [vmem:[%s7 + $0x18] sm:$0xff]
    %v3866 = vld [vmem:[%s7 + $0x20] sm:$0xff]
    %v3867 = vld [vmem:[%s7 + $0x28] sm:$0xff]
    %v3868 = vld [vmem:[%s7 + $0x30] sm:$0xff]
    %v3869 = vld [vmem:[%s7 + $0x38] sm:$0xff]
    %v3870 = vld [vmem:[%s7 + $0x40] sm:$0xff]
    %v3871 = vld [vmem:[%s7 + $0x48] sm:$0xff]
    %v3872 = vld [vmem:[%s7 + $0x50] sm:$0xff]
    %v3873 = vld [vmem:[%s7 + $0x58] sm:$0xff]
    %v3874 = vld [vmem:[%s7 + $0x60] sm:$0xff]
    %v3875 = vld [vmem:[%s7 + $0x68] sm:$0xff]
    %v3876 = vld [vmem:[%s7 + $0x70] sm:$0xff]
    %v3877 = vld [vmem:[%s7 + $0x78] sm:$0xff]
    %3878 = vmatprep.subr.mxu0 0.0
    %3879 = vmatpush1.msra.mxu0 %v3862
    %3880 = vmatprep.subr.mxu0 0.0
    %3881 = vmatpush1.msra.mxu0 %v3863
    %3882 = vmatprep.subr.mxu0 0.0
    %3883 = vmatpush1.msra.mxu0 %v3864
    %3884 = vmatprep.subr.mxu0 0.0
    %3885 = vmatpush1.msra.mxu0 %v3865
    %3886 = vmatprep.subr.mxu0 0.0
    %3887 = vmatpush1.msra.mxu0 %v3866
    %3888 = vmatprep.subr.mxu0 0.0
    %3889 = vmatpush1.msra.mxu0 %v3867
    %3890 = vmatprep.subr.mxu0 0.0
    %3891 = vmatpush1.msra.mxu0 %v3868
    %3892 = vmatprep.subr.mxu0 0.0
    %3893 = vmatpush1.msra.mxu0 %v3869
    %3894 = vmatprep.subr.mxu0 0.0
    %3895 = vmatpush1.msra.mxu0 %v3870
    %3896 = vmatprep.subr.mxu0 0.0
    %3897 = vmatpush1.msra.mxu0 %v3871
    %3898 = vmatprep.subr.mxu0 0.0
    %3899 = vmatpush1.msra.mxu0 %v3872
    %3900 = vmatprep.subr.mxu0 0.0
    %3901 = vmatpush1.msra.mxu0 %v3873
    %3902 = vmatprep.subr.mxu0 0.0
    %3903 = vmatpush1.msra.mxu0 %v3874
    %3904 = vmatprep.subr.mxu0 0.0
    %3905 = vmatpush1.msra.mxu0 %v3875
    %3906 = vmatprep.subr.mxu0 0.0
    %3907 = vmatpush1.msra.mxu0 %v3876
    %3908 = vmatprep.subr.mxu0 0.0
    %3909 = vmatpush1.msra.mxu0 %v3877
    %3910 = vmatprep.subr.mxu0 0.0
    %3911 = vmatpush1.msra.mxu0 0.0
    %3912 = vmatprep.subr.mxu0 0.0
    %3913 = vmatpush1.msra.mxu0 0.0
    %3914 = vmatprep.subr.mxu0 0.0
    %3915 = vmatpush1.msra.mxu0 0.0
    %3916 = vmatprep.subr.mxu0 0.0
    %3917 = vmatpush1.msra.mxu0 0.0
    %3918 = vmatprep.subr.mxu0 0.0
    %3919 = vmatpush1.msra.mxu0 0.0
    %3920 = vmatprep.subr.mxu0 0.0
    %3921 = vmatpush1.msra.mxu0 0.0
    %3922 = vmatprep.subr.mxu0 0.0
    %3923 = vmatpush1.msra.mxu0 0.0
    %3924 = vmatprep.subr.mxu0 0.0
    %3925 = vmatpush1.msra.mxu0 0.0
    %3926 = vmatprep.subr.mxu0 0.0
    %3927 = vmatpush1.msra.mxu0 0.0
    %3928 = vmatprep.subr.mxu0 0.0
    %3929 = vmatpush1.msra.mxu0 0.0
    %3930 = vmatprep.subr.mxu0 0.0
    %3931 = vmatpush1.msra.mxu0 0.0
    %3932 = vmatprep.subr.mxu0 0.0
    %3933 = vmatpush1.msra.mxu0 0.0
    %3934 = vmatprep.subr.mxu0 0.0
    %3935 = vmatpush1.msra.mxu0 0.0
    %3936 = vmatprep.subr.mxu0 0.0
    %3937 = vmatpush1.msra.mxu0 0.0
    %3938 = vmatprep.subr.mxu0 0.0
    %3939 = vmatpush1.msra.mxu0 0.0
    %3940 = vmatprep.subr.mxu0 0.0
    %3941 = vmatpush1.msra.mxu0 0.0
    %3942 = vmatprep.mubr.f32.mxu0 0.0
    %3943 = vmatmul.mubr.f32.gmra.mrb[0].mxu0 %v3860
    %v3944 = vpop.f32.mrb[0].mxu0
    %v3945 = vadd.f32 0.0, %v3944
    %v3946 = vpop.f32.mrb[0].mxu0
    %3947 = vdwg.mxu0
    %v3948 = vadd.f32 %v3861, %v3945
    %s3949 = scalar_lea.vmem %s7, 128
    %v3950 = vld [vmem:[%s3949] sm:$0xff]
    %v3951 = vld [vmem:[%s3949 + $0x8] sm:$0xff]
    %v3952 = vld [vmem:[%s3949 + $0x10] sm:$0xff]
    %v3953 = vld [vmem:[%s3949 + $0x18] sm:$0xff]
    %v3954 = vld [vmem:[%s3949 + $0x20] sm:$0xff]
    %v3955 = vld [vmem:[%s3949 + $0x28] sm:$0xff]
    %v3956 = vld [vmem:[%s3949 + $0x30] sm:$0xff]
    %v3957 = vld [vmem:[%s3949 + $0x38] sm:$0xff]
    %v3958 = vld [vmem:[%s3949 + $0x40] sm:$0xff]
    %v3959 = vld [vmem:[%s3949 + $0x48] sm:$0xff]
    %v3960 = vld [vmem:[%s3949 + $0x50] sm:$0xff]
    %v3961 = vld [vmem:[%s3949 + $0x58] sm:$0xff]
    %v3962 = vld [vmem:[%s3949 + $0x60] sm:$0xff]
    %v3963 = vld [vmem:[%s3949 + $0x68] sm:$0xff]
    %v3964 = vld [vmem:[%s3949 + $0x70] sm:$0xff]
    %v3965 = vld [vmem:[%s3949 + $0x78] sm:$0xff]
    %v3967 = vrot.slane %v3860, 1
    %3969 = vmatprep.subr.mxu0 0.0
    %3970 = vmatpush1.msra.mxu0 %v3950
    %3971 = vmatprep.subr.mxu0 0.0
    %3972 = vmatpush1.msra.mxu0 %v3951
    %3973 = vmatprep.subr.mxu0 0.0
    %3974 = vmatpush1.msra.mxu0 %v3952
    %3975 = vmatprep.subr.mxu0 0.0
    %3976 = vmatpush1.msra.mxu0 %v3953
    %3977 = vmatprep.subr.mxu0 0.0
    %3978 = vmatpush1.msra.mxu0 %v3954
    %3979 = vmatprep.subr.mxu0 0.0
    %3980 = vmatpush1.msra.mxu0 %v3955
    %3981 = vmatprep.subr.mxu0 0.0
    %3982 = vmatpush1.msra.mxu0 %v3956
    %3983 = vmatprep.subr.mxu0 0.0
    %3984 = vmatpush1.msra.mxu0 %v3957
    %3985 = vmatprep.subr.mxu0 0.0
    %3986 = vmatpush1.msra.mxu0 %v3958
    %3987 = vmatprep.subr.mxu0 0.0
    %3988 = vmatpush1.msra.mxu0 %v3959
    %3989 = vmatprep.subr.mxu0 0.0
    %3990 = vmatpush1.msra.mxu0 %v3960
    %3991 = vmatprep.subr.mxu0 0.0
    %3992 = vmatpush1.msra.mxu0 %v3961
    %3993 = vmatprep.subr.mxu0 0.0
    %3994 = vmatpush1.msra.mxu0 %v3962
    %3995 = vmatprep.subr.mxu0 0.0
    %3996 = vmatpush1.msra.mxu0 %v3963
    %3997 = vmatprep.subr.mxu0 0.0
    %3998 = vmatpush1.msra.mxu0 %v3964
    %3999 = vmatprep.subr.mxu0 0.0
    %4000 = vmatpush1.msra.mxu0 %v3965
    %4001 = vmatprep.subr.mxu0 0.0
    %4002 = vmatpush1.msra.mxu0 0.0
    %4003 = vmatprep.subr.mxu0 0.0
    %4004 = vmatpush1.msra.mxu0 0.0
    %4005 = vmatprep.subr.mxu0 0.0
    %4006 = vmatpush1.msra.mxu0 0.0
    %4007 = vmatprep.subr.mxu0 0.0
    %4008 = vmatpush1.msra.mxu0 0.0
    %4009 = vmatprep.subr.mxu0 0.0
    %4010 = vmatpush1.msra.mxu0 0.0
    %4011 = vmatprep.subr.mxu0 0.0
    %4012 = vmatpush1.msra.mxu0 0.0
    %4013 = vmatprep.subr.mxu0 0.0
    %4014 = vmatpush1.msra.mxu0 0.0
    %4015 = vmatprep.subr.mxu0 0.0
    %4016 = vmatpush1.msra.mxu0 0.0
    %4017 = vmatprep.subr.mxu0 0.0
    %4018 = vmatpush1.msra.mxu0 0.0
    %4019 = vmatprep.subr.mxu0 0.0
    %4020 = vmatpush1.msra.mxu0 0.0
    %4021 = vmatprep.subr.mxu0 0.0
    %4022 = vmatpush1.msra.mxu0 0.0
    %4023 = vmatprep.subr.mxu0 0.0
    %4024 = vmatpush1.msra.mxu0 0.0
    %4025 = vmatprep.subr.mxu0 0.0
    %4026 = vmatpush1.msra.mxu0 0.0
    %4027 = vmatprep.subr.mxu0 0.0
    %4028 = vmatpush1.msra.mxu0 0.0
    %4029 = vmatprep.subr.mxu0 0.0
    %4030 = vmatpush1.msra.mxu0 0.0
    %4031 = vmatprep.subr.mxu0 0.0
    %4032 = vmatpush1.msra.mxu0 0.0
    %4033 = vmatprep.mubr.f32.mxu0 0.0
    %4034 = vmatmul.mubr.f32.gmra.mrb[0].mxu0 %v3967
    %v4035 = vpop.f32.mrb[0].mxu0
    %v4036 = vadd.f32 0.0, %v4035
    %v4037 = vpop.f32.mrb[0].mxu0
    %4038 = vdwg.mxu0
    %v4039 = vadd.f32 %v3948, %v4036
    %vm4040 = vcmask 24576
    %4041 = vst.msk [vmem:[#allocation7] sm:$0x1] %vm4040, %v4039
    %v4044 = vcombine.low %v3738, %v3739
    %v4046 = vunpack.c.l.s4 1966171168
    %v4047 = vunpack.c.0.s8 %v4046
    %v4048 = vlaneseq
    %v4049 = vshrl.u32 %v4048, 7
    %v4050 = vsub.s32 %v4047, %v4049
    %v4051 = vrot.slane %v4044, %v4050
    %v4052 = vcombine.high %v4051, %v4051
    %v4054 = vunpack.c.l.s4 1966171168
    %v4055 = vunpack.c.0.s8 %v4054
    %v4056 = vlaneseq
    %v4057 = vshrl.u32 %v4056, 7
    %v4058 = vsub.s32 %v4055, %v4057
    %v4059 = vrot.slane %v4052, %v4058
    %v4061 = vlaneseq
    %vm4062 = vcmp.ge.s32.totalorder %v4061, 0
    %vm4063 = vcmp.lt.s32.totalorder %v4061, 256
    %vm4064 = vmand %vm4062, %vm4063
    %4065 = vst.msk [vmem:[#allocation8] sm:$0x3] %vm4064, %v4059
    // Predicated region
    $region46: #{tpu_custom_call.1} parent=1 // pred_check
      _
    $region47: #{tpu_custom_call.1} parent=1 // pred_check_branch
      %4067 = sbr.rel (0) target = $region49
    $region48: #{tpu_custom_call.1} parent=1 // pred_region
      %s4069 = ssub.s32 16, 16
      %4070 = vsyncadd [#allocation4], %s4069
      %s4072 = sshll.u32 [#allocation7], 4
      %s4073 = int_to_ptr.vmem [resolvable:$true] %s4072
      %4075 = dma.vmem_to_hbm [thread:$0]  %s4073, 16, %s9, [#allocation4]
    $region49: #{tpu_custom_call.1} parent=1 // pred_fallthru
      _
    // Predicated region
    $region50: #{tpu_custom_call.1} parent=1 // pred_check
      _
    $region51: #{tpu_custom_call.1} parent=1 // pred_check_branch
      %4077 = sbr.rel (0) target = $region53
    $region52: #{tpu_custom_call.1} parent=1 // pred_region
      %s4079 = ssub.s32 32, 32
      %4080 = vsyncadd [#allocation9], %s4079
      %s4082 = sshll.u32 [#allocation8], 4
      %s4083 = int_to_ptr.vmem [resolvable:$true] %s4082
      %4085 = dma.vmem_to_hbm [thread:$0]  %s4083, 32, %s10, [#allocation9]
    $region53: #{tpu_custom_call.1} parent=1 // pred_fallthru
      _
    // Predicated region
    $region54: #{tpu_custom_call.1} parent=1 // pred_check
      _
    $region55: #{tpu_custom_call.1} parent=1 // pred_check_branch
      %4087 = sbr.rel (0) target = $region57
    $region56: #{tpu_custom_call.1} parent=1 // pred_region
      %4088 = dma.done [#allocation4], 16
    $region57: #{tpu_custom_call.1} parent=1 // pred_fallthru
      _
    // Predicated region
    $region58: #{tpu_custom_call.1} parent=1 // pred_check
      _
    $region59: #{tpu_custom_call.1} parent=1 // pred_check_branch
      %4090 = sbr.rel (0) target = $region61
    $region60: #{tpu_custom_call.1} parent=1 // pred_region
      %4091 = dma.done [#allocation9], 32
    $region61: #{tpu_custom_call.1} parent=1 // pred_fallthru
      _
    %4092 = vsyncpa [#allocation3], 1
    %4093 = vsyncpa [#allocation6], 1
    %4094 = vsyncpa [#allocation4], 1
    %4095 = vsyncpa [#allocation9], 1

</llo_original>
